<compile_context>
chip_gen: v5e
topology: v5e:2x2
jax: 0.10.0
libtpu: 0.0.40
codegen_flags: <defaults>
</compile_context>

<pallas_src>
import functools

import jax
import jax.numpy as jnp
from jax import lax
from jax.experimental import pallas as pl
from jax.experimental.pallas import tpu as pltpu

NUM_CLASSES = 4
NUM_FEATURES = 1280      # efficientnet_b0 classifier[1].in_features
STEM_CH = 64             # channels of the backbone stand-in stem
CLS_HID = 128            # classifier hidden width
UNC_HID = 64             # uncertainty-head hidden width
CU_HID = 256             # fused (classifier + uncertainty) hidden, lane-padded
OUT_LANES = 128          # lane-dense logits/uncertainty output slab width
BN_EPS = 1e-5


# ----------------------------------------------------------------------------
# Fused kernel: backbone stand-in + all heads
# ----------------------------------------------------------------------------
def epoc_kernel(x_ref, w1_ref, b1_ref, w2_ref, b2_ref,
                fp1_w_ref, fp1_b_ref, fp2_w_ref, fp2_b_ref,
                a1_w_ref, a1_b_ref, a2_w_ref, a2_b_ref,
                cu1_w_ref, cu1_b_ref, cu2_w_ref, cu2_b_ref,
                feat_out_ref, extra_out_ref,
                pool_acc_ref, feats_ref, *, inv_hw):
    b = pl.program_id(0)          # image index
    t = pl.program_id(1)          # pixel-tile index (reduction axis)
    nb = pl.num_programs(0)
    nt = pl.num_programs(1)

    @pl.when(jnp.logical_and(b == 0, t == 0))
    def _zero_feature_scratch():
        feats_ref[...] = jnp.zeros_like(feats_ref)      # padded rows stay 0

    @pl.when(t == 0)
    def _zero_pool_acc():
        pool_acc_ref[...] = jnp.zeros_like(pool_acc_ref)

    # ---- backbone stand-in stem on this pixel tile -------------------------
    # x tile: (C, TILE_HW) with pixels on the lane axis.  Contract C:
    #   (C, T)^T @ (C, STEM) -> (T, STEM)  (lane-dense activations).
    x_t = x_ref[0]
    h = lax.dot_general(x_t, w1_ref[...],
                        dimension_numbers=(((0,), (0,)), ((), ())),
                        preferred_element_type=jnp.float32)     # (TILE_HW, STEM)
    h = h + b1_ref[...]
    h = h * jax.nn.sigmoid(h)                                   # SiLU / swish
    # Partial global-average-pool: sublane reduction (XLU), accumulate per image.
    pool_acc_ref[...] += jnp.sum(h, axis=0, keepdims=True)      # (1, STEM)

    # ---- finalize this image: GAP -> 1280-d backbone feature row -----------
    @pl.when(t == nt - 1)
    def _finalize_image():
        pooled = pool_acc_ref[...] * inv_hw                     # (1, STEM)
        feats_ref[pl.ds(b, 1), :] = (
            jnp.dot(pooled, w2_ref[...], preferred_element_type=jnp.float32)
            + b2_ref[...])

    # ---- heads, once, after the last image's last tile ----------------------
    @pl.when(jnp.logical_and(b == nb - 1, t == nt - 1))
    def _heads():
        f = feats_ref[...]                                      # (B_pad, 1280)

        # feature_processor (BatchNorm folded into the Linear weights).
        h1 = jnp.dot(f, fp1_w_ref[...],
                     preferred_element_type=jnp.float32) + fp1_b_ref[...]
        h1 = jnp.maximum(h1, 0.0)                               # (B_pad, 512)
        h2 = jnp.dot(h1, fp2_w_ref[...],
                     preferred_element_type=jnp.float32) + fp2_b_ref[...]
        h2 = jnp.maximum(h2, 0.0)                               # (B_pad, 256)

        # attention gate.
        a = jnp.tanh(jnp.dot(h2, a1_w_ref[...],
                             preferred_element_type=jnp.float32) + a1_b_ref[...])
        a = jax.nn.sigmoid(jnp.dot(a, a2_w_ref[...],
                                   preferred_element_type=jnp.float32) + a2_b_ref[...])
        hg = h2 * a                                             # (B_pad, 256)
        feat_out_ref[...] = hg

        # fused classifier + uncertainty heads (two wide matmuls).
        cu = jnp.dot(hg, cu1_w_ref[...],
                     preferred_element_type=jnp.float32) + cu1_b_ref[...]
        cu = jnp.maximum(cu, 0.0)                               # (B_pad, CU_HID)
        o = jnp.dot(cu, cu2_w_ref[...],
                    preferred_element_type=jnp.float32) + cu2_b_ref[...]  # (B_pad, 128)
        # lanes 0..3 = logits, lane 4 = uncertainty (sigmoid), rest = 0.
        lane = lax.broadcasted_iota(jnp.int32, o.shape, 1)
        extra_out_ref[...] = jnp.where(lane == NUM_CLASSES, jax.nn.sigmoid(o), o)


# ----------------------------------------------------------------------------
# Wrapper
# ----------------------------------------------------------------------------
def _pick_tile(hw):
    # >=512-wide pixel tiles at real resolutions (mem-bound backbone); the toy
    # 16x16 input uses 128 so the pipelined reduction axis is still exercised.
    if hw % 512 == 0:
        return 512
    if hw % 128 == 0:
        return 128
    return hw


def epoc_forward(x, params):
    """x: (B, 3, H, W) float32 NCHW (PyTorch convention)."""
    B, C, H, W = x.shape
    hw = H * W
    x3 = x.reshape(B, C, hw)                 # NCHW -> (B, C, H*W); H*W on lanes
    tile = _pick_tile(hw)
    n_tiles = hw // tile
    b_pad = max(8, -(-B // 8) * 8)           # pad heads' M dim to sublane tile

    weights = (
        params["bb_w1"], params["bb_b1"], params["bb_w2"], params["bb_b2"],
        params["fp1_w"], params["fp1_b"], params["fp2_w"], params["fp2_b"],
        params["att1_w"], params["att1_b"], params["att2_w"], params["att2_b"],
        params["cu1_w"], params["cu1_b"], params["cu2_w"], params["cu2_b"],
    )

    in_specs = [pl.BlockSpec((1, C, tile), lambda b, t: (b, 0, t))]
    # All weights: full-array blocks, constant index -> DMA'd once, stay in VMEM.
    in_specs += [pl.BlockSpec(w.shape, lambda b, t: (0, 0)) for w in weights]

    out_shape = (
        jax.ShapeDtypeStruct((b_pad, 256), jnp.float32),        # gated features
        jax.ShapeDtypeStruct((b_pad, OUT_LANES), jnp.float32),  # logits + unc slab
    )
    out_specs = (
        pl.BlockSpec((b_pad, 256), lambda b, t: (0, 0)),
        pl.BlockSpec((b_pad, OUT_LANES), lambda b, t: (0, 0)),
    )

    feat_out, extra_out = pl.pallas_call(
        functools.partial(epoc_kernel, inv_hw=1.0 / hw),
        out_shape=out_shape,
        grid_spec=pltpu.PrefetchScalarGridSpec(
            num_scalar_prefetch=0,
            grid=(B, n_tiles),
            in_specs=in_specs,
            out_specs=out_specs,
            scratch_shapes=[
                pltpu.VMEM((1, STEM_CH), jnp.float32),          # per-image GAP acc
                pltpu.VMEM((b_pad, NUM_FEATURES), jnp.float32),  # 1280-d features
            ],
        ),
        compiler_params=pltpu.CompilerParams(
            # Both axes "arbitrary": the pooled accumulator and the cross-image
            # feature scratch carry state across grid iterations (heads run
            # once at the final step), so the image axis cannot be split
            # across TensorCores.
            dimension_semantics=("arbitrary", "arbitrary"),
            vmem_limit_bytes=32 * 1024 * 1024,
        ),
    )(x3, *weights)

    features = feat_out[:B]
    logits = extra_out[:B, :NUM_CLASSES]
    uncertainty = extra_out[:B, NUM_CLASSES:NUM_CLASSES + 1]
    return logits, uncertainty, features


# ----------------------------------------------------------------------------
# Parameters (shapes per EPOCModel.__init__) + eval-time constant folding
# ----------------------------------------------------------------------------
def _linear(key, fan_in, fan_out):
    kw, kb = jax.random.split(key)
    bound = 1.0 / (fan_in ** 0.5)
    w = jax.random.uniform(kw, (fan_in, fan_out), jnp.float32, -bound, bound)
    b = jax.random.uniform(kb, (1, fan_out), jnp.float32, -bound, bound)
    return w, b


def _bn_params(n):
    # PyTorch BatchNorm1d defaults: gamma=1, beta=0, running_mean=0, running_var=1.
    return dict(gamma=jnp.ones((1, n), jnp.float32),
                beta=jnp.zeros((1, n), jnp.float32),
                mean=jnp.zeros((1, n), jnp.float32),
                var=jnp.ones((1, n), jnp.float32))


def _fold_bn(w, b, bn):
    scale = bn["gamma"] / jnp.sqrt(bn["var"] + BN_EPS)          # (1, n)
    shift = bn["beta"] - bn["mean"] * scale
    return w * scale, b * scale + shift


def init_params(key):
    """Raw parameters, weights stored as (in_features, out_features)."""
    ks = jax.random.split(key, 10)
    p = {}
    p["bb_w1"], p["bb_b1"] = _linear(ks[0], 3, STEM_CH)
    p["bb_w2"], p["bb_b2"] = _linear(ks[1], STEM_CH, NUM_FEATURES)
    p["fp1_w"], p["fp1_b"] = _linear(ks[2], NUM_FEATURES, 512)
    p["bn1"] = _bn_params(512)
    p["fp2_w"], p["fp2_b"] = _linear(ks[3], 512, 256)
    p["bn2"] = _bn_params(256)
    p["att1_w"], p["att1_b"] = _linear(ks[4], 256, 128)
    p["att2_w"], p["att2_b"] = _linear(ks[5], 128, 256)
    p["cls1_w"], p["cls1_b"] = _linear(ks[6], 256, CLS_HID)
    p["cls2_w"], p["cls2_b"] = _linear(ks[7], CLS_HID, NUM_CLASSES)
    p["unc1_w"], p["unc1_b"] = _linear(ks[8], 256, UNC_HID)
    p["unc2_w"], p["unc2_b"] = _linear(ks[9], UNC_HID, 1)
    return p


def prepare_params(p):
    """Eval-time folding: BN -> Linear; fuse classifier/uncertainty branches."""
    q = {}
    q["bb_w1"], q["bb_b1"] = p["bb_w1"], p["bb_b1"]
    q["bb_w2"], q["bb_b2"] = p["bb_w2"], p["bb_b2"]
    q["fp1_w"], q["fp1_b"] = _fold_bn(p["fp1_w"], p["fp1_b"], p["bn1"])
    q["fp2_w"], q["fp2_b"] = _fold_bn(p["fp2_w"], p["fp2_b"], p["bn2"])
    q["att1_w"], q["att1_b"] = p["att1_w"], p["att1_b"]
    q["att2_w"], q["att2_b"] = p["att2_w"], p["att2_b"]

    # Stage 1: classifier(256->128) and uncertainty(256->64) concatenated and
    # lane-padded to one (256, 256) weight.
    w_cu1 = jnp.zeros((256, CU_HID), jnp.float32)
    w_cu1 = w_cu1.at[:, :CLS_HID].set(p["cls1_w"])
    w_cu1 = w_cu1.at[:, CLS_HID:CLS_HID + UNC_HID].set(p["unc1_w"])
    b_cu1 = jnp.zeros((1, CU_HID), jnp.float32)
    b_cu1 = b_cu1.at[:, :CLS_HID].set(p["cls1_b"])
    b_cu1 = b_cu1.at[:, CLS_HID:CLS_HID + UNC_HID].set(p["unc1_b"])

    # Stage 2: block-diagonal (256, 128): logits in lanes 0..3, uncertainty
    # (pre-sigmoid) in lane 4, remaining lanes zero.
    w_cu2 = jnp.zeros((CU_HID, OUT_LANES), jnp.float32)
    w_cu2 = w_cu2.at[:CLS_HID, :NUM_CLASSES].set(p["cls2_w"])
    w_cu2 = w_cu2.at[CLS_HID:CLS_HID + UNC_HID,
                     NUM_CLASSES:NUM_CLASSES + 1].set(p["unc2_w"])
    b_cu2 = jnp.zeros((1, OUT_LANES), jnp.float32)
    b_cu2 = b_cu2.at[:, :NUM_CLASSES].set(p["cls2_b"])
    b_cu2 = b_cu2.at[:, NUM_CLASSES:NUM_CLASSES + 1].set(p["unc2_b"])

    q["cu1_w"], q["cu1_b"] = w_cu1, b_cu1
    q["cu2_w"], q["cu2_b"] = w_cu2, b_cu2
    return q


if __name__ == "__main__":
    key = jax.random.PRNGKey(0)
    k_x, k_p = jax.random.split(key)

    B, C, H, W = 4, 3, 16, 16
    x = jax.random.normal(k_x, (B, C, H, W), jnp.float32)       # NCHW like PyTorch
    params = prepare_params(init_params(k_p))

    logits, uncertainty, features = jax.jit(epoc_forward)(x, params)
    jax.block_until_ready((logits, uncertainty, features))

    assert logits.shape == (B, NUM_CLASSES)
    assert uncertainty.shape == (B, 1)
    assert features.shape == (B, 256)
    assert bool(jnp.all(jnp.isfinite(logits)))
    assert bool(jnp.all(jnp.isfinite(features)))
    assert bool(jnp.all((uncertainty >= 0.0) & (uncertainty <= 1.0)))

    print("KERNEL_OK")
</pallas_src>

<mosaic_0001>
module attributes {stable_mosaic.version = 11 : i64} {
  func.func @epoc_kernel(%arg0: i32, %arg1: i32, %arg2: memref<1x3x128xf32, #tpu.memory_space<vmem>>, %arg3: memref<3x64xf32, #tpu.memory_space<vmem>>, %arg4: memref<1x64xf32, #tpu.memory_space<vmem>>, %arg5: memref<64x1280xf32, #tpu.memory_space<vmem>>, %arg6: memref<1x1280xf32, #tpu.memory_space<vmem>>, %arg7: memref<1280x512xf32, #tpu.memory_space<vmem>>, %arg8: memref<1x512xf32, #tpu.memory_space<vmem>>, %arg9: memref<512x256xf32, #tpu.memory_space<vmem>>, %arg10: memref<1x256xf32, #tpu.memory_space<vmem>>, %arg11: memref<256x128xf32, #tpu.memory_space<vmem>>, %arg12: memref<1x128xf32, #tpu.memory_space<vmem>>, %arg13: memref<128x256xf32, #tpu.memory_space<vmem>>, %arg14: memref<1x256xf32, #tpu.memory_space<vmem>>, %arg15: memref<256x256xf32, #tpu.memory_space<vmem>>, %arg16: memref<1x256xf32, #tpu.memory_space<vmem>>, %arg17: memref<256x128xf32, #tpu.memory_space<vmem>>, %arg18: memref<1x128xf32, #tpu.memory_space<vmem>>, %arg19: memref<8x256xf32, #tpu.memory_space<vmem>>, %arg20: memref<8x128xf32, #tpu.memory_space<vmem>>, %arg21: memref<1x64xf32, #tpu.memory_space<vmem>>, %arg22: memref<8x1280xf32, #tpu.memory_space<vmem>>) attributes {dimension_semantics = [#tpu.dimension_semantics<arbitrary>, #tpu.dimension_semantics<arbitrary>], iteration_bounds = array<i64: 4, 2>, scalar_prefetch = 0 : i64, scratch_operands = 2 : i64, tpu.core_type = #tpu.core_type<tc>, window_params = [{transform_indices = @transform_0, window_bounds = array<i64: 1, 3, 128>}, {pipeline_mode = #tpu.pipeline_mode<synchronous>, transform_indices = @transform_1, window_bounds = array<i64: 3, 64>}, {pipeline_mode = #tpu.pipeline_mode<synchronous>, transform_indices = @transform_2, window_bounds = array<i64: 1, 64>}, {pipeline_mode = #tpu.pipeline_mode<synchronous>, transform_indices = @transform_3, window_bounds = array<i64: 64, 1280>}, {pipeline_mode = #tpu.pipeline_mode<synchronous>, transform_indices = @transform_4, window_bounds = array<i64: 1, 1280>}, {pipeline_mode = #tpu.pipeline_mode<synchronous>, transform_indices = @transform_5, window_bounds = array<i64: 1280, 512>}, {pipeline_mode = #tpu.pipeline_mode<synchronous>, transform_indices = @transform_6, window_bounds = array<i64: 1, 512>}, {pipeline_mode = #tpu.pipeline_mode<synchronous>, transform_indices = @transform_7, window_bounds = array<i64: 512, 256>}, {pipeline_mode = #tpu.pipeline_mode<synchronous>, transform_indices = @transform_8, window_bounds = array<i64: 1, 256>}, {pipeline_mode = #tpu.pipeline_mode<synchronous>, transform_indices = @transform_9, window_bounds = array<i64: 256, 128>}, {pipeline_mode = #tpu.pipeline_mode<synchronous>, transform_indices = @transform_10, window_bounds = array<i64: 1, 128>}, {pipeline_mode = #tpu.pipeline_mode<synchronous>, transform_indices = @transform_11, window_bounds = array<i64: 128, 256>}, {pipeline_mode = #tpu.pipeline_mode<synchronous>, transform_indices = @transform_12, window_bounds = array<i64: 1, 256>}, {pipeline_mode = #tpu.pipeline_mode<synchronous>, transform_indices = @transform_13, window_bounds = array<i64: 256, 256>}, {pipeline_mode = #tpu.pipeline_mode<synchronous>, transform_indices = @transform_14, window_bounds = array<i64: 1, 256>}, {pipeline_mode = #tpu.pipeline_mode<synchronous>, transform_indices = @transform_15, window_bounds = array<i64: 256, 128>}, {pipeline_mode = #tpu.pipeline_mode<synchronous>, transform_indices = @transform_16, window_bounds = array<i64: 1, 128>}, {pipeline_mode = #tpu.pipeline_mode<synchronous>, transform_indices = @transform_17, window_bounds = array<i64: 8, 256>}, {pipeline_mode = #tpu.pipeline_mode<synchronous>, transform_indices = @transform_18, window_bounds = array<i64: 8, 128>}]} {
    %c0_i32 = arith.constant 0 : i32
    %0 = arith.cmpi eq, %arg0, %c0_i32 : i32
    %c0_i32_0 = arith.constant 0 : i32
    %1 = arith.cmpi eq, %arg1, %c0_i32_0 : i32
    %2 = arith.andi %0, %1 : i1
    %3 = arith.extui %2 : i1 to i32
    %c0_i32_1 = arith.constant 0 : i32
    %4 = arith.cmpi ne, %3, %c0_i32_1 : i32
    scf.if %4 {
      %cst_19 = arith.constant 0.000000e+00 : f32
      %34 = vector.broadcast %cst_19 : f32 to vector<8x1280xf32>
      %c0_20 = arith.constant 0 : index
      %c0_21 = arith.constant 0 : index
      %35 = vector.load %arg22[%c0_20, %c0_21] : memref<8x1280xf32, #tpu.memory_space<vmem>>, vector<8x1280xf32>
      tpu.vector_store %arg22[%c0_20, %c0_21], %34 {strides = array<i32>} : memref<8x1280xf32, #tpu.memory_space<vmem>>, vector<8x1280xf32>,
    } else {
    }
    %c0_i32_2 = arith.constant 0 : i32
    %5 = arith.cmpi eq, %arg1, %c0_i32_2 : i32
    %6 = arith.extui %5 : i1 to i32
    %c0_i32_3 = arith.constant 0 : i32
    %7 = arith.cmpi ne, %6, %c0_i32_3 : i32
    scf.if %7 {
      %cst_19 = arith.constant 0.000000e+00 : f32
      %34 = vector.broadcast %cst_19 : f32 to vector<1x64xf32>
      %c0_20 = arith.constant 0 : index
      %c0_21 = arith.constant 0 : index
      %35 = vector.load %arg21[%c0_20, %c0_21] : memref<1x64xf32, #tpu.memory_space<vmem>>, vector<1x64xf32>
      tpu.vector_store %arg21[%c0_20, %c0_21], %34 {strides = array<i32>} : memref<1x64xf32, #tpu.memory_space<vmem>>, vector<1x64xf32>,
    } else {
    }
    %c0 = arith.constant 0 : index
    %c0_4 = arith.constant 0 : index
    %c0_5 = arith.constant 0 : index
    %8 = vector.load %arg2[%c0, %c0_4, %c0_5] : memref<1x3x128xf32, #tpu.memory_space<vmem>>, vector<1x3x128xf32>
    %9 = vector.shape_cast %8 : vector<1x3x128xf32> to vector<3x128xf32>
    %c0_6 = arith.constant 0 : index
    %c0_7 = arith.constant 0 : index
    %10 = vector.load %arg3[%c0_6, %c0_7] : memref<3x64xf32, #tpu.memory_space<vmem>>, vector<3x64xf32>
    %cst = arith.constant dense<0.000000e+00> : vector<128x64xf32>
    %11 = tpu.matmul %9, %10, %cst {dimension_numbers = #tpu.dot_dimension_numbers<[0], [0], [1], [1], [0, 1, 1, 1], [], []>} : vector<3x128xf32>, vector<3x64xf32>, vector<128x64xf32> -> vector<128x64xf32>
    %c0_8 = arith.constant 0 : index
    %c0_9 = arith.constant 0 : index
    %12 = vector.load %arg4[%c0_8, %c0_9] : memref<1x64xf32, #tpu.memory_space<vmem>>, vector<1x64xf32>
    %13 = vector.broadcast %12 : vector<1x64xf32> to vector<128x64xf32>
    %14 = arith.addf %11, %13 : vector<128x64xf32>
    %15 = arith.negf %14 : vector<128x64xf32>
    %16 = math.exp %15 : vector<128x64xf32>
    %cst_10 = arith.constant 1.000000e+00 : f32
    %17 = vector.broadcast %cst_10 : f32 to vector<128x64xf32>
    %18 = arith.addf %17, %16 : vector<128x64xf32>
    %19 = arith.divf %17, %18 : vector<128x64xf32>
    %20 = arith.mulf %14, %19 : vector<128x64xf32>
    %c0_11 = arith.constant 0 : index
    %c0_12 = arith.constant 0 : index
    %21 = vector.load %arg21[%c0_11, %c0_12] : memref<1x64xf32, #tpu.memory_space<vmem>>, vector<1x64xf32>
    %cst_13 = arith.constant dense<0.000000e+00> : vector<64xf32>
    %22 = vector.multi_reduction <add>, %20, %cst_13 [0] : vector<128x64xf32> to vector<64xf32>
    %23 = vector.shape_cast %22 : vector<64xf32> to vector<1x64xf32>
    %24 = arith.addf %21, %23 : vector<1x64xf32>
    %c0_14 = arith.constant 0 : index
    %c0_15 = arith.constant 0 : index
    %25 = vector.load %arg21[%c0_14, %c0_15] : memref<1x64xf32, #tpu.memory_space<vmem>>, vector<1x64xf32>
    tpu.vector_store %arg21[%c0_14, %c0_15], %24 {strides = array<i32>} : memref<1x64xf32, #tpu.memory_space<vmem>>, vector<1x64xf32>,
    %c1_i32 = arith.constant 1 : i32
    %26 = arith.cmpi eq, %arg1, %c1_i32 : i32
    %27 = arith.extui %26 : i1 to i32
    %c0_i32_16 = arith.constant 0 : i32
    %28 = arith.cmpi ne, %27, %c0_i32_16 : i32
    scf.if %28 {
      %c0_19 = arith.constant 0 : index
      %c0_20 = arith.constant 0 : index
      %34 = vector.load %arg21[%c0_19, %c0_20] : memref<1x64xf32, #tpu.memory_space<vmem>>, vector<1x64xf32>
      %cst_21 = arith.constant 3.906250e-03 : f32
      %35 = vector.broadcast %cst_21 : f32 to vector<1x64xf32>
      %36 = arith.mulf %34, %35 : vector<1x64xf32>
      %c0_22 = arith.constant 0 : index
      %c0_23 = arith.constant 0 : index
      %37 = vector.load %arg5[%c0_22, %c0_23] : memref<64x1280xf32, #tpu.memory_space<vmem>>, vector<64x1280xf32>
      %cst_24 = arith.constant dense<0.000000e+00> : vector<1x1280xf32>
      %38 = tpu.matmul %36, %37, %cst_24 {dimension_numbers = #tpu.dot_dimension_numbers<[1], [0], [0], [1], [0, 0, 1, 1], [], []>} : vector<1x64xf32>, vector<64x1280xf32>, vector<1x1280xf32> -> vector<1x1280xf32>
      %c0_25 = arith.constant 0 : index
      %c0_26 = arith.constant 0 : index
      %39 = vector.load %arg6[%c0_25, %c0_26] : memref<1x1280xf32, #tpu.memory_space<vmem>>, vector<1x1280xf32>
      %40 = arith.addf %38, %39 : vector<1x1280xf32>
      %41 = arith.index_cast %arg0 : i32 to index
      %c0_27 = arith.constant 0 : index
      %42 = vector.load %arg22[%41, %c0_27] : memref<8x1280xf32, #tpu.memory_space<vmem>>, vector<1x1280xf32>
      tpu.vector_store %arg22[%41, %c0_27], %40 {strides = array<i32>} : memref<8x1280xf32, #tpu.memory_space<vmem>>, vector<1x1280xf32>,
    } else {
    }
    %c3_i32 = arith.constant 3 : i32
    %29 = arith.cmpi eq, %arg0, %c3_i32 : i32
    %c1_i32_17 = arith.constant 1 : i32
    %30 = arith.cmpi eq, %arg1, %c1_i32_17 : i32
    %31 = arith.andi %29, %30 : i1
    %32 = arith.extui %31 : i1 to i32
    %c0_i32_18 = arith.constant 0 : i32
    %33 = arith.cmpi ne, %32, %c0_i32_18 : i32
    scf.if %33 {
      %c0_19 = arith.constant 0 : index
      %c0_20 = arith.constant 0 : index
      %34 = vector.load %arg22[%c0_19, %c0_20] : memref<8x1280xf32, #tpu.memory_space<vmem>>, vector<8x1280xf32>
      %c0_21 = arith.constant 0 : index
      %c0_22 = arith.constant 0 : index
      %35 = vector.load %arg7[%c0_21, %c0_22] : memref<1280x512xf32, #tpu.memory_space<vmem>>, vector<1280x512xf32>
      %cst_23 = arith.constant dense<0.000000e+00> : vector<8x512xf32>
      %36 = tpu.matmul %34, %35, %cst_23 {dimension_numbers = #tpu.dot_dimension_numbers<[1], [0], [0], [1], [0, 0, 1, 1], [], []>} : vector<8x1280xf32>, vector<1280x512xf32>, vector<8x512xf32> -> vector<8x512xf32>
      %c0_24 = arith.constant 0 : index
      %c0_25 = arith.constant 0 : index
      %37 = vector.load %arg8[%c0_24, %c0_25] : memref<1x512xf32, #tpu.memory_space<vmem>>, vector<1x512xf32>
      %38 = vector.broadcast %37 : vector<1x512xf32> to vector<8x512xf32>
      %39 = arith.addf %36, %38 : vector<8x512xf32>
      %cst_26 = arith.constant 0.000000e+00 : f32
      %40 = vector.broadcast %cst_26 : f32 to vector<8x512xf32>
      %41 = arith.maximumf %39, %40 : vector<8x512xf32>
      %c0_27 = arith.constant 0 : index
      %c0_28 = arith.constant 0 : index
      %42 = vector.load %arg9[%c0_27, %c0_28] : memref<512x256xf32, #tpu.memory_space<vmem>>, vector<512x256xf32>
      %cst_29 = arith.constant dense<0.000000e+00> : vector<8x256xf32>
      %43 = tpu.matmul %41, %42, %cst_29 {dimension_numbers = #tpu.dot_dimension_numbers<[1], [0], [0], [1], [0, 0, 1, 1], [], []>} : vector<8x512xf32>, vector<512x256xf32>, vector<8x256xf32> -> vector<8x256xf32>
      %c0_30 = arith.constant 0 : index
      %c0_31 = arith.constant 0 : index
      %44 = vector.load %arg10[%c0_30, %c0_31] : memref<1x256xf32, #tpu.memory_space<vmem>>, vector<1x256xf32>
      %45 = vector.broadcast %44 : vector<1x256xf32> to vector<8x256xf32>
      %46 = arith.addf %43, %45 : vector<8x256xf32>
      %cst_32 = arith.constant 0.000000e+00 : f32
      %47 = vector.broadcast %cst_32 : f32 to vector<8x256xf32>
      %48 = arith.maximumf %46, %47 : vector<8x256xf32>
      %c0_33 = arith.constant 0 : index
      %c0_34 = arith.constant 0 : index
      %49 = vector.load %arg11[%c0_33, %c0_34] : memref<256x128xf32, #tpu.memory_space<vmem>>, vector<256x128xf32>
      %cst_35 = arith.constant dense<0.000000e+00> : vector<8x128xf32>
      %50 = tpu.matmul %48, %49, %cst_35 {dimension_numbers = #tpu.dot_dimension_numbers<[1], [0], [0], [1], [0, 0, 1, 1], [], []>} : vector<8x256xf32>, vector<256x128xf32>, vector<8x128xf32> -> vector<8x128xf32>
      %c0_36 = arith.constant 0 : index
      %c0_37 = arith.constant 0 : index
      %51 = vector.load %arg12[%c0_36, %c0_37] : memref<1x128xf32, #tpu.memory_space<vmem>>, vector<1x128xf32>
      %52 = vector.broadcast %51 : vector<1x128xf32> to vector<8x128xf32>
      %53 = arith.addf %50, %52 : vector<8x128xf32>
      %54 = math.tanh %53 : vector<8x128xf32>
      %c0_38 = arith.constant 0 : index
      %c0_39 = arith.constant 0 : index
      %55 = vector.load %arg13[%c0_38, %c0_39] : memref<128x256xf32, #tpu.memory_space<vmem>>, vector<128x256xf32>
      %cst_40 = arith.constant dense<0.000000e+00> : vector<8x256xf32>
      %56 = tpu.matmul %54, %55, %cst_40 {dimension_numbers = #tpu.dot_dimension_numbers<[1], [0], [0], [1], [0, 0, 1, 1], [], []>} : vector<8x128xf32>, vector<128x256xf32>, vector<8x256xf32> -> vector<8x256xf32>
      %c0_41 = arith.constant 0 : index
      %c0_42 = arith.constant 0 : index
      %57 = vector.load %arg14[%c0_41, %c0_42] : memref<1x256xf32, #tpu.memory_space<vmem>>, vector<1x256xf32>
      %58 = vector.broadcast %57 : vector<1x256xf32> to vector<8x256xf32>
      %59 = arith.addf %56, %58 : vector<8x256xf32>
      %60 = arith.negf %59 : vector<8x256xf32>
      %61 = math.exp %60 : vector<8x256xf32>
      %cst_43 = arith.constant 1.000000e+00 : f32
      %62 = vector.broadcast %cst_43 : f32 to vector<8x256xf32>
      %63 = arith.addf %62, %61 : vector<8x256xf32>
      %64 = arith.divf %62, %63 : vector<8x256xf32>
      %65 = arith.mulf %48, %64 : vector<8x256xf32>
      %c0_44 = arith.constant 0 : index
      %c0_45 = arith.constant 0 : index
      %66 = vector.load %arg19[%c0_44, %c0_45] : memref<8x256xf32, #tpu.memory_space<vmem>>, vector<8x256xf32>
      tpu.vector_store %arg19[%c0_44, %c0_45], %65 {strides = array<i32>} : memref<8x256xf32, #tpu.memory_space<vmem>>, vector<8x256xf32>,
      %c0_46 = arith.constant 0 : index
      %c0_47 = arith.constant 0 : index
      %67 = vector.load %arg15[%c0_46, %c0_47] : memref<256x256xf32, #tpu.memory_space<vmem>>, vector<256x256xf32>
      %cst_48 = arith.constant dense<0.000000e+00> : vector<8x256xf32>
      %68 = tpu.matmul %65, %67, %cst_48 {dimension_numbers = #tpu.dot_dimension_numbers<[1], [0], [0], [1], [0, 0, 1, 1], [], []>} : vector<8x256xf32>, vector<256x256xf32>, vector<8x256xf32> -> vector<8x256xf32>
      %c0_49 = arith.constant 0 : index
      %c0_50 = arith.constant 0 : index
      %69 = vector.load %arg16[%c0_49, %c0_50] : memref<1x256xf32, #tpu.memory_space<vmem>>, vector<1x256xf32>
      %70 = vector.broadcast %69 : vector<1x256xf32> to vector<8x256xf32>
      %71 = arith.addf %68, %70 : vector<8x256xf32>
      %cst_51 = arith.constant 0.000000e+00 : f32
      %72 = vector.broadcast %cst_51 : f32 to vector<8x256xf32>
      %73 = arith.maximumf %71, %72 : vector<8x256xf32>
      %c0_52 = arith.constant 0 : index
      %c0_53 = arith.constant 0 : index
      %74 = vector.load %arg17[%c0_52, %c0_53] : memref<256x128xf32, #tpu.memory_space<vmem>>, vector<256x128xf32>
      %cst_54 = arith.constant dense<0.000000e+00> : vector<8x128xf32>
      %75 = tpu.matmul %73, %74, %cst_54 {dimension_numbers = #tpu.dot_dimension_numbers<[1], [0], [0], [1], [0, 0, 1, 1], [], []>} : vector<8x256xf32>, vector<256x128xf32>, vector<8x128xf32> -> vector<8x128xf32>
      %c0_55 = arith.constant 0 : index
      %c0_56 = arith.constant 0 : index
      %76 = vector.load %arg18[%c0_55, %c0_56] : memref<1x128xf32, #tpu.memory_space<vmem>>, vector<1x128xf32>
      %77 = vector.broadcast %76 : vector<1x128xf32> to vector<8x128xf32>
      %78 = arith.addf %75, %77 : vector<8x128xf32>
      %79 = tpu.iota {dimensions = array<i32: 1>} : vector<8x128xi32>
      %c4_i32 = arith.constant 4 : i32
      %80 = vector.broadcast %c4_i32 : i32 to vector<8x128xi32>
      %81 = arith.cmpi eq, %79, %80 : vector<8x128xi32>
      %82 = arith.negf %78 : vector<8x128xf32>
      %83 = math.exp %82 : vector<8x128xf32>
      %cst_57 = arith.constant 1.000000e+00 : f32
      %84 = vector.broadcast %cst_57 : f32 to vector<8x128xf32>
      %85 = arith.addf %84, %83 : vector<8x128xf32>
      %86 = arith.divf %84, %85 : vector<8x128xf32>
      %87 = arith.select %81, %86, %78 : vector<8x128xi1>, vector<8x128xf32>
      %c0_58 = arith.constant 0 : index
      %c0_59 = arith.constant 0 : index
      %88 = vector.load %arg20[%c0_58, %c0_59] : memref<8x128xf32, #tpu.memory_space<vmem>>, vector<8x128xf32>
      tpu.vector_store %arg20[%c0_58, %c0_59], %87 {strides = array<i32>} : memref<8x128xf32, #tpu.memory_space<vmem>>, vector<8x128xf32>,
    } else {
    }
    return
  }
  func.func @transform_0(%arg0: i32, %arg1: i32) -> (i32, i32, i32) {
    %c0_i32 = arith.constant 0 : i32
    %c0_i32_0 = arith.constant 0 : i32
    return %arg0, %c0_i32, %arg1 : i32, i32, i32
  }
  func.func @transform_1(%arg0: i32, %arg1: i32) -> (i32, i32) {
    %c0_i32 = arith.constant 0 : i32
    %c0_i32_0 = arith.constant 0 : i32
    %c0_i32_1 = arith.constant 0 : i32
    return %c0_i32, %c0_i32_0 : i32, i32
  }
  func.func @transform_2(%arg0: i32, %arg1: i32) -> (i32, i32) {
    %c0_i32 = arith.constant 0 : i32
    %c0_i32_0 = arith.constant 0 : i32
    %c0_i32_1 = arith.constant 0 : i32
    return %c0_i32, %c0_i32_0 : i32, i32
  }
  func.func @transform_3(%arg0: i32, %arg1: i32) -> (i32, i32) {
    %c0_i32 = arith.constant 0 : i32
    %c0_i32_0 = arith.constant 0 : i32
    %c0_i32_1 = arith.constant 0 : i32
    return %c0_i32, %c0_i32_0 : i32, i32
  }
  func.func @transform_4(%arg0: i32, %arg1: i32) -> (i32, i32) {
    %c0_i32 = arith.constant 0 : i32
    %c0_i32_0 = arith.constant 0 : i32
    %c0_i32_1 = arith.constant 0 : i32
    return %c0_i32, %c0_i32_0 : i32, i32
  }
  func.func @transform_5(%arg0: i32, %arg1: i32) -> (i32, i32) {
    %c0_i32 = arith.constant 0 : i32
    %c0_i32_0 = arith.constant 0 : i32
    %c0_i32_1 = arith.constant 0 : i32
    return %c0_i32, %c0_i32_0 : i32, i32
  }
  func.func @transform_6(%arg0: i32, %arg1: i32) -> (i32, i32) {
    %c0_i32 = arith.constant 0 : i32
    %c0_i32_0 = arith.constant 0 : i32
    %c0_i32_1 = arith.constant 0 : i32
    return %c0_i32, %c0_i32_0 : i32, i32
  }
  func.func @transform_7(%arg0: i32, %arg1: i32) -> (i32, i32) {
    %c0_i32 = arith.constant 0 : i32
    %c0_i32_0 = arith.constant 0 : i32
    %c0_i32_1 = arith.constant 0 : i32
    return %c0_i32, %c0_i32_0 : i32, i32
  }
  func.func @transform_8(%arg0: i32, %arg1: i32) -> (i32, i32) {
    %c0_i32 = arith.constant 0 : i32
    %c0_i32_0 = arith.constant 0 : i32
    %c0_i32_1 = arith.constant 0 : i32
    return %c0_i32, %c0_i32_0 : i32, i32
  }
  func.func @transform_9(%arg0: i32, %arg1: i32) -> (i32, i32) {
    %c0_i32 = arith.constant 0 : i32
    %c0_i32_0 = arith.constant 0 : i32
    %c0_i32_1 = arith.constant 0 : i32
    return %c0_i32, %c0_i32_0 : i32, i32
  }
  func.func @transform_10(%arg0: i32, %arg1: i32) -> (i32, i32) {
    %c0_i32 = arith.constant 0 : i32
    %c0_i32_0 = arith.constant 0 : i32
    %c0_i32_1 = arith.constant 0 : i32
    return %c0_i32, %c0_i32_0 : i32, i32
  }
  func.func @transform_11(%arg0: i32, %arg1: i32) -> (i32, i32) {
    %c0_i32 = arith.constant 0 : i32
    %c0_i32_0 = arith.constant 0 : i32
    %c0_i32_1 = arith.constant 0 : i32
    return %c0_i32, %c0_i32_0 : i32, i32
  }
  func.func @transform_12(%arg0: i32, %arg1: i32) -> (i32, i32) {
    %c0_i32 = arith.constant 0 : i32
    %c0_i32_0 = arith.constant 0 : i32
    %c0_i32_1 = arith.constant 0 : i32
    return %c0_i32, %c0_i32_0 : i32, i32
  }
  func.func @transform_13(%arg0: i32, %arg1: i32) -> (i32, i32) {
    %c0_i32 = arith.constant 0 : i32
    %c0_i32_0 = arith.constant 0 : i32
    %c0_i32_1 = arith.constant 0 : i32
    return %c0_i32, %c0_i32_0 : i32, i32
  }
  func.func @transform_14(%arg0: i32, %arg1: i32) -> (i32, i32) {
    %c0_i32 = arith.constant 0 : i32
    %c0_i32_0 = arith.constant 0 : i32
    %c0_i32_1 = arith.constant 0 : i32
    return %c0_i32, %c0_i32_0 : i32, i32
  }
  func.func @transform_15(%arg0: i32, %arg1: i32) -> (i32, i32) {
    %c0_i32 = arith.constant 0 : i32
    %c0_i32_0 = arith.constant 0 : i32
    %c0_i32_1 = arith.constant 0 : i32
    return %c0_i32, %c0_i32_0 : i32, i32
  }
  func.func @transform_16(%arg0: i32, %arg1: i32) -> (i32, i32) {
    %c0_i32 = arith.constant 0 : i32
    %c0_i32_0 = arith.constant 0 : i32
    %c0_i32_1 = arith.constant 0 : i32
    return %c0_i32, %c0_i32_0 : i32, i32
  }
  func.func @transform_17(%arg0: i32, %arg1: i32) -> (i32, i32) {
    %c0_i32 = arith.constant 0 : i32
    %c0_i32_0 = arith.constant 0 : i32
    %c0_i32_1 = arith.constant 0 : i32
    return %c0_i32, %c0_i32_0 : i32, i32
  }
  func.func @transform_18(%arg0: i32, %arg1: i32) -> (i32, i32) {
    %c0_i32 = arith.constant 0 : i32
    %c0_i32_0 = arith.constant 0 : i32
    %c0_i32_1 = arith.constant 0 : i32
    return %c0_i32, %c0_i32_0 : i32, i32
  }
}

</mosaic_0001>

<llo_original>
// kernel: epoc_forward.1
$region0: #{epoc_forward.1}
  #allocation0 [shape = 'u32[]', space=smem, size = 0x4, offset = 0x4, fixed_abs, tag = 'smem constant byte address 0x4 - core index']
  #allocation1 [shape = 'u32[72,128]{1,0:T(1,128)}', space=vmem, size = 0x9000, scoped, tag = 'internal scratch']
  #allocation2 [shape = 'f32[1,64]{1,0:T(1,128)}', space=vmem, size = 0x200, scoped, tag = 'scratch operand']
  #allocation3 [shape = 'f32[8,1280]{1,0:T(8,128)}', space=vmem, size = 0xa000, scoped, tag = 'scratch operand']
  %s0 = inlined_call_operand.vmem [shape: f32[4,3,256], index: 0, kind: input, shape index: {}]
  %s1 = inlined_call_operand.hbm [shape: f32[3,64], index: 1, kind: input, shape index: {}]
  %s2 = inlined_call_operand.hbm [shape: f32[1,64], index: 2, kind: input, shape index: {}]
  %s3 = inlined_call_operand.hbm [shape: f32[64,1280], index: 3, kind: input, shape index: {}]
  %s4 = inlined_call_operand.hbm [shape: f32[1,1280], index: 4, kind: input, shape index: {}]
  %s5 = inlined_call_operand.hbm [shape: f32[1280,512], index: 5, kind: input, shape index: {}]
  %s6 = inlined_call_operand.hbm [shape: f32[1,512], index: 6, kind: input, shape index: {}]
  %s7 = inlined_call_operand.hbm [shape: f32[512,256], index: 7, kind: input, shape index: {}]
  %s8 = inlined_call_operand.hbm [shape: f32[1,256], index: 8, kind: input, shape index: {}]
  %s9 = inlined_call_operand.hbm [shape: f32[256,128], index: 9, kind: input, shape index: {}]
  %s10 = inlined_call_operand.hbm [shape: f32[1,128], index: 10, kind: input, shape index: {}]
  %s11 = inlined_call_operand.hbm [shape: f32[128,256], index: 11, kind: input, shape index: {}]
  %s12 = inlined_call_operand.hbm [shape: f32[1,256], index: 12, kind: input, shape index: {}]
  %s13 = inlined_call_operand.hbm [shape: f32[256,256], index: 13, kind: input, shape index: {}]
  %s14 = inlined_call_operand.hbm [shape: f32[1,256], index: 14, kind: input, shape index: {}]
  %s15 = inlined_call_operand.hbm [shape: f32[256,128], index: 15, kind: input, shape index: {}]
  %s16 = inlined_call_operand.hbm [shape: f32[1,128], index: 16, kind: input, shape index: {}]
  %s17 = inlined_call_operand.vmem [shape: f32[8,256], index: 17, kind: output, shape index: {0}]
  %s18 = inlined_call_operand.vmem [shape: f32[8,128], index: 18, kind: output, shape index: {1}]
  %19 = xla_tuple %s17, %s18
  %s20 = sld [smem:[#allocation0]]
  $region189: #{epoc_forward.1} parent=0
    _
  %s22 = ssub.s32 1, %s20
  %s23 = scalar_select 0, %s22, %s20
  $region1: #{epoc_forward.1} parent=0
    #allocation4 [shape = 'u8[2048]{0}', space=vmem, size = 0x800, scoped, tag = 'input window, operand 1, single buffered']
    #allocation5 [shape = 's32[2]{0}', space=sflag, size = 0x8, scoped, tag = 'scoped memory for epoc_forward.1']
    #allocation6 [shape = 'u8[512]{0}', space=vmem, size = 0x400, scoped, tag = 'input window, operand 2, single buffered']
    #allocation7 [shape = 's32[1]{0}', space=sflag, size = 0x4, scoped, tag = 'scoped memory for epoc_forward.1']
    #allocation8 [shape = 'u8[327680]{0}', space=vmem, size = 0x50000, scoped, tag = 'input window, operand 3, single buffered']
    #allocation9 [shape = 'u8[5120]{0}', space=vmem, size = 0x1400, scoped, tag = 'input window, operand 4, single buffered']
    #allocation10 [shape = 's32[1]{0}', space=sflag, size = 0x4, scoped, tag = 'scoped memory for epoc_forward.1']
    #allocation11 [shape = 'u8[2621440]{0}', space=vmem, size = 0x280000, scoped, tag = 'input window, operand 5, single buffered']
    #allocation12 [shape = 'u8[2048]{0}', space=vmem, size = 0x800, scoped, tag = 'input window, operand 6, single buffered']
    #allocation13 [shape = 's32[1]{0}', space=sflag, size = 0x4, scoped, tag = 'scoped memory for epoc_forward.1']
    #allocation14 [shape = 'u8[524288]{0}', space=vmem, size = 0x80000, scoped, tag = 'input window, operand 7, single buffered']
    #allocation15 [shape = 'u8[1024]{0}', space=vmem, size = 0x400, scoped, tag = 'input window, operand 8, single buffered']
    #allocation16 [shape = 's32[1]{0}', space=sflag, size = 0x4, scoped, tag = 'scoped memory for epoc_forward.1']
    #allocation17 [shape = 'u8[131072]{0}', space=vmem, size = 0x20000, scoped, tag = 'input window, operand 9, single buffered']
    #allocation18 [shape = 'u8[512]{0}', space=vmem, size = 0x400, scoped, tag = 'input window, operand 10, single buffered']
    #allocation19 [shape = 's32[1]{0}', space=sflag, size = 0x4, scoped, tag = 'scoped memory for epoc_forward.1']
    #allocation20 [shape = 'u8[131072]{0}', space=vmem, size = 0x20000, scoped, tag = 'input window, operand 11, single buffered']
    #allocation21 [shape = 'u8[1024]{0}', space=vmem, size = 0x400, scoped, tag = 'input window, operand 12, single buffered']
    #allocation22 [shape = 's32[1]{0}', space=sflag, size = 0x4, scoped, tag = 'scoped memory for epoc_forward.1']
    #allocation23 [shape = 'u8[262144]{0}', space=vmem, size = 0x40000, scoped, tag = 'input window, operand 13, single buffered']
    #allocation24 [shape = 'u8[1024]{0}', space=vmem, size = 0x400, scoped, tag = 'input window, operand 14, single buffered']
    #allocation25 [shape = 's32[1]{0}', space=sflag, size = 0x4, scoped, tag = 'scoped memory for epoc_forward.1']
    #allocation26 [shape = 'u8[131072]{0}', space=vmem, size = 0x20000, scoped, tag = 'input window, operand 15, single buffered']
    #allocation27 [shape = 'u8[512]{0}', space=vmem, size = 0x400, scoped, tag = 'input window, operand 16, single buffered']
    #allocation28 [shape = 's32[1]{0}', space=sflag, size = 0x4, scoped, tag = 'scoped memory for epoc_forward.1']
    %24 = vsyncpa [#allocation5], 0
    %25 = vsyncpa [#allocation7], 0
    %26 = vsyncpa [#allocation10], 0
    %27 = vsyncpa [#allocation13], 0
    %28 = vsyncpa [#allocation16], 0
    %29 = vsyncpa [#allocation19], 0
    %30 = vsyncpa [#allocation22], 0
    %31 = vsyncpa [#allocation25], 0
    %32 = vsyncpa [#allocation28], 0
    loop: start=0, step=1, limit=10
    $region2: #{epoc_forward.1} parent=1 // loop_pre_header
      _
    $region3: #{epoc_forward.1} parent=1 // loop_header
      %s34 = sphi 0, %s38
      %p35 = scmp.ge.s32.totalorder %s34, 10
      %s41 = sphi 0, %s53
      %s42 = sphi 0, %s49
      %s43 = sphi 0, %s41
      %s44 = sphi 0, %s42
      %s45 = sphi 0, %s43
      %s46 = sphi 0, %s44
      %s58 = sphi 0, %s60
      %s61 = sphi 0, %s58
      %s62 = sphi 0, %s61
      %s78 = sphi 0, %s62
      %s82 = sphi 0, %s82
      %s84 = sphi 0, %s82
      %s85 = sphi 0, %s84
      %s99 = sphi 0, %s85
      %s103 = sphi 0, %s103
      %s105 = sphi 0, %s103
      %s106 = sphi 0, %s105
      %s120 = sphi 0, %s106
      %s124 = sphi 0, %s124
      %s126 = sphi 0, %s124
      %s127 = sphi 0, %s126
      %s141 = sphi 0, %s127
      %s145 = sphi 0, %s145
      %s147 = sphi 0, %s145
      %s148 = sphi 0, %s147
      %s162 = sphi 0, %s148
      %s166 = sphi 0, %s166
      %s168 = sphi 0, %s166
      %s169 = sphi 0, %s168
      %s183 = sphi 0, %s169
      %s187 = sphi 0, %s187
      %s189 = sphi 0, %s187
      %s190 = sphi 0, %s189
      %s204 = sphi 0, %s190
      %s208 = sphi 0, %s208
      %s210 = sphi 0, %s208
      %s211 = sphi 0, %s210
      %s225 = sphi 0, %s211
      %s229 = sphi 0, %s229
      %s231 = sphi 0, %s229
      %s232 = sphi 0, %s231
      %s246 = sphi 0, %s232
      %s250 = sphi 0, %s250
      %s252 = sphi 0, %s250
      %s253 = sphi 0, %s252
      %s267 = sphi 0, %s253
      %s271 = sphi 0, %s271
      %s273 = sphi 0, %s271
      %s274 = sphi 0, %s273
      %s288 = sphi 0, %s274
      %s292 = sphi 0, %s292
      %s294 = sphi 0, %s292
      %s295 = sphi 0, %s294
      %s309 = sphi 0, %s295
      %s313 = sphi 0, %s313
      %s315 = sphi 0, %s313
      %s316 = sphi 0, %s315
      %s330 = sphi 0, %s316
      %s334 = sphi 0, %s334
      %s336 = sphi 0, %s334
      %s337 = sphi 0, %s336
      %s351 = sphi 0, %s337
      %s355 = sphi 0, %s355
      %s357 = sphi 0, %s355
      %s358 = sphi 0, %s357
      %s372 = sphi 0, %s358
      %s376 = sphi 0, %s376
      %s378 = sphi 0, %s376
      %s379 = sphi 0, %s378
      %s393 = sphi 0, %s379
      %s397 = sphi 0, %s397
      %s399 = sphi 0, %s397
      %s400 = sphi 0, %s399
      %s414 = sphi 0, %s400
      %s418 = sphi 0, %s418
      %s420 = sphi 0, %s418
      %s421 = sphi 0, %s420
      %s435 = sphi 0, %s421
      %s439 = sphi 0, %s439
      %s441 = sphi 0, %s439
      %s442 = sphi 0, %s441
      %s456 = sphi 0, %s442
    $region4: #{epoc_forward.1} parent=1 // loop_header_branch
      %37 = sbr.rel (%p35) target = $region8
    $region5: #{epoc_forward.1} parent=1 // loop_body
      %s39 = ssub.s32 %s34, 1
      %s40 = ssub.s32 %s34, 2
      %s47 = sadd.s32 1, %s42
      %p48 = scmp.ge.s32.totalorder %s47, 2
      %s49 = scalar_select %p48, 0, %s47
      %s50 = sadd.s32 1, %s41
      %s51 = scalar_select %p48, %s50, %s41
      %p52 = scmp.ge.s32.totalorder %s51, 4
      %s53 = scalar_select %p52, 0, %s51
      %s54 = ssub.s32 %s41, %s53
      %s55 = ssub.s32 %s42, %s49
      %s56 = sor.u32 %s54, %s55
      %p57 = scmp.eq.s32.totalorder %s56, 0
      %s59 = sadd.s32 %s58, 1
      %s60 = scalar_select %p57, %s58, %s59
      %p63 = pneg %p57
      %p64 = scmp.eq.s32.totalorder %s34, 7
      %p65 = por %p63, %p64
      %p66 = scmp.ne.s32.totalorder %s58, %s61
      %p67 = scmp.eq.s32.totalorder %s34, 0
      %p68 = por %p66, %p67
      %p69 = scmp.ne.s32.totalorder %s58, %s61
      %p70 = scmp.eq.s32.totalorder %s39, 7
      %p71 = por %p69, %p70
      %p72 = scmp.ne.s32.totalorder %s61, %s62
      %p73 = scmp.eq.s32.totalorder %s39, 0
      %p74 = por %p72, %p73
      %p75 = scmp.ne.s32.totalorder %s61, %s62
      %p76 = scmp.eq.s32.totalorder %s40, 7
      %p77 = por %p75, %p76
      %p79 = scmp.ne.s32.totalorder %s62, %s78
      %p80 = scmp.eq.s32.totalorder %s40, 0
      %p81 = por %p79, %p80
      %s83 = sadd.s32 %s82, 1
      %p86 = scmp.eq.s32.totalorder %s34, 7
      %p87 = scmp.ne.s32.totalorder %s82, %s84
      %p88 = scmp.eq.s32.totalorder %s34, 0
      %p89 = por %p87, %p88
      %p90 = scmp.ne.s32.totalorder %s82, %s84
      %p91 = scmp.eq.s32.totalorder %s39, 7
      %p92 = por %p90, %p91
      %p93 = scmp.ne.s32.totalorder %s84, %s85
      %p94 = scmp.eq.s32.totalorder %s39, 0
      %p95 = por %p93, %p94
      %p96 = scmp.ne.s32.totalorder %s84, %s85
      %p97 = scmp.eq.s32.totalorder %s40, 7
      %p98 = por %p96, %p97
      %p100 = scmp.ne.s32.totalorder %s85, %s99
      %p101 = scmp.eq.s32.totalorder %s40, 0
      %p102 = por %p100, %p101
      %s104 = sadd.s32 %s103, 1
      %p107 = scmp.eq.s32.totalorder %s34, 7
      %p108 = scmp.ne.s32.totalorder %s103, %s105
      %p109 = scmp.eq.s32.totalorder %s34, 0
      %p110 = por %p108, %p109
      %p111 = scmp.ne.s32.totalorder %s103, %s105
      %p112 = scmp.eq.s32.totalorder %s39, 7
      %p113 = por %p111, %p112
      %p114 = scmp.ne.s32.totalorder %s105, %s106
      %p115 = scmp.eq.s32.totalorder %s39, 0
      %p116 = por %p114, %p115
      %p117 = scmp.ne.s32.totalorder %s105, %s106
      %p118 = scmp.eq.s32.totalorder %s40, 7
      %p119 = por %p117, %p118
      %p121 = scmp.ne.s32.totalorder %s106, %s120
      %p122 = scmp.eq.s32.totalorder %s40, 0
      %p123 = por %p121, %p122
      %s125 = sadd.s32 %s124, 1
      %p128 = scmp.eq.s32.totalorder %s34, 7
      %p129 = scmp.ne.s32.totalorder %s124, %s126
      %p130 = scmp.eq.s32.totalorder %s34, 0
      %p131 = por %p129, %p130
      %p132 = scmp.ne.s32.totalorder %s124, %s126
      %p133 = scmp.eq.s32.totalorder %s39, 7
      %p134 = por %p132, %p133
      %p135 = scmp.ne.s32.totalorder %s126, %s127
      %p136 = scmp.eq.s32.totalorder %s39, 0
      %p137 = por %p135, %p136
      %p138 = scmp.ne.s32.totalorder %s126, %s127
      %p139 = scmp.eq.s32.totalorder %s40, 7
      %p140 = por %p138, %p139
      %p142 = scmp.ne.s32.totalorder %s127, %s141
      %p143 = scmp.eq.s32.totalorder %s40, 0
      %p144 = por %p142, %p143
      %s146 = sadd.s32 %s145, 1
      %p149 = scmp.eq.s32.totalorder %s34, 7
      %p150 = scmp.ne.s32.totalorder %s145, %s147
      %p151 = scmp.eq.s32.totalorder %s34, 0
      %p152 = por %p150, %p151
      %p153 = scmp.ne.s32.totalorder %s145, %s147
      %p154 = scmp.eq.s32.totalorder %s39, 7
      %p155 = por %p153, %p154
      %p156 = scmp.ne.s32.totalorder %s147, %s148
      %p157 = scmp.eq.s32.totalorder %s39, 0
      %p158 = por %p156, %p157
      %p159 = scmp.ne.s32.totalorder %s147, %s148
      %p160 = scmp.eq.s32.totalorder %s40, 7
      %p161 = por %p159, %p160
      %p163 = scmp.ne.s32.totalorder %s148, %s162
      %p164 = scmp.eq.s32.totalorder %s40, 0
      %p165 = por %p163, %p164
      %s167 = sadd.s32 %s166, 1
      %p170 = scmp.eq.s32.totalorder %s34, 7
      %p171 = scmp.ne.s32.totalorder %s166, %s168
      %p172 = scmp.eq.s32.totalorder %s34, 0
      %p173 = por %p171, %p172
      %p174 = scmp.ne.s32.totalorder %s166, %s168
      %p175 = scmp.eq.s32.totalorder %s39, 7
      %p176 = por %p174, %p175
      %p177 = scmp.ne.s32.totalorder %s168, %s169
      %p178 = scmp.eq.s32.totalorder %s39, 0
      %p179 = por %p177, %p178
      %p180 = scmp.ne.s32.totalorder %s168, %s169
      %p181 = scmp.eq.s32.totalorder %s40, 7
      %p182 = por %p180, %p181
      %p184 = scmp.ne.s32.totalorder %s169, %s183
      %p185 = scmp.eq.s32.totalorder %s40, 0
      %p186 = por %p184, %p185
      %s188 = sadd.s32 %s187, 1
      %p191 = scmp.eq.s32.totalorder %s34, 7
      %p192 = scmp.ne.s32.totalorder %s187, %s189
      %p193 = scmp.eq.s32.totalorder %s34, 0
      %p194 = por %p192, %p193
      %p195 = scmp.ne.s32.totalorder %s187, %s189
      %p196 = scmp.eq.s32.totalorder %s39, 7
      %p197 = por %p195, %p196
      %p198 = scmp.ne.s32.totalorder %s189, %s190
      %p199 = scmp.eq.s32.totalorder %s39, 0
      %p200 = por %p198, %p199
      %p201 = scmp.ne.s32.totalorder %s189, %s190
      %p202 = scmp.eq.s32.totalorder %s40, 7
      %p203 = por %p201, %p202
      %p205 = scmp.ne.s32.totalorder %s190, %s204
      %p206 = scmp.eq.s32.totalorder %s40, 0
      %p207 = por %p205, %p206
      %s209 = sadd.s32 %s208, 1
      %p212 = scmp.eq.s32.totalorder %s34, 7
      %p213 = scmp.ne.s32.totalorder %s208, %s210
      %p214 = scmp.eq.s32.totalorder %s34, 0
      %p215 = por %p213, %p214
      %p216 = scmp.ne.s32.totalorder %s208, %s210
      %p217 = scmp.eq.s32.totalorder %s39, 7
      %p218 = por %p216, %p217
      %p219 = scmp.ne.s32.totalorder %s210, %s211
      %p220 = scmp.eq.s32.totalorder %s39, 0
      %p221 = por %p219, %p220
      %p222 = scmp.ne.s32.totalorder %s210, %s211
      %p223 = scmp.eq.s32.totalorder %s40, 7
      %p224 = por %p222, %p223
      %p226 = scmp.ne.s32.totalorder %s211, %s225
      %p227 = scmp.eq.s32.totalorder %s40, 0
      %p228 = por %p226, %p227
      %s230 = sadd.s32 %s229, 1
      %p233 = scmp.eq.s32.totalorder %s34, 7
      %p234 = scmp.ne.s32.totalorder %s229, %s231
      %p235 = scmp.eq.s32.totalorder %s34, 0
      %p236 = por %p234, %p235
      %p237 = scmp.ne.s32.totalorder %s229, %s231
      %p238 = scmp.eq.s32.totalorder %s39, 7
      %p239 = por %p237, %p238
      %p240 = scmp.ne.s32.totalorder %s231, %s232
      %p241 = scmp.eq.s32.totalorder %s39, 0
      %p242 = por %p240, %p241
      %p243 = scmp.ne.s32.totalorder %s231, %s232
      %p244 = scmp.eq.s32.totalorder %s40, 7
      %p245 = por %p243, %p244
      %p247 = scmp.ne.s32.totalorder %s232, %s246
      %p248 = scmp.eq.s32.totalorder %s40, 0
      %p249 = por %p247, %p248
      %s251 = sadd.s32 %s250, 1
      %p254 = scmp.eq.s32.totalorder %s34, 7
      %p255 = scmp.ne.s32.totalorder %s250, %s252
      %p256 = scmp.eq.s32.totalorder %s34, 0
      %p257 = por %p255, %p256
      %p258 = scmp.ne.s32.totalorder %s250, %s252
      %p259 = scmp.eq.s32.totalorder %s39, 7
      %p260 = por %p258, %p259
      %p261 = scmp.ne.s32.totalorder %s252, %s253
      %p262 = scmp.eq.s32.totalorder %s39, 0
      %p263 = por %p261, %p262
      %p264 = scmp.ne.s32.totalorder %s252, %s253
      %p265 = scmp.eq.s32.totalorder %s40, 7
      %p266 = por %p264, %p265
      %p268 = scmp.ne.s32.totalorder %s253, %s267
      %p269 = scmp.eq.s32.totalorder %s40, 0
      %p270 = por %p268, %p269
      %s272 = sadd.s32 %s271, 1
      %p275 = scmp.eq.s32.totalorder %s34, 7
      %p276 = scmp.ne.s32.totalorder %s271, %s273
      %p277 = scmp.eq.s32.totalorder %s34, 0
      %p278 = por %p276, %p277
      %p279 = scmp.ne.s32.totalorder %s271, %s273
      %p280 = scmp.eq.s32.totalorder %s39, 7
      %p281 = por %p279, %p280
      %p282 = scmp.ne.s32.totalorder %s273, %s274
      %p283 = scmp.eq.s32.totalorder %s39, 0
      %p284 = por %p282, %p283
      %p285 = scmp.ne.s32.totalorder %s273, %s274
      %p286 = scmp.eq.s32.totalorder %s40, 7
      %p287 = por %p285, %p286
      %p289 = scmp.ne.s32.totalorder %s274, %s288
      %p290 = scmp.eq.s32.totalorder %s40, 0
      %p291 = por %p289, %p290
      %s293 = sadd.s32 %s292, 1
      %p296 = scmp.eq.s32.totalorder %s34, 7
      %p297 = scmp.ne.s32.totalorder %s292, %s294
      %p298 = scmp.eq.s32.totalorder %s34, 0
      %p299 = por %p297, %p298
      %p300 = scmp.ne.s32.totalorder %s292, %s294
      %p301 = scmp.eq.s32.totalorder %s39, 7
      %p302 = por %p300, %p301
      %p303 = scmp.ne.s32.totalorder %s294, %s295
      %p304 = scmp.eq.s32.totalorder %s39, 0
      %p305 = por %p303, %p304
      %p306 = scmp.ne.s32.totalorder %s294, %s295
      %p307 = scmp.eq.s32.totalorder %s40, 7
      %p308 = por %p306, %p307
      %p310 = scmp.ne.s32.totalorder %s295, %s309
      %p311 = scmp.eq.s32.totalorder %s40, 0
      %p312 = por %p310, %p311
      %s314 = sadd.s32 %s313, 1
      %p317 = scmp.eq.s32.totalorder %s34, 7
      %p318 = scmp.ne.s32.totalorder %s313, %s315
      %p319 = scmp.eq.s32.totalorder %s34, 0
      %p320 = por %p318, %p319
      %p321 = scmp.ne.s32.totalorder %s313, %s315
      %p322 = scmp.eq.s32.totalorder %s39, 7
      %p323 = por %p321, %p322
      %p324 = scmp.ne.s32.totalorder %s315, %s316
      %p325 = scmp.eq.s32.totalorder %s39, 0
      %p326 = por %p324, %p325
      %p327 = scmp.ne.s32.totalorder %s315, %s316
      %p328 = scmp.eq.s32.totalorder %s40, 7
      %p329 = por %p327, %p328
      %p331 = scmp.ne.s32.totalorder %s316, %s330
      %p332 = scmp.eq.s32.totalorder %s40, 0
      %p333 = por %p331, %p332
      %s335 = sadd.s32 %s334, 1
      %p338 = scmp.eq.s32.totalorder %s34, 7
      %p339 = scmp.ne.s32.totalorder %s334, %s336
      %p340 = scmp.eq.s32.totalorder %s34, 0
      %p341 = por %p339, %p340
      %p342 = scmp.ne.s32.totalorder %s334, %s336
      %p343 = scmp.eq.s32.totalorder %s39, 7
      %p344 = por %p342, %p343
      %p345 = scmp.ne.s32.totalorder %s336, %s337
      %p346 = scmp.eq.s32.totalorder %s39, 0
      %p347 = por %p345, %p346
      %p348 = scmp.ne.s32.totalorder %s336, %s337
      %p349 = scmp.eq.s32.totalorder %s40, 7
      %p350 = por %p348, %p349
      %p352 = scmp.ne.s32.totalorder %s337, %s351
      %p353 = scmp.eq.s32.totalorder %s40, 0
      %p354 = por %p352, %p353
      %s356 = sadd.s32 %s355, 1
      %p359 = scmp.eq.s32.totalorder %s34, 7
      %p360 = scmp.ne.s32.totalorder %s355, %s357
      %p361 = scmp.eq.s32.totalorder %s34, 0
      %p362 = por %p360, %p361
      %p363 = scmp.ne.s32.totalorder %s355, %s357
      %p364 = scmp.eq.s32.totalorder %s39, 7
      %p365 = por %p363, %p364
      %p366 = scmp.ne.s32.totalorder %s357, %s358
      %p367 = scmp.eq.s32.totalorder %s39, 0
      %p368 = por %p366, %p367
      %p369 = scmp.ne.s32.totalorder %s357, %s358
      %p370 = scmp.eq.s32.totalorder %s40, 7
      %p371 = por %p369, %p370
      %p373 = scmp.ne.s32.totalorder %s358, %s372
      %p374 = scmp.eq.s32.totalorder %s40, 0
      %p375 = por %p373, %p374
      %s377 = sadd.s32 %s376, 1
      %p380 = scmp.eq.s32.totalorder %s34, 7
      %p381 = scmp.ne.s32.totalorder %s376, %s378
      %p382 = scmp.eq.s32.totalorder %s34, 0
      %p383 = por %p381, %p382
      %p384 = scmp.ne.s32.totalorder %s376, %s378
      %p385 = scmp.eq.s32.totalorder %s39, 7
      %p386 = por %p384, %p385
      %p387 = scmp.ne.s32.totalorder %s378, %s379
      %p388 = scmp.eq.s32.totalorder %s39, 0
      %p389 = por %p387, %p388
      %p390 = scmp.ne.s32.totalorder %s378, %s379
      %p391 = scmp.eq.s32.totalorder %s40, 7
      %p392 = por %p390, %p391
      %p394 = scmp.ne.s32.totalorder %s379, %s393
      %p395 = scmp.eq.s32.totalorder %s40, 0
      %p396 = por %p394, %p395
      %s398 = sadd.s32 %s397, 1
      %p401 = scmp.eq.s32.totalorder %s34, 7
      %p402 = scmp.ne.s32.totalorder %s397, %s399
      %p403 = scmp.eq.s32.totalorder %s34, 0
      %p404 = por %p402, %p403
      %p405 = scmp.ne.s32.totalorder %s397, %s399
      %p406 = scmp.eq.s32.totalorder %s39, 7
      %p407 = por %p405, %p406
      %p408 = scmp.ne.s32.totalorder %s399, %s400
      %p409 = scmp.eq.s32.totalorder %s39, 0
      %p410 = por %p408, %p409
      %p411 = scmp.ne.s32.totalorder %s399, %s400
      %p412 = scmp.eq.s32.totalorder %s40, 7
      %p413 = por %p411, %p412
      %p415 = scmp.ne.s32.totalorder %s400, %s414
      %p416 = scmp.eq.s32.totalorder %s40, 0
      %p417 = por %p415, %p416
      %s419 = sadd.s32 %s418, 1
      %p422 = scmp.eq.s32.totalorder %s34, 7
      %p423 = scmp.ne.s32.totalorder %s418, %s420
      %p424 = scmp.eq.s32.totalorder %s34, 0
      %p425 = por %p423, %p424
      %p426 = scmp.ne.s32.totalorder %s418, %s420
      %p427 = scmp.eq.s32.totalorder %s39, 7
      %p428 = por %p426, %p427
      %p429 = scmp.ne.s32.totalorder %s420, %s421
      %p430 = scmp.eq.s32.totalorder %s39, 0
      %p431 = por %p429, %p430
      %p432 = scmp.ne.s32.totalorder %s420, %s421
      %p433 = scmp.eq.s32.totalorder %s40, 7
      %p434 = por %p432, %p433
      %p436 = scmp.ne.s32.totalorder %s421, %s435
      %p437 = scmp.eq.s32.totalorder %s40, 0
      %p438 = por %p436, %p437
      %s440 = sadd.s32 %s439, 1
      %p443 = scmp.eq.s32.totalorder %s34, 7
      %p444 = scmp.ne.s32.totalorder %s439, %s441
      %p445 = scmp.eq.s32.totalorder %s34, 0
      %p446 = por %p444, %p445
      %p447 = scmp.ne.s32.totalorder %s439, %s441
      %p448 = scmp.eq.s32.totalorder %s39, 7
      %p449 = por %p447, %p448
      %p450 = scmp.ne.s32.totalorder %s441, %s442
      %p451 = scmp.eq.s32.totalorder %s39, 0
      %p452 = por %p450, %p451
      %p453 = scmp.ne.s32.totalorder %s441, %s442
      %p454 = scmp.eq.s32.totalorder %s40, 7
      %p455 = por %p453, %p454
      %p457 = scmp.ne.s32.totalorder %s442, %s456
      %p458 = scmp.eq.s32.totalorder %s40, 0
      %p459 = por %p457, %p458
      %p460 = scmp.le.s32.totalorder 1, %s34
      %p461 = scmp.lt.s32.totalorder %s34, 9
      %p462 = pnand %p460, %p461
      %p463 = pneg %p462
      // Predicated region
      $region9: #{epoc_forward.1} parent=5 // pred_check
        _
      $region10: #{epoc_forward.1} parent=5 // pred_check_branch
        %465 = sbr.rel (%p462) target = $region12
      $region11: #{epoc_forward.1} parent=5 // pred_region
        %s466 = ssub.s32 %s34, 1
        // Predicated region
        $region13: #{epoc_forward.1} parent=11 // pred_check
          %p467 = pneg %p95
        $region14: #{epoc_forward.1} parent=11 // pred_check_branch
          %469 = sbr.rel (%p467) target = $region16
        $region15: #{epoc_forward.1} parent=11 // pred_region
          %471 = vsyncadd [#allocation5], 0
          %s473 = sshll.u32 %s1, 4
          %s474 = int_to_ptr.hbm [resolvable:$true] %s473
          %s475 = sshll.u32 [#allocation4], 4
          %s476 = int_to_ptr.vmem [resolvable:$true] %s475
          %478 = dma.hbm_to_vmem [thread:$0]  %s474, 64, %s476, [#allocation5]
        $region16: #{epoc_forward.1} parent=11 // pred_fallthru
          _
        // Predicated region
        $region17: #{epoc_forward.1} parent=11 // pred_check
          %p479 = pneg %p116
        $region18: #{epoc_forward.1} parent=11 // pred_check_branch
          %481 = sbr.rel (%p479) target = $region20
        $region19: #{epoc_forward.1} parent=11 // pred_region
          %483 = vsyncadd [#allocation7], 0
          %s485 = sshll.u32 %s2, 4
          %s486 = int_to_ptr.hbm [resolvable:$true] %s485
          %s487 = sshll.u32 [#allocation6], 4
          %s488 = int_to_ptr.vmem [resolvable:$true] %s487
          %490 = dma.hbm_to_vmem [thread:$0]  %s486, 16, %s488, [#allocation7]
        $region20: #{epoc_forward.1} parent=11 // pred_fallthru
          _
        // Predicated region
        $region21: #{epoc_forward.1} parent=11 // pred_check
          %p491 = pneg %p137
        $region22: #{epoc_forward.1} parent=11 // pred_check_branch
          %493 = sbr.rel (%p491) target = $region24
        $region23: #{epoc_forward.1} parent=11 // pred_region
          %495 = vsyncadd [#allocation7], 0
          %s496 = sshll.u32 %s3, 4
          %s497 = int_to_ptr.hbm [resolvable:$true] %s496
          %s498 = sshll.u32 [#allocation8], 4
          %s499 = int_to_ptr.vmem [resolvable:$true] %s498
          %504 = dma.hbm_to_vmem [thread:$0]  %s497, 10240, %s499, [#allocation7], 1280, 1280, 80
        $region24: #{epoc_forward.1} parent=11 // pred_fallthru
          _
        // Predicated region
        $region25: #{epoc_forward.1} parent=11 // pred_check
          %p505 = pneg %p158
        $region26: #{epoc_forward.1} parent=11 // pred_check_branch
          %507 = sbr.rel (%p505) target = $region28
        $region27: #{epoc_forward.1} parent=11 // pred_region
          %509 = vsyncadd [#allocation10], 0
          %s511 = sshll.u32 %s4, 4
          %s512 = int_to_ptr.hbm [resolvable:$true] %s511
          %s513 = sshll.u32 [#allocation9], 4
          %s514 = int_to_ptr.vmem [resolvable:$true] %s513
          %516 = dma.hbm_to_vmem [thread:$0]  %s512, 160, %s514, [#allocation10]
        $region28: #{epoc_forward.1} parent=11 // pred_fallthru
          _
        // Predicated region
        $region29: #{epoc_forward.1} parent=11 // pred_check
          %p517 = pneg %p179
        $region30: #{epoc_forward.1} parent=11 // pred_check_branch
          %519 = sbr.rel (%p517) target = $region32
        $region31: #{epoc_forward.1} parent=11 // pred_region
          %521 = vsyncadd [#allocation10], 0
          %s522 = sshll.u32 %s5, 4
          %s523 = int_to_ptr.hbm [resolvable:$true] %s522
          %s524 = sshll.u32 [#allocation11], 4
          %s525 = int_to_ptr.vmem [resolvable:$true] %s524
          %530 = dma.hbm_to_vmem [thread:$0]  %s523, 81920, %s525, [#allocation10], 512, 512, 32
        $region32: #{epoc_forward.1} parent=11 // pred_fallthru
          _
        // Predicated region
        $region33: #{epoc_forward.1} parent=11 // pred_check
          %p531 = pneg %p200
        $region34: #{epoc_forward.1} parent=11 // pred_check_branch
          %533 = sbr.rel (%p531) target = $region36
        $region35: #{epoc_forward.1} parent=11 // pred_region
          %535 = vsyncadd [#allocation13], 0
          %s537 = sshll.u32 %s6, 4
          %s538 = int_to_ptr.hbm [resolvable:$true] %s537
          %s539 = sshll.u32 [#allocation12], 4
          %s540 = int_to_ptr.vmem [resolvable:$true] %s539
          %542 = dma.hbm_to_vmem [thread:$0]  %s538, 64, %s540, [#allocation13]
        $region36: #{epoc_forward.1} parent=11 // pred_fallthru
          _
        // Predicated region
        $region37: #{epoc_forward.1} parent=11 // pred_check
          %p543 = pneg %p221
        $region38: #{epoc_forward.1} parent=11 // pred_check_branch
          %545 = sbr.rel (%p543) target = $region40
        $region39: #{epoc_forward.1} parent=11 // pred_region
          %547 = vsyncadd [#allocation13], 0
          %s548 = sshll.u32 %s7, 4
          %s549 = int_to_ptr.hbm [resolvable:$true] %s548
          %s550 = sshll.u32 [#allocation14], 4
          %s551 = int_to_ptr.vmem [resolvable:$true] %s550
          %556 = dma.hbm_to_vmem [thread:$0]  %s549, 16384, %s551, [#allocation13], 256, 256, 16
        $region40: #{epoc_forward.1} parent=11 // pred_fallthru
          _
        // Predicated region
        $region41: #{epoc_forward.1} parent=11 // pred_check
          %p557 = pneg %p242
        $region42: #{epoc_forward.1} parent=11 // pred_check_branch
          %559 = sbr.rel (%p557) target = $region44
        $region43: #{epoc_forward.1} parent=11 // pred_region
          %561 = vsyncadd [#allocation16], 0
          %s563 = sshll.u32 %s8, 4
          %s564 = int_to_ptr.hbm [resolvable:$true] %s563
          %s565 = sshll.u32 [#allocation15], 4
          %s566 = int_to_ptr.vmem [resolvable:$true] %s565
          %568 = dma.hbm_to_vmem [thread:$0]  %s564, 32, %s566, [#allocation16]
        $region44: #{epoc_forward.1} parent=11 // pred_fallthru
          _
        // Predicated region
        $region45: #{epoc_forward.1} parent=11 // pred_check
          %p569 = pneg %p263
        $region46: #{epoc_forward.1} parent=11 // pred_check_branch
          %571 = sbr.rel (%p569) target = $region48
        $region47: #{epoc_forward.1} parent=11 // pred_region
          %573 = vsyncadd [#allocation16], 0
          %s574 = sshll.u32 %s9, 4
          %s575 = int_to_ptr.hbm [resolvable:$true] %s574
          %s576 = sshll.u32 [#allocation17], 4
          %s577 = int_to_ptr.vmem [resolvable:$true] %s576
          %582 = dma.hbm_to_vmem [thread:$0]  %s575, 4096, %s577, [#allocation16], 128, 128, 8
        $region48: #{epoc_forward.1} parent=11 // pred_fallthru
          _
        // Predicated region
        $region49: #{epoc_forward.1} parent=11 // pred_check
          %p583 = pneg %p284
        $region50: #{epoc_forward.1} parent=11 // pred_check_branch
          %585 = sbr.rel (%p583) target = $region52
        $region51: #{epoc_forward.1} parent=11 // pred_region
          %587 = vsyncadd [#allocation19], 0
          %s589 = sshll.u32 %s10, 4
          %s590 = int_to_ptr.hbm [resolvable:$true] %s589
          %s591 = sshll.u32 [#allocation18], 4
          %s592 = int_to_ptr.vmem [resolvable:$true] %s591
          %594 = dma.hbm_to_vmem [thread:$0]  %s590, 16, %s592, [#allocation19]
        $region52: #{epoc_forward.1} parent=11 // pred_fallthru
          _
        // Predicated region
        $region53: #{epoc_forward.1} parent=11 // pred_check
          %p595 = pneg %p305
        $region54: #{epoc_forward.1} parent=11 // pred_check_branch
          %597 = sbr.rel (%p595) target = $region56
        $region55: #{epoc_forward.1} parent=11 // pred_region
          %599 = vsyncadd [#allocation19], 0
          %s600 = sshll.u32 %s11, 4
          %s601 = int_to_ptr.hbm [resolvable:$true] %s600
          %s602 = sshll.u32 [#allocation20], 4
          %s603 = int_to_ptr.vmem [resolvable:$true] %s602
          %608 = dma.hbm_to_vmem [thread:$0]  %s601, 4096, %s603, [#allocation19], 256, 256, 16
        $region56: #{epoc_forward.1} parent=11 // pred_fallthru
          _
        // Predicated region
        $region57: #{epoc_forward.1} parent=11 // pred_check
          %p609 = pneg %p326
        $region58: #{epoc_forward.1} parent=11 // pred_check_branch
          %611 = sbr.rel (%p609) target = $region60
        $region59: #{epoc_forward.1} parent=11 // pred_region
          %613 = vsyncadd [#allocation22], 0
          %s615 = sshll.u32 %s12, 4
          %s616 = int_to_ptr.hbm [resolvable:$true] %s615
          %s617 = sshll.u32 [#allocation21], 4
          %s618 = int_to_ptr.vmem [resolvable:$true] %s617
          %620 = dma.hbm_to_vmem [thread:$0]  %s616, 32, %s618, [#allocation22]
        $region60: #{epoc_forward.1} parent=11 // pred_fallthru
          _
        // Predicated region
        $region61: #{epoc_forward.1} parent=11 // pred_check
          %p621 = pneg %p347
        $region62: #{epoc_forward.1} parent=11 // pred_check_branch
          %623 = sbr.rel (%p621) target = $region64
        $region63: #{epoc_forward.1} parent=11 // pred_region
          %625 = vsyncadd [#allocation22], 0
          %s626 = sshll.u32 %s13, 4
          %s627 = int_to_ptr.hbm [resolvable:$true] %s626
          %s628 = sshll.u32 [#allocation23], 4
          %s629 = int_to_ptr.vmem [resolvable:$true] %s628
          %634 = dma.hbm_to_vmem [thread:$0]  %s627, 8192, %s629, [#allocation22], 256, 256, 16
        $region64: #{epoc_forward.1} parent=11 // pred_fallthru
          _
        // Predicated region
        $region65: #{epoc_forward.1} parent=11 // pred_check
          %p635 = pneg %p368
        $region66: #{epoc_forward.1} parent=11 // pred_check_branch
          %637 = sbr.rel (%p635) target = $region68
        $region67: #{epoc_forward.1} parent=11 // pred_region
          %639 = vsyncadd [#allocation25], 0
          %s641 = sshll.u32 %s14, 4
          %s642 = int_to_ptr.hbm [resolvable:$true] %s641
          %s643 = sshll.u32 [#allocation24], 4
          %s644 = int_to_ptr.vmem [resolvable:$true] %s643
          %646 = dma.hbm_to_vmem [thread:$0]  %s642, 32, %s644, [#allocation25]
        $region68: #{epoc_forward.1} parent=11 // pred_fallthru
          _
        // Predicated region
        $region69: #{epoc_forward.1} parent=11 // pred_check
          %p647 = pneg %p389
        $region70: #{epoc_forward.1} parent=11 // pred_check_branch
          %649 = sbr.rel (%p647) target = $region72
        $region71: #{epoc_forward.1} parent=11 // pred_region
          %651 = vsyncadd [#allocation25], 0
          %s652 = sshll.u32 %s15, 4
          %s653 = int_to_ptr.hbm [resolvable:$true] %s652
          %s654 = sshll.u32 [#allocation26], 4
          %s655 = int_to_ptr.vmem [resolvable:$true] %s654
          %660 = dma.hbm_to_vmem [thread:$0]  %s653, 4096, %s655, [#allocation25], 128, 128, 8
        $region72: #{epoc_forward.1} parent=11 // pred_fallthru
          _
        // Predicated region
        $region73: #{epoc_forward.1} parent=11 // pred_check
          %p661 = pneg %p410
        $region74: #{epoc_forward.1} parent=11 // pred_check_branch
          %663 = sbr.rel (%p661) target = $region76
        $region75: #{epoc_forward.1} parent=11 // pred_region
          %665 = vsyncadd [#allocation28], 0
          %s667 = sshll.u32 %s16, 4
          %s668 = int_to_ptr.hbm [resolvable:$true] %s667
          %s669 = sshll.u32 [#allocation27], 4
          %s670 = int_to_ptr.vmem [resolvable:$true] %s669
          %672 = dma.hbm_to_vmem [thread:$0]  %s668, 16, %s670, [#allocation28]
        $region76: #{epoc_forward.1} parent=11 // pred_fallthru
          _
      $region12: #{epoc_forward.1} parent=5 // pred_fallthru
        _
      %p673 = scmp.lt.s32.totalorder %s34, 8
      // Predicated region
      $region77: #{epoc_forward.1} parent=5 // pred_check
        %p674 = pneg %p673
      $region78: #{epoc_forward.1} parent=5 // pred_check_branch
        %676 = sbr.rel (%p674) target = $region80
      $region79: #{epoc_forward.1} parent=5 // pred_region
        // Predicated region
        $region81: #{epoc_forward.1} parent=79 // pred_check
          %p677 = pneg %p68
        $region82: #{epoc_forward.1} parent=79 // pred_check_branch
          %679 = sbr.rel (%p677) target = $region84
        $region83: #{epoc_forward.1} parent=79 // pred_region
          %p680 = scmp.lt.s32.totalorder %s41, 3
          %s681 = scalar_select %p680, %s41, 3
          %p682 = scmp.lt.s32.totalorder %s42, 1
          %s683 = scalar_select %p682, %s42, 1
          %s684 = smul.addr %s681, 2
          %s685 = sadd.s32 %s683, %s684
          %s686 = smul.addr %s685, 4
          %s687 = scalar_lea.vmem %s0, %s686
        $region84: #{epoc_forward.1} parent=79 // pred_fallthru
          _
      $region80: #{epoc_forward.1} parent=5 // pred_fallthru
        _
      %p688 = scmp.le.s32.totalorder 1, %s34
      %p689 = scmp.lt.s32.totalorder %s34, 9
      %p690 = pnand %p688, %p689
      %p691 = pneg %p690
      // Predicated region
      $region85: #{epoc_forward.1} parent=5 // pred_check
        _
      $region86: #{epoc_forward.1} parent=5 // pred_check_branch
        %693 = sbr.rel (%p690) target = $region88
      $region87: #{epoc_forward.1} parent=5 // pred_region
        %s694 = ssub.s32 %s34, 1
        // Predicated region
        $region89: #{epoc_forward.1} parent=87 // pred_check
          %p695 = pneg %p95
        $region90: #{epoc_forward.1} parent=87 // pred_check_branch
          %697 = sbr.rel (%p695) target = $region92
        $region91: #{epoc_forward.1} parent=87 // pred_region
          %699 = dma.done [#allocation5], 64
        $region92: #{epoc_forward.1} parent=87 // pred_fallthru
          _
        // Predicated region
        $region93: #{epoc_forward.1} parent=87 // pred_check
          %p700 = pneg %p116
        $region94: #{epoc_forward.1} parent=87 // pred_check_branch
          %702 = sbr.rel (%p700) target = $region96
        $region95: #{epoc_forward.1} parent=87 // pred_region
          %704 = dma.done [#allocation7], 16
        $region96: #{epoc_forward.1} parent=87 // pred_fallthru
          _
        // Predicated region
        $region97: #{epoc_forward.1} parent=87 // pred_check
          %p705 = pneg %p137
        $region98: #{epoc_forward.1} parent=87 // pred_check_branch
          %707 = sbr.rel (%p705) target = $region100
        $region99: #{epoc_forward.1} parent=87 // pred_region
          %709 = dma.done [#allocation7], 10240
        $region100: #{epoc_forward.1} parent=87 // pred_fallthru
          _
        // Predicated region
        $region101: #{epoc_forward.1} parent=87 // pred_check
          %p710 = pneg %p158
        $region102: #{epoc_forward.1} parent=87 // pred_check_branch
          %712 = sbr.rel (%p710) target = $region104
        $region103: #{epoc_forward.1} parent=87 // pred_region
          %714 = dma.done [#allocation10], 160
        $region104: #{epoc_forward.1} parent=87 // pred_fallthru
          _
        // Predicated region
        $region105: #{epoc_forward.1} parent=87 // pred_check
          %p715 = pneg %p179
        $region106: #{epoc_forward.1} parent=87 // pred_check_branch
          %717 = sbr.rel (%p715) target = $region108
        $region107: #{epoc_forward.1} parent=87 // pred_region
          %719 = dma.done [#allocation10], 81920
        $region108: #{epoc_forward.1} parent=87 // pred_fallthru
          _
        // Predicated region
        $region109: #{epoc_forward.1} parent=87 // pred_check
          %p720 = pneg %p200
        $region110: #{epoc_forward.1} parent=87 // pred_check_branch
          %722 = sbr.rel (%p720) target = $region112
        $region111: #{epoc_forward.1} parent=87 // pred_region
          %724 = dma.done [#allocation13], 64
        $region112: #{epoc_forward.1} parent=87 // pred_fallthru
          _
        // Predicated region
        $region113: #{epoc_forward.1} parent=87 // pred_check
          %p725 = pneg %p221
        $region114: #{epoc_forward.1} parent=87 // pred_check_branch
          %727 = sbr.rel (%p725) target = $region116
        $region115: #{epoc_forward.1} parent=87 // pred_region
          %729 = dma.done [#allocation13], 16384
        $region116: #{epoc_forward.1} parent=87 // pred_fallthru
          _
        // Predicated region
        $region117: #{epoc_forward.1} parent=87 // pred_check
          %p730 = pneg %p242
        $region118: #{epoc_forward.1} parent=87 // pred_check_branch
          %732 = sbr.rel (%p730) target = $region120
        $region119: #{epoc_forward.1} parent=87 // pred_region
          %734 = dma.done [#allocation16], 32
        $region120: #{epoc_forward.1} parent=87 // pred_fallthru
          _
        // Predicated region
        $region121: #{epoc_forward.1} parent=87 // pred_check
          %p735 = pneg %p263
        $region122: #{epoc_forward.1} parent=87 // pred_check_branch
          %737 = sbr.rel (%p735) target = $region124
        $region123: #{epoc_forward.1} parent=87 // pred_region
          %739 = dma.done [#allocation16], 4096
        $region124: #{epoc_forward.1} parent=87 // pred_fallthru
          _
        // Predicated region
        $region125: #{epoc_forward.1} parent=87 // pred_check
          %p740 = pneg %p284
        $region126: #{epoc_forward.1} parent=87 // pred_check_branch
          %742 = sbr.rel (%p740) target = $region128
        $region127: #{epoc_forward.1} parent=87 // pred_region
          %744 = dma.done [#allocation19], 16
        $region128: #{epoc_forward.1} parent=87 // pred_fallthru
          _
        // Predicated region
        $region129: #{epoc_forward.1} parent=87 // pred_check
          %p745 = pneg %p305
        $region130: #{epoc_forward.1} parent=87 // pred_check_branch
          %747 = sbr.rel (%p745) target = $region132
        $region131: #{epoc_forward.1} parent=87 // pred_region
          %749 = dma.done [#allocation19], 4096
        $region132: #{epoc_forward.1} parent=87 // pred_fallthru
          _
        // Predicated region
        $region133: #{epoc_forward.1} parent=87 // pred_check
          %p750 = pneg %p326
        $region134: #{epoc_forward.1} parent=87 // pred_check_branch
          %752 = sbr.rel (%p750) target = $region136
        $region135: #{epoc_forward.1} parent=87 // pred_region
          %754 = dma.done [#allocation22], 32
        $region136: #{epoc_forward.1} parent=87 // pred_fallthru
          _
        // Predicated region
        $region137: #{epoc_forward.1} parent=87 // pred_check
          %p755 = pneg %p347
        $region138: #{epoc_forward.1} parent=87 // pred_check_branch
          %757 = sbr.rel (%p755) target = $region140
        $region139: #{epoc_forward.1} parent=87 // pred_region
          %759 = dma.done [#allocation22], 8192
        $region140: #{epoc_forward.1} parent=87 // pred_fallthru
          _
        // Predicated region
        $region141: #{epoc_forward.1} parent=87 // pred_check
          %p760 = pneg %p368
        $region142: #{epoc_forward.1} parent=87 // pred_check_branch
          %762 = sbr.rel (%p760) target = $region144
        $region143: #{epoc_forward.1} parent=87 // pred_region
          %764 = dma.done [#allocation25], 32
        $region144: #{epoc_forward.1} parent=87 // pred_fallthru
          _
        // Predicated region
        $region145: #{epoc_forward.1} parent=87 // pred_check
          %p765 = pneg %p389
        $region146: #{epoc_forward.1} parent=87 // pred_check_branch
          %767 = sbr.rel (%p765) target = $region148
        $region147: #{epoc_forward.1} parent=87 // pred_region
          %769 = dma.done [#allocation25], 4096
        $region148: #{epoc_forward.1} parent=87 // pred_fallthru
          _
        // Predicated region
        $region149: #{epoc_forward.1} parent=87 // pred_check
          %p770 = pneg %p410
        $region150: #{epoc_forward.1} parent=87 // pred_check_branch
          %772 = sbr.rel (%p770) target = $region152
        $region151: #{epoc_forward.1} parent=87 // pred_region
          %774 = dma.done [#allocation28], 16
        $region152: #{epoc_forward.1} parent=87 // pred_fallthru
          _
        %p775 = scmp.lt.s32.totalorder %s43, 3
        %s776 = scalar_select %p775, %s43, 3
        %p777 = scmp.lt.s32.totalorder %s44, 1
        %s778 = scalar_select %p777, %s44, 1
        %s779 = smul.addr %s776, 2
        %s780 = sadd.s32 %s778, %s779
        %s781 = smul.addr %s780, 4
        %s782 = scalar_lea.vmem %s0, %s781
        %p783 = pneg %p74
        %p784 = pneg %p71
        %p785 = pneg %p95
        %p786 = pneg %p92
        %p787 = pneg %p116
        %p788 = pneg %p113
        %p789 = pneg %p137
        %p790 = pneg %p134
        %p791 = pneg %p158
        %p792 = pneg %p155
        %p793 = pneg %p179
        %p794 = pneg %p176
        %p795 = pneg %p200
        %p796 = pneg %p197
        %p797 = pneg %p221
        %p798 = pneg %p218
        %p799 = pneg %p242
        %p800 = pneg %p239
        %p801 = pneg %p263
        %p802 = pneg %p260
        %p803 = pneg %p284
        %p804 = pneg %p281
        %p805 = pneg %p305
        %p806 = pneg %p302
        %p807 = pneg %p326
        %p808 = pneg %p323
        %p809 = pneg %p347
        %p810 = pneg %p344
        %p811 = pneg %p368
        %p812 = pneg %p365
        %p813 = pneg %p389
        %p814 = pneg %p386
        %p815 = pneg %p410
        %p816 = pneg %p407
        %p817 = pneg %p431
        %p818 = pneg %p428
        %p819 = pneg %p452
        %p820 = pneg %p449
        %p821 = scmp.lt.s32.totalorder %s43, 3
        %s822 = scalar_select %p821, %s43, 3
        %p823 = scmp.lt.s32.totalorder %s44, 1
        %s824 = scalar_select %p823, %s44, 1
        %s825 = smul.addr %s822, 2
        %s826 = sadd.s32 %s824, %s825
        %s827 = smul.addr %s826, 4
        %s828 = scalar_lea.vmem %s0, %s827
        %p829 = scmp.eq.s32.totalorder %s43, 0
        %p830 = scmp.eq.s32.totalorder %s44, 0
        %p831 = pnand %p829, %p830
        %p832 = pneg %p831
        // Predicated region
        $region153: #{epoc_forward.1} parent=87 // pred_check
          _
        $region154: #{epoc_forward.1} parent=87 // pred_check_branch
          %834 = sbr.rel (%p831) target = $region156
        $region155: #{epoc_forward.1} parent=87 // pred_region
          %835 = vst [vmem:[#allocation3] sm:$0xff] 0.0
          %836 = vst [vmem:[#allocation3 + $0x8] sm:$0xff] 0.0
          %837 = vst [vmem:[#allocation3 + $0x10] sm:$0xff] 0.0
          %838 = vst [vmem:[#allocation3 + $0x18] sm:$0xff] 0.0
          %839 = vst [vmem:[#allocation3 + $0x20] sm:$0xff] 0.0
          %840 = vst [vmem:[#allocation3 + $0x28] sm:$0xff] 0.0
          %841 = vst [vmem:[#allocation3 + $0x30] sm:$0xff] 0.0
          %842 = vst [vmem:[#allocation3 + $0x38] sm:$0xff] 0.0
          %843 = vst [vmem:[#allocation3 + $0x40] sm:$0xff] 0.0
          %844 = vst [vmem:[#allocation3 + $0x48] sm:$0xff] 0.0
        $region156: #{epoc_forward.1} parent=87 // pred_fallthru
          _
        // Predicated region
        $region157: #{epoc_forward.1} parent=87 // pred_check
          %p845 = pneg %p830
        $region158: #{epoc_forward.1} parent=87 // pred_check_branch
          %847 = sbr.rel (%p845) target = $region160
        $region159: #{epoc_forward.1} parent=87 // pred_region
          %vm848 = vcmask 516096
          %849 = vst.msk [vmem:[#allocation2] sm:$0x1] %vm848, 0.0
        $region160: #{epoc_forward.1} parent=87 // pred_fallthru
          _
        %v850 = vld [vmem:[%s828] sm:$0x7]
        %v851 = vld [vmem:[#allocation4] sm:$0x7]
        %v852 = vld [vmem:[#allocation6] sm:$0x1]
        %v854 = vperm.slane %v852, 0
        %856 = vxpose.xlu0.b32.start [1/16] %v850, 128
        %857 = vxpose.xlu0.b32.cont [2/16] 0.0, 128
        %858 = vxpose.xlu0.b32.cont [3/16] 0.0, 128
        %859 = vxpose.xlu0.b32.cont [4/16] 0.0, 128
        %860 = vxpose.xlu0.b32.cont [5/16] 0.0, 128
        %861 = vxpose.xlu0.b32.cont [6/16] 0.0, 128
        %862 = vxpose.xlu0.b32.cont [7/16] 0.0, 128
        %863 = vxpose.xlu0.b32.cont [8/16] 0.0, 128
        %864 = vxpose.xlu0.b32.cont [9/16] 0.0, 128
        %865 = vxpose.xlu0.b32.cont [10/16] 0.0, 128
        %866 = vxpose.xlu0.b32.cont [11/16] 0.0, 128
        %867 = vxpose.xlu0.b32.cont [12/16] 0.0, 128
        %868 = vxpose.xlu0.b32.cont [13/16] 0.0, 128
        %869 = vxpose.xlu0.b32.cont [14/16] 0.0, 128
        %870 = vxpose.xlu0.b32.cont [15/16] 0.0, 128
        %871 = vxpose.xlu0.b32.end [16/16] 0.0, 128
        %v872 = vpop.trf.xlu0
        %v873 = vpop.trf.xlu0
        %v874 = vpop.trf.xlu0
        %v875 = vpop.trf.xlu0
        %v876 = vpop.trf.xlu0
        %v877 = vpop.trf.xlu0
        %v878 = vpop.trf.xlu0
        %v879 = vpop.trf.xlu0
        %v880 = vpop.trf.xlu0
        %v881 = vpop.trf.xlu0
        %v882 = vpop.trf.xlu0
        %v883 = vpop.trf.xlu0
        %v884 = vpop.trf.xlu0
        %v885 = vpop.trf.xlu0
        %v886 = vpop.trf.xlu0
        %v887 = vpop.trf.xlu0
        %vm888 = vcmask 23552
        %v890 = vsel %vm888, %v872, 0
        %v893 = vsel %vm888, %v873, 0
        %v896 = vsel %vm888, %v874, 0
        %v899 = vsel %vm888, %v875, 0
        %v902 = vsel %vm888, %v876, 0
        %v905 = vsel %vm888, %v877, 0
        %v908 = vsel %vm888, %v878, 0
        %v911 = vsel %vm888, %v879, 0
        %v914 = vsel %vm888, %v880, 0
        %v917 = vsel %vm888, %v881, 0
        %v920 = vsel %vm888, %v882, 0
        %v923 = vsel %vm888, %v883, 0
        %v926 = vsel %vm888, %v884, 0
        %v929 = vsel %vm888, %v885, 0
        %v932 = vsel %vm888, %v886, 0
        %v935 = vsel %vm888, %v887, 0
        %vm937 = vcmask 1042432
        %v939 = vsel %vm937, %v851, 0
        %941 = vmatpush.msra.mxu0 0.0
        %942 = vmatpush.msra.mxu0 0.0
        %943 = vmatpush.msra.mxu0 0.0
        %944 = vmatpush.msra.mxu0 0.0
        %945 = vmatpush.msra.mxu0 0.0
        %946 = vmatpush.msra.mxu0 0.0
        %947 = vmatpush.msra.mxu0 0.0
        %948 = vmatpush.msra.mxu0 0.0
        %949 = vmatpush.msra.mxu0 0.0
        %950 = vmatpush.msra.mxu0 0.0
        %951 = vmatpush.msra.mxu0 0.0
        %952 = vmatpush.msra.mxu0 0.0
        %953 = vmatpush.msra.mxu0 0.0
        %954 = vmatpush.msra.mxu0 0.0
        %955 = vmatpush.msra.mxu0 0.0
        %956 = vmatpush.msra.mxu0 %v939
        %957 = vmatmul.f32.gmra.mxu0 %v890
        %v958 = vpop.f32.mrf.mxu0
        %v959 = vadd.f32 %v854, %v958
        %960 = vmatmul.f32.gmra.mxu0 %v893
        %v961 = vpop.f32.mrf.mxu0
        %v962 = vadd.f32 %v854, %v961
        %963 = vmatmul.f32.gmra.mxu0 %v896
        %v964 = vpop.f32.mrf.mxu0
        %v965 = vadd.f32 %v854, %v964
        %966 = vmatmul.f32.gmra.mxu0 %v899
        %v967 = vpop.f32.mrf.mxu0
        %v968 = vadd.f32 %v854, %v967
        %969 = vmatmul.f32.gmra.mxu0 %v902
        %v970 = vpop.f32.mrf.mxu0
        %v971 = vadd.f32 %v854, %v970
        %972 = vmatmul.f32.gmra.mxu0 %v905
        %v973 = vpop.f32.mrf.mxu0
        %v974 = vadd.f32 %v854, %v973
        %975 = vmatmul.f32.gmra.mxu0 %v908
        %v976 = vpop.f32.mrf.mxu0
        %v977 = vadd.f32 %v854, %v976
        %978 = vmatmul.f32.gmra.mxu0 %v911
        %v979 = vpop.f32.mrf.mxu0
        %v980 = vadd.f32 %v854, %v979
        %981 = vmatmul.f32.gmra.mxu0 %v914
        %v982 = vpop.f32.mrf.mxu0
        %v983 = vadd.f32 %v854, %v982
        %984 = vmatmul.f32.gmra.mxu0 %v917
        %v985 = vpop.f32.mrf.mxu0
        %v986 = vadd.f32 %v854, %v985
        %987 = vmatmul.f32.gmra.mxu0 %v920
        %v988 = vpop.f32.mrf.mxu0
        %v989 = vadd.f32 %v854, %v988
        %990 = vmatmul.f32.gmra.mxu0 %v923
        %v991 = vpop.f32.mrf.mxu0
        %v992 = vadd.f32 %v854, %v991
        %993 = vmatmul.f32.gmra.mxu0 %v926
        %v994 = vpop.f32.mrf.mxu0
        %v995 = vadd.f32 %v854, %v994
        %996 = vmatmul.f32.gmra.mxu0 %v929
        %v997 = vpop.f32.mrf.mxu0
        %v998 = vadd.f32 %v854, %v997
        %999 = vmatmul.f32.gmra.mxu0 %v932
        %v1000 = vpop.f32.mrf.mxu0
        %v1001 = vadd.f32 %v854, %v1000
        %1002 = vmatmul.f32.gmra.mxu0 %v935
        %v1003 = vpop.f32.mrf.mxu0
        %v1004 = vadd.f32 %v854, %v1003
        %1005 = vdwg.mxu0
        %v1006 = vxor.u32 %v959, 2147483648
        %v1007 = vxor.u32 %v962, 2147483648
        %v1008 = vxor.u32 %v965, 2147483648
        %v1009 = vxor.u32 %v968, 2147483648
        %v1010 = vxor.u32 %v971, 2147483648
        %v1011 = vxor.u32 %v974, 2147483648
        %v1012 = vxor.u32 %v977, 2147483648
        %v1013 = vxor.u32 %v980, 2147483648
        %v1014 = vxor.u32 %v983, 2147483648
        %v1015 = vxor.u32 %v986, 2147483648
        %v1016 = vxor.u32 %v989, 2147483648
        %v1017 = vxor.u32 %v992, 2147483648
        %v1018 = vxor.u32 %v995, 2147483648
        %v1019 = vxor.u32 %v998, 2147483648
        %v1020 = vxor.u32 %v1001, 2147483648
        %v1021 = vxor.u32 %v1004, 2147483648
        %v1022 = vmul.f32 %v1006, 1.442695
        %v1023 = vpow.pop %v1022
        %v1024 = vmul.f32 %v1007, 1.442695
        %v1025 = vpow.pop %v1024
        %v1026 = vmul.f32 %v1008, 1.442695
        %v1027 = vpow.pop %v1026
        %v1028 = vmul.f32 %v1009, 1.442695
        %v1029 = vpow.pop %v1028
        %v1030 = vmul.f32 %v1010, 1.442695
        %v1031 = vpow.pop %v1030
        %v1032 = vmul.f32 %v1011, 1.442695
        %v1033 = vpow.pop %v1032
        %v1034 = vmul.f32 %v1012, 1.442695
        %v1035 = vpow.pop %v1034
        %v1036 = vmul.f32 %v1013, 1.442695
        %v1037 = vpow.pop %v1036
        %v1038 = vmul.f32 %v1014, 1.442695
        %v1039 = vpow.pop %v1038
        %v1040 = vmul.f32 %v1015, 1.442695
        %v1041 = vpow.pop %v1040
        %v1042 = vmul.f32 %v1016, 1.442695
        %v1043 = vpow.pop %v1042
        %v1044 = vmul.f32 %v1017, 1.442695
        %v1045 = vpow.pop %v1044
        %v1046 = vmul.f32 %v1018, 1.442695
        %v1047 = vpow.pop %v1046
        %v1048 = vmul.f32 %v1019, 1.442695
        %v1049 = vpow.pop %v1048
        %v1050 = vmul.f32 %v1020, 1.442695
        %v1051 = vpow.pop %v1050
        %v1052 = vmul.f32 %v1021, 1.442695
        %v1053 = vpow.pop %v1052
        %v1054 = vadd.f32 %v1023, 1.0
        %v1055 = vadd.f32 %v1025, 1.0
        %v1056 = vadd.f32 %v1027, 1.0
        %v1057 = vadd.f32 %v1029, 1.0
        %v1058 = vadd.f32 %v1031, 1.0
        %v1059 = vadd.f32 %v1033, 1.0
        %v1060 = vadd.f32 %v1035, 1.0
        %v1061 = vadd.f32 %v1037, 1.0
        %v1062 = vadd.f32 %v1039, 1.0
        %v1063 = vadd.f32 %v1041, 1.0
        %v1064 = vadd.f32 %v1043, 1.0
        %v1065 = vadd.f32 %v1045, 1.0
        %v1066 = vadd.f32 %v1047, 1.0
        %v1067 = vadd.f32 %v1049, 1.0
        %v1068 = vadd.f32 %v1051, 1.0
        %v1069 = vadd.f32 %v1053, 1.0
        %v1070 = vrcp.pop %v1054
        %v1071 = vmul.f32 %v1054, %v1070
        %v1072 = vsub.f32 1.0, %v1071
        %v1073 = vmul.f32 %v1070, %v1072
        %v1074 = vadd.f32 %v1070, %v1073
        %vm1075 = vweird.f32 %v1054
        %vm1076 = vweird.f32 %v1070
        %vm1077 = vmor %vm1075, %vm1076
        %v1078 = vsel %vm1077, %v1070, %v1074
        %v1079 = vand.u32 2147483647, %v1054
        %vm1080 = vcmp.eq.f32.partialorder %v1079, 8.507059e+37
        %v1081 = vand.u32 %v1054, 2147483648
        %v1082 = vor.u32 1.1754944e-38, %v1081
        %v1083 = vsel %vm1080, %v1082, %v1078
        %v1084 = vmul.f32 1.0, %v1083
        %v1085 = vrcp.pop %v1055
        %v1086 = vmul.f32 %v1055, %v1085
        %v1087 = vsub.f32 1.0, %v1086
        %v1088 = vmul.f32 %v1085, %v1087
        %v1089 = vadd.f32 %v1085, %v1088
        %vm1090 = vweird.f32 %v1055
        %vm1091 = vweird.f32 %v1085
        %vm1092 = vmor %vm1090, %vm1091
        %v1093 = vsel %vm1092, %v1085, %v1089
        %v1094 = vand.u32 2147483647, %v1055
        %vm1095 = vcmp.eq.f32.partialorder %v1094, 8.507059e+37
        %v1096 = vand.u32 %v1055, 2147483648
        %v1097 = vor.u32 1.1754944e-38, %v1096
        %v1098 = vsel %vm1095, %v1097, %v1093
        %v1099 = vmul.f32 1.0, %v1098
        %v1100 = vrcp.pop %v1056
        %v1101 = vmul.f32 %v1056, %v1100
        %v1102 = vsub.f32 1.0, %v1101
        %v1103 = vmul.f32 %v1100, %v1102
        %v1104 = vadd.f32 %v1100, %v1103
        %vm1105 = vweird.f32 %v1056
        %vm1106 = vweird.f32 %v1100
        %vm1107 = vmor %vm1105, %vm1106
        %v1108 = vsel %vm1107, %v1100, %v1104
        %v1109 = vand.u32 2147483647, %v1056
        %vm1110 = vcmp.eq.f32.partialorder %v1109, 8.507059e+37
        %v1111 = vand.u32 %v1056, 2147483648
        %v1112 = vor.u32 1.1754944e-38, %v1111
        %v1113 = vsel %vm1110, %v1112, %v1108
        %v1114 = vmul.f32 1.0, %v1113
        %v1115 = vrcp.pop %v1057
        %v1116 = vmul.f32 %v1057, %v1115
        %v1117 = vsub.f32 1.0, %v1116
        %v1118 = vmul.f32 %v1115, %v1117
        %v1119 = vadd.f32 %v1115, %v1118
        %vm1120 = vweird.f32 %v1057
        %vm1121 = vweird.f32 %v1115
        %vm1122 = vmor %vm1120, %vm1121
        %v1123 = vsel %vm1122, %v1115, %v1119
        %v1124 = vand.u32 2147483647, %v1057
        %vm1125 = vcmp.eq.f32.partialorder %v1124, 8.507059e+37
        %v1126 = vand.u32 %v1057, 2147483648
        %v1127 = vor.u32 1.1754944e-38, %v1126
        %v1128 = vsel %vm1125, %v1127, %v1123
        %v1129 = vmul.f32 1.0, %v1128
        %v1130 = vrcp.pop %v1058
        %v1131 = vmul.f32 %v1058, %v1130
        %v1132 = vsub.f32 1.0, %v1131
        %v1133 = vmul.f32 %v1130, %v1132
        %v1134 = vadd.f32 %v1130, %v1133
        %vm1135 = vweird.f32 %v1058
        %vm1136 = vweird.f32 %v1130
        %vm1137 = vmor %vm1135, %vm1136
        %v1138 = vsel %vm1137, %v1130, %v1134
        %v1139 = vand.u32 2147483647, %v1058
        %vm1140 = vcmp.eq.f32.partialorder %v1139, 8.507059e+37
        %v1141 = vand.u32 %v1058, 2147483648
        %v1142 = vor.u32 1.1754944e-38, %v1141
        %v1143 = vsel %vm1140, %v1142, %v1138
        %v1144 = vmul.f32 1.0, %v1143
        %v1145 = vrcp.pop %v1059
        %v1146 = vmul.f32 %v1059, %v1145
        %v1147 = vsub.f32 1.0, %v1146
        %v1148 = vmul.f32 %v1145, %v1147
        %v1149 = vadd.f32 %v1145, %v1148
        %vm1150 = vweird.f32 %v1059
        %vm1151 = vweird.f32 %v1145
        %vm1152 = vmor %vm1150, %vm1151
        %v1153 = vsel %vm1152, %v1145, %v1149
        %v1154 = vand.u32 2147483647, %v1059
        %vm1155 = vcmp.eq.f32.partialorder %v1154, 8.507059e+37
        %v1156 = vand.u32 %v1059, 2147483648
        %v1157 = vor.u32 1.1754944e-38, %v1156
        %v1158 = vsel %vm1155, %v1157, %v1153
        %v1159 = vmul.f32 1.0, %v1158
        %v1160 = vrcp.pop %v1060
        %v1161 = vmul.f32 %v1060, %v1160
        %v1162 = vsub.f32 1.0, %v1161
        %v1163 = vmul.f32 %v1160, %v1162
        %v1164 = vadd.f32 %v1160, %v1163
        %vm1165 = vweird.f32 %v1060
        %vm1166 = vweird.f32 %v1160
        %vm1167 = vmor %vm1165, %vm1166
        %v1168 = vsel %vm1167, %v1160, %v1164
        %v1169 = vand.u32 2147483647, %v1060
        %vm1170 = vcmp.eq.f32.partialorder %v1169, 8.507059e+37
        %v1171 = vand.u32 %v1060, 2147483648
        %v1172 = vor.u32 1.1754944e-38, %v1171
        %v1173 = vsel %vm1170, %v1172, %v1168
        %v1174 = vmul.f32 1.0, %v1173
        %v1175 = vrcp.pop %v1061
        %v1176 = vmul.f32 %v1061, %v1175
        %v1177 = vsub.f32 1.0, %v1176
        %v1178 = vmul.f32 %v1175, %v1177
        %v1179 = vadd.f32 %v1175, %v1178
        %vm1180 = vweird.f32 %v1061
        %vm1181 = vweird.f32 %v1175
        %vm1182 = vmor %vm1180, %vm1181
        %v1183 = vsel %vm1182, %v1175, %v1179
        %v1184 = vand.u32 2147483647, %v1061
        %vm1185 = vcmp.eq.f32.partialorder %v1184, 8.507059e+37
        %v1186 = vand.u32 %v1061, 2147483648
        %v1187 = vor.u32 1.1754944e-38, %v1186
        %v1188 = vsel %vm1185, %v1187, %v1183
        %v1189 = vmul.f32 1.0, %v1188
        %v1190 = vrcp.pop %v1062
        %v1191 = vmul.f32 %v1062, %v1190
        %v1192 = vsub.f32 1.0, %v1191
        %v1193 = vmul.f32 %v1190, %v1192
        %v1194 = vadd.f32 %v1190, %v1193
        %vm1195 = vweird.f32 %v1062
        %vm1196 = vweird.f32 %v1190
        %vm1197 = vmor %vm1195, %vm1196
        %v1198 = vsel %vm1197, %v1190, %v1194
        %v1199 = vand.u32 2147483647, %v1062
        %vm1200 = vcmp.eq.f32.partialorder %v1199, 8.507059e+37
        %v1201 = vand.u32 %v1062, 2147483648
        %v1202 = vor.u32 1.1754944e-38, %v1201
        %v1203 = vsel %vm1200, %v1202, %v1198
        %v1204 = vmul.f32 1.0, %v1203
        %v1205 = vrcp.pop %v1063
        %v1206 = vmul.f32 %v1063, %v1205
        %v1207 = vsub.f32 1.0, %v1206
        %v1208 = vmul.f32 %v1205, %v1207
        %v1209 = vadd.f32 %v1205, %v1208
        %vm1210 = vweird.f32 %v1063
        %vm1211 = vweird.f32 %v1205
        %vm1212 = vmor %vm1210, %vm1211
        %v1213 = vsel %vm1212, %v1205, %v1209
        %v1214 = vand.u32 2147483647, %v1063
        %vm1215 = vcmp.eq.f32.partialorder %v1214, 8.507059e+37
        %v1216 = vand.u32 %v1063, 2147483648
        %v1217 = vor.u32 1.1754944e-38, %v1216
        %v1218 = vsel %vm1215, %v1217, %v1213
        %v1219 = vmul.f32 1.0, %v1218
        %v1220 = vrcp.pop %v1064
        %v1221 = vmul.f32 %v1064, %v1220
        %v1222 = vsub.f32 1.0, %v1221
        %v1223 = vmul.f32 %v1220, %v1222
        %v1224 = vadd.f32 %v1220, %v1223
        %vm1225 = vweird.f32 %v1064
        %vm1226 = vweird.f32 %v1220
        %vm1227 = vmor %vm1225, %vm1226
        %v1228 = vsel %vm1227, %v1220, %v1224
        %v1229 = vand.u32 2147483647, %v1064
        %vm1230 = vcmp.eq.f32.partialorder %v1229, 8.507059e+37
        %v1231 = vand.u32 %v1064, 2147483648
        %v1232 = vor.u32 1.1754944e-38, %v1231
        %v1233 = vsel %vm1230, %v1232, %v1228
        %v1234 = vmul.f32 1.0, %v1233
        %v1235 = vrcp.pop %v1065
        %v1236 = vmul.f32 %v1065, %v1235
        %v1237 = vsub.f32 1.0, %v1236
        %v1238 = vmul.f32 %v1235, %v1237
        %v1239 = vadd.f32 %v1235, %v1238
        %vm1240 = vweird.f32 %v1065
        %vm1241 = vweird.f32 %v1235
        %vm1242 = vmor %vm1240, %vm1241
        %v1243 = vsel %vm1242, %v1235, %v1239
        %v1244 = vand.u32 2147483647, %v1065
        %vm1245 = vcmp.eq.f32.partialorder %v1244, 8.507059e+37
        %v1246 = vand.u32 %v1065, 2147483648
        %v1247 = vor.u32 1.1754944e-38, %v1246
        %v1248 = vsel %vm1245, %v1247, %v1243
        %v1249 = vmul.f32 1.0, %v1248
        %v1250 = vrcp.pop %v1066
        %v1251 = vmul.f32 %v1066, %v1250
        %v1252 = vsub.f32 1.0, %v1251
        %v1253 = vmul.f32 %v1250, %v1252
        %v1254 = vadd.f32 %v1250, %v1253
        %vm1255 = vweird.f32 %v1066
        %vm1256 = vweird.f32 %v1250
        %vm1257 = vmor %vm1255, %vm1256
        %v1258 = vsel %vm1257, %v1250, %v1254
        %v1259 = vand.u32 2147483647, %v1066
        %vm1260 = vcmp.eq.f32.partialorder %v1259, 8.507059e+37
        %v1261 = vand.u32 %v1066, 2147483648
        %v1262 = vor.u32 1.1754944e-38, %v1261
        %v1263 = vsel %vm1260, %v1262, %v1258
        %v1264 = vmul.f32 1.0, %v1263
        %v1265 = vrcp.pop %v1067
        %v1266 = vmul.f32 %v1067, %v1265
        %v1267 = vsub.f32 1.0, %v1266
        %v1268 = vmul.f32 %v1265, %v1267
        %v1269 = vadd.f32 %v1265, %v1268
        %vm1270 = vweird.f32 %v1067
        %vm1271 = vweird.f32 %v1265
        %vm1272 = vmor %vm1270, %vm1271
        %v1273 = vsel %vm1272, %v1265, %v1269
        %v1274 = vand.u32 2147483647, %v1067
        %vm1275 = vcmp.eq.f32.partialorder %v1274, 8.507059e+37
        %v1276 = vand.u32 %v1067, 2147483648
        %v1277 = vor.u32 1.1754944e-38, %v1276
        %v1278 = vsel %vm1275, %v1277, %v1273
        %v1279 = vmul.f32 1.0, %v1278
        %v1280 = vrcp.pop %v1068
        %v1281 = vmul.f32 %v1068, %v1280
        %v1282 = vsub.f32 1.0, %v1281
        %v1283 = vmul.f32 %v1280, %v1282
        %v1284 = vadd.f32 %v1280, %v1283
        %vm1285 = vweird.f32 %v1068
        %vm1286 = vweird.f32 %v1280
        %vm1287 = vmor %vm1285, %vm1286
        %v1288 = vsel %vm1287, %v1280, %v1284
        %v1289 = vand.u32 2147483647, %v1068
        %vm1290 = vcmp.eq.f32.partialorder %v1289, 8.507059e+37
        %v1291 = vand.u32 %v1068, 2147483648
        %v1292 = vor.u32 1.1754944e-38, %v1291
        %v1293 = vsel %vm1290, %v1292, %v1288
        %v1294 = vmul.f32 1.0, %v1293
        %v1295 = vrcp.pop %v1069
        %v1296 = vmul.f32 %v1069, %v1295
        %v1297 = vsub.f32 1.0, %v1296
        %v1298 = vmul.f32 %v1295, %v1297
        %v1299 = vadd.f32 %v1295, %v1298
        %vm1300 = vweird.f32 %v1069
        %vm1301 = vweird.f32 %v1295
        %vm1302 = vmor %vm1300, %vm1301
        %v1303 = vsel %vm1302, %v1295, %v1299
        %v1304 = vand.u32 2147483647, %v1069
        %vm1305 = vcmp.eq.f32.partialorder %v1304, 8.507059e+37
        %v1306 = vand.u32 %v1069, 2147483648
        %v1307 = vor.u32 1.1754944e-38, %v1306
        %v1308 = vsel %vm1305, %v1307, %v1303
        %v1309 = vmul.f32 1.0, %v1308
        %v1310 = vmul.f32 %v959, %v1084
        %v1311 = vmul.f32 %v962, %v1099
        %v1312 = vmul.f32 %v965, %v1114
        %v1313 = vmul.f32 %v968, %v1129
        %v1314 = vmul.f32 %v971, %v1144
        %v1315 = vmul.f32 %v974, %v1159
        %v1316 = vmul.f32 %v977, %v1174
        %v1317 = vmul.f32 %v980, %v1189
        %v1318 = vmul.f32 %v983, %v1204
        %v1319 = vmul.f32 %v986, %v1219
        %v1320 = vmul.f32 %v989, %v1234
        %v1321 = vmul.f32 %v992, %v1249
        %v1322 = vmul.f32 %v995, %v1264
        %v1323 = vmul.f32 %v998, %v1279
        %v1324 = vmul.f32 %v1001, %v1294
        %v1325 = vmul.f32 %v1004, %v1309
        %v1326 = vld [vmem:[#allocation2] sm:$0x1]
        %vm1327 = vcmask 523264
        %v1328 = vsel %vm1327, %v1310, 0.0
        %v1329 = vsel %vm1327, %v1311, 0.0
        %v1330 = vadd.f32 %v1328, %v1329
        %v1331 = vsel %vm1327, %v1312, 0.0
        %v1332 = vadd.f32 %v1330, %v1331
        %v1333 = vsel %vm1327, %v1313, 0.0
        %v1334 = vadd.f32 %v1332, %v1333
        %v1335 = vsel %vm1327, %v1314, 0.0
        %v1336 = vadd.f32 %v1334, %v1335
        %v1337 = vsel %vm1327, %v1315, 0.0
        %v1338 = vadd.f32 %v1336, %v1337
        %v1339 = vsel %vm1327, %v1316, 0.0
        %v1340 = vadd.f32 %v1338, %v1339
        %v1341 = vsel %vm1327, %v1317, 0.0
        %v1342 = vadd.f32 %v1340, %v1341
        %v1343 = vsel %vm1327, %v1318, 0.0
        %v1344 = vadd.f32 %v1342, %v1343
        %v1345 = vsel %vm1327, %v1319, 0.0
        %v1346 = vadd.f32 %v1344, %v1345
        %v1347 = vsel %vm1327, %v1320, 0.0
        %v1348 = vadd.f32 %v1346, %v1347
        %v1349 = vsel %vm1327, %v1321, 0.0
        %v1350 = vadd.f32 %v1348, %v1349
        %v1351 = vsel %vm1327, %v1322, 0.0
        %v1352 = vadd.f32 %v1350, %v1351
        %v1353 = vsel %vm1327, %v1323, 0.0
        %v1354 = vadd.f32 %v1352, %v1353
        %v1355 = vsel %vm1327, %v1324, 0.0
        %v1356 = vadd.f32 %v1354, %v1355
        %v1357 = vsel %vm1327, %v1325, 0.0
        %v1358 = vadd.f32 %v1356, %v1357
        %v1359 = vrot.slane %v1358, 4
        %v1360 = vadd.f32 %v1358, %v1359
        %v1361 = vrot.slane %v1360, 2
        %v1362 = vadd.f32 %v1360, %v1361
        %v1363 = vrot.slane %v1362, 1
        %v1364 = vadd.f32 %v1362, %v1363
        %v1365 = vadd.f32 %v1326, %v1364
        %vm1366 = vcmask 516096
        %1367 = vst.msk [vmem:[#allocation2] sm:$0x1] %vm1366, %v1365
        %p1368 = scmp.eq.s32.totalorder %s44, 1
        // Predicated region
        $region161: #{epoc_forward.1} parent=87 // pred_check
          %p1369 = pneg %p1368
        $region162: #{epoc_forward.1} parent=87 // pred_check_branch
          %1371 = sbr.rel (%p1369) target = $region164
        $region163: #{epoc_forward.1} parent=87 // pred_region
          %v1372 = vld [vmem:[#allocation2] sm:$0x1]
          %v1373 = vmul.f32 %v1372, 0.00390625
          %v1374 = vld [vmem:[#allocation8] sm:$0xff]
          %v1375 = vld [vmem:[#allocation8 + $0x8] sm:$0xff]
          %v1376 = vld [vmem:[#allocation8 + $0x10] sm:$0xff]
          %v1377 = vld [vmem:[#allocation8 + $0x18] sm:$0xff]
          %v1378 = vld [vmem:[#allocation8 + $0x20] sm:$0xff]
          %v1379 = vld [vmem:[#allocation8 + $0x28] sm:$0xff]
          %v1380 = vld [vmem:[#allocation8 + $0x30] sm:$0xff]
          %v1381 = vld [vmem:[#allocation8 + $0x38] sm:$0xff]
          %v1382 = vld [vmem:[#allocation8 + $0x40] sm:$0xff]
          %v1383 = vld [vmem:[#allocation8 + $0x48] sm:$0xff]
          %v1384 = vld [vmem:[#allocation8 + $0x50] sm:$0xff]
          %v1385 = vld [vmem:[#allocation8 + $0x58] sm:$0xff]
          %v1386 = vld [vmem:[#allocation8 + $0x60] sm:$0xff]
          %v1387 = vld [vmem:[#allocation8 + $0x68] sm:$0xff]
          %v1388 = vld [vmem:[#allocation8 + $0x70] sm:$0xff]
          %v1389 = vld [vmem:[#allocation8 + $0x78] sm:$0xff]
          %v1390 = vld [vmem:[#allocation8 + $0x80] sm:$0xff]
          %v1391 = vld [vmem:[#allocation8 + $0x88] sm:$0xff]
          %v1392 = vld [vmem:[#allocation8 + $0x90] sm:$0xff]
          %v1393 = vld [vmem:[#allocation8 + $0x98] sm:$0xff]
          %v1394 = vld [vmem:[#allocation8 + $0xa0] sm:$0xff]
          %v1395 = vld [vmem:[#allocation8 + $0xa8] sm:$0xff]
          %v1396 = vld [vmem:[#allocation8 + $0xb0] sm:$0xff]
          %v1397 = vld [vmem:[#allocation8 + $0xb8] sm:$0xff]
          %v1398 = vld [vmem:[#allocation8 + $0xc0] sm:$0xff]
          %v1399 = vld [vmem:[#allocation8 + $0xc8] sm:$0xff]
          %v1400 = vld [vmem:[#allocation8 + $0xd0] sm:$0xff]
          %v1401 = vld [vmem:[#allocation8 + $0xd8] sm:$0xff]
          %v1402 = vld [vmem:[#allocation8 + $0xe0] sm:$0xff]
          %v1403 = vld [vmem:[#allocation8 + $0xe8] sm:$0xff]
          %v1404 = vld [vmem:[#allocation8 + $0xf0] sm:$0xff]
          %v1405 = vld [vmem:[#allocation8 + $0xf8] sm:$0xff]
          %v1406 = vld [vmem:[#allocation8 + $0x100] sm:$0xff]
          %v1407 = vld [vmem:[#allocation8 + $0x108] sm:$0xff]
          %v1408 = vld [vmem:[#allocation8 + $0x110] sm:$0xff]
          %v1409 = vld [vmem:[#allocation8 + $0x118] sm:$0xff]
          %v1410 = vld [vmem:[#allocation8 + $0x120] sm:$0xff]
          %v1411 = vld [vmem:[#allocation8 + $0x128] sm:$0xff]
          %v1412 = vld [vmem:[#allocation8 + $0x130] sm:$0xff]
          %v1413 = vld [vmem:[#allocation8 + $0x138] sm:$0xff]
          %v1414 = vld [vmem:[#allocation8 + $0x140] sm:$0xff]
          %v1415 = vld [vmem:[#allocation8 + $0x148] sm:$0xff]
          %v1416 = vld [vmem:[#allocation8 + $0x150] sm:$0xff]
          %v1417 = vld [vmem:[#allocation8 + $0x158] sm:$0xff]
          %v1418 = vld [vmem:[#allocation8 + $0x160] sm:$0xff]
          %v1419 = vld [vmem:[#allocation8 + $0x168] sm:$0xff]
          %v1420 = vld [vmem:[#allocation8 + $0x170] sm:$0xff]
          %v1421 = vld [vmem:[#allocation8 + $0x178] sm:$0xff]
          %v1422 = vld [vmem:[#allocation8 + $0x180] sm:$0xff]
          %v1423 = vld [vmem:[#allocation8 + $0x188] sm:$0xff]
          %v1424 = vld [vmem:[#allocation8 + $0x190] sm:$0xff]
          %v1425 = vld [vmem:[#allocation8 + $0x198] sm:$0xff]
          %v1426 = vld [vmem:[#allocation8 + $0x1a0] sm:$0xff]
          %v1427 = vld [vmem:[#allocation8 + $0x1a8] sm:$0xff]
          %v1428 = vld [vmem:[#allocation8 + $0x1b0] sm:$0xff]
          %v1429 = vld [vmem:[#allocation8 + $0x1b8] sm:$0xff]
          %v1430 = vld [vmem:[#allocation8 + $0x1c0] sm:$0xff]
          %v1431 = vld [vmem:[#allocation8 + $0x1c8] sm:$0xff]
          %v1432 = vld [vmem:[#allocation8 + $0x1d0] sm:$0xff]
          %v1433 = vld [vmem:[#allocation8 + $0x1d8] sm:$0xff]
          %v1434 = vld [vmem:[#allocation8 + $0x1e0] sm:$0xff]
          %v1435 = vld [vmem:[#allocation8 + $0x1e8] sm:$0xff]
          %v1436 = vld [vmem:[#allocation8 + $0x1f0] sm:$0xff]
          %v1437 = vld [vmem:[#allocation8 + $0x1f8] sm:$0xff]
          %v1438 = vld [vmem:[#allocation8 + $0x200] sm:$0xff]
          %v1439 = vld [vmem:[#allocation8 + $0x208] sm:$0xff]
          %v1440 = vld [vmem:[#allocation8 + $0x210] sm:$0xff]
          %v1441 = vld [vmem:[#allocation8 + $0x218] sm:$0xff]
          %v1442 = vld [vmem:[#allocation8 + $0x220] sm:$0xff]
          %v1443 = vld [vmem:[#allocation8 + $0x228] sm:$0xff]
          %v1444 = vld [vmem:[#allocation8 + $0x230] sm:$0xff]
          %v1445 = vld [vmem:[#allocation8 + $0x238] sm:$0xff]
          %v1446 = vld [vmem:[#allocation8 + $0x240] sm:$0xff]
          %v1447 = vld [vmem:[#allocation8 + $0x248] sm:$0xff]
          %v1448 = vld [vmem:[#allocation8 + $0x250] sm:$0xff]
          %v1449 = vld [vmem:[#allocation8 + $0x258] sm:$0xff]
          %v1450 = vld [vmem:[#allocation8 + $0x260] sm:$0xff]
          %v1451 = vld [vmem:[#allocation8 + $0x268] sm:$0xff]
          %v1452 = vld [vmem:[#allocation8 + $0x270] sm:$0xff]
          %v1453 = vld [vmem:[#allocation8 + $0x278] sm:$0xff]
          %v1454 = vld [vmem:[#allocation9] sm:$0xff]
          %v1455 = vld [vmem:[#allocation9 + $0x8] sm:$0x3]
          %v1458 = vperm.slane %v1454, 0
          %v1459 = vperm.slane %v1454, 1
          %v1460 = vperm.slane %v1454, 2
          %v1461 = vperm.slane %v1454, 3
          %v1462 = vperm.slane %v1454, 4
          %v1463 = vperm.slane %v1454, 5
          %v1464 = vperm.slane %v1454, 6
          %v1465 = vperm.slane %v1454, 7
          %v1466 = vperm.slane %v1455, 0
          %v1467 = vperm.slane %v1455, 1
          %v1479 = vsel %vm1327, %v1373, 0
          %1481 = vmatpush.msra.mxu0 0.0
          %1482 = vmatpush.msra.mxu0 0.0
          %1483 = vmatpush.msra.mxu0 0.0
          %1484 = vmatpush.msra.mxu0 0.0
          %1485 = vmatpush.msra.mxu0 0.0
          %1486 = vmatpush.msra.mxu0 0.0
          %1487 = vmatpush.msra.mxu0 0.0
          %1488 = vmatpush.msra.mxu0 0.0
          %1489 = vmatpush.msra.mxu0 %v1444
          %1490 = vmatpush.msra.mxu0 %v1434
          %1491 = vmatpush.msra.mxu0 %v1424
          %1492 = vmatpush.msra.mxu0 %v1414
          %1493 = vmatpush.msra.mxu0 %v1404
          %1494 = vmatpush.msra.mxu0 %v1394
          %1495 = vmatpush.msra.mxu0 %v1384
          %1496 = vmatpush.msra.mxu0 %v1374
          %1497 = vmatmul.f32.gmra.mxu0 %v1479
          %v1498 = vpop.f32.mrf.mxu0
          %v1499 = vadd.f32 %v1458, %v1498
          %1500 = vdwg.mxu0
          %1501 = vmatpush.msra.mxu0 0.0
          %1502 = vmatpush.msra.mxu0 0.0
          %1503 = vmatpush.msra.mxu0 0.0
          %1504 = vmatpush.msra.mxu0 0.0
          %1505 = vmatpush.msra.mxu0 0.0
          %1506 = vmatpush.msra.mxu0 0.0
          %1507 = vmatpush.msra.mxu0 0.0
          %1508 = vmatpush.msra.mxu0 0.0
          %1509 = vmatpush.msra.mxu0 %v1445
          %1510 = vmatpush.msra.mxu0 %v1435
          %1511 = vmatpush.msra.mxu0 %v1425
          %1512 = vmatpush.msra.mxu0 %v1415
          %1513 = vmatpush.msra.mxu0 %v1405
          %1514 = vmatpush.msra.mxu0 %v1395
          %1515 = vmatpush.msra.mxu0 %v1385
          %1516 = vmatpush.msra.mxu0 %v1375
          %1517 = vmatmul.f32.gmra.mxu0 %v1479
          %v1518 = vpop.f32.mrf.mxu0
          %v1519 = vadd.f32 %v1459, %v1518
          %1520 = vdwg.mxu0
          %1521 = vmatpush.msra.mxu0 0.0
          %1522 = vmatpush.msra.mxu0 0.0
          %1523 = vmatpush.msra.mxu0 0.0
          %1524 = vmatpush.msra.mxu0 0.0
          %1525 = vmatpush.msra.mxu0 0.0
          %1526 = vmatpush.msra.mxu0 0.0
          %1527 = vmatpush.msra.mxu0 0.0
          %1528 = vmatpush.msra.mxu0 0.0
          %1529 = vmatpush.msra.mxu0 %v1446
          %1530 = vmatpush.msra.mxu0 %v1436
          %1531 = vmatpush.msra.mxu0 %v1426
          %1532 = vmatpush.msra.mxu0 %v1416
          %1533 = vmatpush.msra.mxu0 %v1406
          %1534 = vmatpush.msra.mxu0 %v1396
          %1535 = vmatpush.msra.mxu0 %v1386
          %1536 = vmatpush.msra.mxu0 %v1376
          %1537 = vmatmul.f32.gmra.mxu0 %v1479
          %v1538 = vpop.f32.mrf.mxu0
          %v1539 = vadd.f32 %v1460, %v1538
          %1540 = vdwg.mxu0
          %1541 = vmatpush.msra.mxu0 0.0
          %1542 = vmatpush.msra.mxu0 0.0
          %1543 = vmatpush.msra.mxu0 0.0
          %1544 = vmatpush.msra.mxu0 0.0
          %1545 = vmatpush.msra.mxu0 0.0
          %1546 = vmatpush.msra.mxu0 0.0
          %1547 = vmatpush.msra.mxu0 0.0
          %1548 = vmatpush.msra.mxu0 0.0
          %1549 = vmatpush.msra.mxu0 %v1447
          %1550 = vmatpush.msra.mxu0 %v1437
          %1551 = vmatpush.msra.mxu0 %v1427
          %1552 = vmatpush.msra.mxu0 %v1417
          %1553 = vmatpush.msra.mxu0 %v1407
          %1554 = vmatpush.msra.mxu0 %v1397
          %1555 = vmatpush.msra.mxu0 %v1387
          %1556 = vmatpush.msra.mxu0 %v1377
          %1557 = vmatmul.f32.gmra.mxu0 %v1479
          %v1558 = vpop.f32.mrf.mxu0
          %v1559 = vadd.f32 %v1461, %v1558
          %1560 = vdwg.mxu0
          %1561 = vmatpush.msra.mxu0 0.0
          %1562 = vmatpush.msra.mxu0 0.0
          %1563 = vmatpush.msra.mxu0 0.0
          %1564 = vmatpush.msra.mxu0 0.0
          %1565 = vmatpush.msra.mxu0 0.0
          %1566 = vmatpush.msra.mxu0 0.0
          %1567 = vmatpush.msra.mxu0 0.0
          %1568 = vmatpush.msra.mxu0 0.0
          %1569 = vmatpush.msra.mxu0 %v1448
          %1570 = vmatpush.msra.mxu0 %v1438
          %1571 = vmatpush.msra.mxu0 %v1428
          %1572 = vmatpush.msra.mxu0 %v1418
          %1573 = vmatpush.msra.mxu0 %v1408
          %1574 = vmatpush.msra.mxu0 %v1398
          %1575 = vmatpush.msra.mxu0 %v1388
          %1576 = vmatpush.msra.mxu0 %v1378
          %1577 = vmatmul.f32.gmra.mxu0 %v1479
          %v1578 = vpop.f32.mrf.mxu0
          %v1579 = vadd.f32 %v1462, %v1578
          %1580 = vdwg.mxu0
          %1581 = vmatpush.msra.mxu0 0.0
          %1582 = vmatpush.msra.mxu0 0.0
          %1583 = vmatpush.msra.mxu0 0.0
          %1584 = vmatpush.msra.mxu0 0.0
          %1585 = vmatpush.msra.mxu0 0.0
          %1586 = vmatpush.msra.mxu0 0.0
          %1587 = vmatpush.msra.mxu0 0.0
          %1588 = vmatpush.msra.mxu0 0.0
          %1589 = vmatpush.msra.mxu0 %v1449
          %1590 = vmatpush.msra.mxu0 %v1439
          %1591 = vmatpush.msra.mxu0 %v1429
          %1592 = vmatpush.msra.mxu0 %v1419
          %1593 = vmatpush.msra.mxu0 %v1409
          %1594 = vmatpush.msra.mxu0 %v1399
          %1595 = vmatpush.msra.mxu0 %v1389
          %1596 = vmatpush.msra.mxu0 %v1379
          %1597 = vmatmul.f32.gmra.mxu0 %v1479
          %v1598 = vpop.f32.mrf.mxu0
          %v1599 = vadd.f32 %v1463, %v1598
          %1600 = vdwg.mxu0
          %1601 = vmatpush.msra.mxu0 0.0
          %1602 = vmatpush.msra.mxu0 0.0
          %1603 = vmatpush.msra.mxu0 0.0
          %1604 = vmatpush.msra.mxu0 0.0
          %1605 = vmatpush.msra.mxu0 0.0
          %1606 = vmatpush.msra.mxu0 0.0
          %1607 = vmatpush.msra.mxu0 0.0
          %1608 = vmatpush.msra.mxu0 0.0
          %1609 = vmatpush.msra.mxu0 %v1450
          %1610 = vmatpush.msra.mxu0 %v1440
          %1611 = vmatpush.msra.mxu0 %v1430
          %1612 = vmatpush.msra.mxu0 %v1420
          %1613 = vmatpush.msra.mxu0 %v1410
          %1614 = vmatpush.msra.mxu0 %v1400
          %1615 = vmatpush.msra.mxu0 %v1390
          %1616 = vmatpush.msra.mxu0 %v1380
          %1617 = vmatmul.f32.gmra.mxu0 %v1479
          %v1618 = vpop.f32.mrf.mxu0
          %v1619 = vadd.f32 %v1464, %v1618
          %1620 = vdwg.mxu0
          %1621 = vmatpush.msra.mxu0 0.0
          %1622 = vmatpush.msra.mxu0 0.0
          %1623 = vmatpush.msra.mxu0 0.0
          %1624 = vmatpush.msra.mxu0 0.0
          %1625 = vmatpush.msra.mxu0 0.0
          %1626 = vmatpush.msra.mxu0 0.0
          %1627 = vmatpush.msra.mxu0 0.0
          %1628 = vmatpush.msra.mxu0 0.0
          %1629 = vmatpush.msra.mxu0 %v1451
          %1630 = vmatpush.msra.mxu0 %v1441
          %1631 = vmatpush.msra.mxu0 %v1431
          %1632 = vmatpush.msra.mxu0 %v1421
          %1633 = vmatpush.msra.mxu0 %v1411
          %1634 = vmatpush.msra.mxu0 %v1401
          %1635 = vmatpush.msra.mxu0 %v1391
          %1636 = vmatpush.msra.mxu0 %v1381
          %1637 = vmatmul.f32.gmra.mxu0 %v1479
          %v1638 = vpop.f32.mrf.mxu0
          %v1639 = vadd.f32 %v1465, %v1638
          %1640 = vdwg.mxu0
          %1641 = vmatpush.msra.mxu0 0.0
          %1642 = vmatpush.msra.mxu0 0.0
          %1643 = vmatpush.msra.mxu0 0.0
          %1644 = vmatpush.msra.mxu0 0.0
          %1645 = vmatpush.msra.mxu0 0.0
          %1646 = vmatpush.msra.mxu0 0.0
          %1647 = vmatpush.msra.mxu0 0.0
          %1648 = vmatpush.msra.mxu0 0.0
          %1649 = vmatpush.msra.mxu0 %v1452
          %1650 = vmatpush.msra.mxu0 %v1442
          %1651 = vmatpush.msra.mxu0 %v1432
          %1652 = vmatpush.msra.mxu0 %v1422
          %1653 = vmatpush.msra.mxu0 %v1412
          %1654 = vmatpush.msra.mxu0 %v1402
          %1655 = vmatpush.msra.mxu0 %v1392
          %1656 = vmatpush.msra.mxu0 %v1382
          %1657 = vmatmul.f32.gmra.mxu0 %v1479
          %v1658 = vpop.f32.mrf.mxu0
          %v1659 = vadd.f32 %v1466, %v1658
          %1660 = vdwg.mxu0
          %1661 = vmatpush.msra.mxu0 0.0
          %1662 = vmatpush.msra.mxu0 0.0
          %1663 = vmatpush.msra.mxu0 0.0
          %1664 = vmatpush.msra.mxu0 0.0
          %1665 = vmatpush.msra.mxu0 0.0
          %1666 = vmatpush.msra.mxu0 0.0
          %1667 = vmatpush.msra.mxu0 0.0
          %1668 = vmatpush.msra.mxu0 0.0
          %1669 = vmatpush.msra.mxu0 %v1453
          %1670 = vmatpush.msra.mxu0 %v1443
          %1671 = vmatpush.msra.mxu0 %v1433
          %1672 = vmatpush.msra.mxu0 %v1423
          %1673 = vmatpush.msra.mxu0 %v1413
          %1674 = vmatpush.msra.mxu0 %v1403
          %1675 = vmatpush.msra.mxu0 %v1393
          %1676 = vmatpush.msra.mxu0 %v1383
          %1677 = vmatmul.f32.gmra.mxu0 %v1479
          %v1678 = vpop.f32.mrf.mxu0
          %v1679 = vadd.f32 %v1467, %v1678
          %1680 = vdwg.mxu0
          %v1691 = vrot.slane %v1519, 7
          %v1692 = vrot.slane %v1539, 6
          %v1693 = vrot.slane %v1559, 5
          %v1694 = vrot.slane %v1579, 4
          %v1695 = vrot.slane %v1599, 3
          %v1696 = vrot.slane %v1619, 2
          %v1697 = vrot.slane %v1639, 1
          %v1698 = vrot.slane %v1679, 7
          %vm1699 = vcmask 1040384
          %v1700 = vsel %vm1699, %v1499, %v1691
          %vm1701 = vcmask 1042434
          %v1702 = vsel %vm1701, %v1692, %v1693
          %vm1703 = vcmask 1041408
          %v1704 = vsel %vm1703, %v1700, %v1702
          %vm1705 = vcmask 1044484
          %v1706 = vsel %vm1705, %v1694, %v1695
          %vm1707 = vcmask 1046534
          %v1708 = vsel %vm1707, %v1696, %v1697
          %vm1709 = vcmask 1045508
          %v1710 = vsel %vm1709, %v1706, %v1708
          %vm1711 = vcmask 1043456
          %v1712 = vsel %vm1711, %v1704, %v1710
          %v1713 = vsel %vm1699, %v1659, %v1698
          %s1716 = sshra.s32 %s43, 3
          %s1717 = sand.u32 %s43, 7
          %s1718 = sshra.s32 %s43, 3
          %s1719 = sand.u32 %s43, 7
          %s1720 = smul.u32 %s1716, 10
          %s1721 = smul.u32 %s1720, 8
          %s1722 = sadd.s32 %s1721, %s1719
          %s1723 = scalar_lea.vmem [#allocation3], %s1722
          %1724 = vst [vmem:[%s1723] ss:$8 sm:$0xf] %v1712
          %1725 = vst [vmem:[%s1723] ss:$8 sm:$0xf0] %v1712
          %v1726 = vlaneseq
          %vm1727 = vcmp.ge.s32.totalorder %v1726, 0
          %vm1728 = vcmp.lt.s32.totalorder %v1726, 256
          %vm1729 = vmand %vm1727, %vm1728
          %s1730 = sadd.s32 %s1720, 8
          %s1731 = smul.u32 %s1730, 8
          %s1732 = sadd.s32 %s1731, %s1719
          %s1733 = scalar_lea.vmem [#allocation3], %s1732
          %1734 = vst.msk [vmem:[%s1733] ss:$8 sm:$0x3] %vm1729, %v1713
          %1735 = vst.msk [vmem:[%s1733] ss:$8 sm:$0x0] %vm1729, %v1713
        $region164: #{epoc_forward.1} parent=87 // pred_fallthru
          _
        %p1736 = scmp.eq.s32.totalorder %s43, 3
        %p1737 = pnand %p1736, %p1368
        %p1738 = pneg %p1737
        // Predicated region
        $region165: #{epoc_forward.1} parent=87 // pred_check
          _
        $region166: #{epoc_forward.1} parent=87 // pred_check_branch
          %1740 = sbr.rel (%p1737) target = $region168
        $region167: #{epoc_forward.1} parent=87 // pred_region
          %v1741 = vld [vmem:[#allocation3] sm:$0xff]
          %v1742 = vld [vmem:[#allocation3 + $0x8] sm:$0xff]
          %v1743 = vld [vmem:[#allocation3 + $0x10] sm:$0xff]
          %v1744 = vld [vmem:[#allocation3 + $0x18] sm:$0xff]
          %v1745 = vld [vmem:[#allocation3 + $0x20] sm:$0xff]
          %v1746 = vld [vmem:[#allocation3 + $0x28] sm:$0xff]
          %v1747 = vld [vmem:[#allocation3 + $0x30] sm:$0xff]
          %v1748 = vld [vmem:[#allocation3 + $0x38] sm:$0xff]
          %v1749 = vld [vmem:[#allocation3 + $0x40] sm:$0xff]
          %v1750 = vld [vmem:[#allocation3 + $0x48] sm:$0xff]
          %v1751 = vld [vmem:[#allocation11] sm:$0xff]
          %v1752 = vld [vmem:[#allocation11 + $0x8] sm:$0xff]
          %v1753 = vld [vmem:[#allocation11 + $0x10] sm:$0xff]
          %v1754 = vld [vmem:[#allocation11 + $0x18] sm:$0xff]
          %v1755 = vld [vmem:[#allocation11 + $0x20] sm:$0xff]
          %v1756 = vld [vmem:[#allocation11 + $0x28] sm:$0xff]
          %v1757 = vld [vmem:[#allocation11 + $0x30] sm:$0xff]
          %v1758 = vld [vmem:[#allocation11 + $0x38] sm:$0xff]
          %v1759 = vld [vmem:[#allocation11 + $0x40] sm:$0xff]
          %v1760 = vld [vmem:[#allocation11 + $0x48] sm:$0xff]
          %v1761 = vld [vmem:[#allocation11 + $0x50] sm:$0xff]
          %v1762 = vld [vmem:[#allocation11 + $0x58] sm:$0xff]
          %v1763 = vld [vmem:[#allocation11 + $0x60] sm:$0xff]
          %v1764 = vld [vmem:[#allocation11 + $0x68] sm:$0xff]
          %v1765 = vld [vmem:[#allocation11 + $0x70] sm:$0xff]
          %v1766 = vld [vmem:[#allocation11 + $0x78] sm:$0xff]
          %v1767 = vld [vmem:[#allocation11 + $0x80] sm:$0xff]
          %v1768 = vld [vmem:[#allocation11 + $0x88] sm:$0xff]
          %v1769 = vld [vmem:[#allocation11 + $0x90] sm:$0xff]
          %v1770 = vld [vmem:[#allocation11 + $0x98] sm:$0xff]
          %v1771 = vld [vmem:[#allocation11 + $0xa0] sm:$0xff]
          %v1772 = vld [vmem:[#allocation11 + $0xa8] sm:$0xff]
          %v1773 = vld [vmem:[#allocation11 + $0xb0] sm:$0xff]
          %v1774 = vld [vmem:[#allocation11 + $0xb8] sm:$0xff]
          %v1775 = vld [vmem:[#allocation11 + $0xc0] sm:$0xff]
          %v1776 = vld [vmem:[#allocation11 + $0xc8] sm:$0xff]
          %v1777 = vld [vmem:[#allocation11 + $0xd0] sm:$0xff]
          %v1778 = vld [vmem:[#allocation11 + $0xd8] sm:$0xff]
          %v1779 = vld [vmem:[#allocation11 + $0xe0] sm:$0xff]
          %v1780 = vld [vmem:[#allocation11 + $0xe8] sm:$0xff]
          %v1781 = vld [vmem:[#allocation11 + $0xf0] sm:$0xff]
          %v1782 = vld [vmem:[#allocation11 + $0xf8] sm:$0xff]
          %v1783 = vld [vmem:[#allocation11 + $0x100] sm:$0xff]
          %v1784 = vld [vmem:[#allocation11 + $0x108] sm:$0xff]
          %v1785 = vld [vmem:[#allocation11 + $0x110] sm:$0xff]
          %v1786 = vld [vmem:[#allocation11 + $0x118] sm:$0xff]
          %v1787 = vld [vmem:[#allocation11 + $0x120] sm:$0xff]
          %v1788 = vld [vmem:[#allocation11 + $0x128] sm:$0xff]
          %v1789 = vld [vmem:[#allocation11 + $0x130] sm:$0xff]
          %v1790 = vld [vmem:[#allocation11 + $0x138] sm:$0xff]
          %v1791 = vld [vmem:[#allocation11 + $0x140] sm:$0xff]
          %v1792 = vld [vmem:[#allocation11 + $0x148] sm:$0xff]
          %v1793 = vld [vmem:[#allocation11 + $0x150] sm:$0xff]
          %v1794 = vld [vmem:[#allocation11 + $0x158] sm:$0xff]
          %v1795 = vld [vmem:[#allocation11 + $0x160] sm:$0xff]
          %v1796 = vld [vmem:[#allocation11 + $0x168] sm:$0xff]
          %v1797 = vld [vmem:[#allocation11 + $0x170] sm:$0xff]
          %v1798 = vld [vmem:[#allocation11 + $0x178] sm:$0xff]
          %v1799 = vld [vmem:[#allocation11 + $0x180] sm:$0xff]
          %v1800 = vld [vmem:[#allocation11 + $0x188] sm:$0xff]
          %v1801 = vld [vmem:[#allocation11 + $0x190] sm:$0xff]
          %v1802 = vld [vmem:[#allocation11 + $0x198] sm:$0xff]
          %v1803 = vld [vmem:[#allocation11 + $0x1a0] sm:$0xff]
          %v1804 = vld [vmem:[#allocation11 + $0x1a8] sm:$0xff]
          %v1805 = vld [vmem:[#allocation11 + $0x1b0] sm:$0xff]
          %v1806 = vld [vmem:[#allocation11 + $0x1b8] sm:$0xff]
          %v1807 = vld [vmem:[#allocation11 + $0x1c0] sm:$0xff]
          %v1808 = vld [vmem:[#allocation11 + $0x1c8] sm:$0xff]
          %v1809 = vld [vmem:[#allocation11 + $0x1d0] sm:$0xff]
          %v1810 = vld [vmem:[#allocation11 + $0x1d8] sm:$0xff]
          %v1811 = vld [vmem:[#allocation11 + $0x1e0] sm:$0xff]
          %v1812 = vld [vmem:[#allocation11 + $0x1e8] sm:$0xff]
          %v1813 = vld [vmem:[#allocation11 + $0x1f0] sm:$0xff]
          %v1814 = vld [vmem:[#allocation11 + $0x1f8] sm:$0xff]
          %v1815 = vld [vmem:[#allocation11 + $0x200] sm:$0xff]
          %v1816 = vld [vmem:[#allocation11 + $0x208] sm:$0xff]
          %v1817 = vld [vmem:[#allocation11 + $0x210] sm:$0xff]
          %v1818 = vld [vmem:[#allocation11 + $0x218] sm:$0xff]
          %v1819 = vld [vmem:[#allocation11 + $0x220] sm:$0xff]
          %v1820 = vld [vmem:[#allocation11 + $0x228] sm:$0xff]
          %v1821 = vld [vmem:[#allocation11 + $0x230] sm:$0xff]
          %v1822 = vld [vmem:[#allocation11 + $0x238] sm:$0xff]
          %v1823 = vld [vmem:[#allocation11 + $0x240] sm:$0xff]
          %v1824 = vld [vmem:[#allocation11 + $0x248] sm:$0xff]
          %v1825 = vld [vmem:[#allocation11 + $0x250] sm:$0xff]
          %v1826 = vld [vmem:[#allocation11 + $0x258] sm:$0xff]
          %v1827 = vld [vmem:[#allocation11 + $0x260] sm:$0xff]
          %v1828 = vld [vmem:[#allocation11 + $0x268] sm:$0xff]
          %v1829 = vld [vmem:[#allocation11 + $0x270] sm:$0xff]
          %v1830 = vld [vmem:[#allocation11 + $0x278] sm:$0xff]
          %v1831 = vld [vmem:[#allocation11 + $0x280] sm:$0xff]
          %v1832 = vld [vmem:[#allocation11 + $0x288] sm:$0xff]
          %v1833 = vld [vmem:[#allocation11 + $0x290] sm:$0xff]
          %v1834 = vld [vmem:[#allocation11 + $0x298] sm:$0xff]
          %v1835 = vld [vmem:[#allocation11 + $0x2a0] sm:$0xff]
          %v1836 = vld [vmem:[#allocation11 + $0x2a8] sm:$0xff]
          %v1837 = vld [vmem:[#allocation11 + $0x2b0] sm:$0xff]
          %v1838 = vld [vmem:[#allocation11 + $0x2b8] sm:$0xff]
          %v1839 = vld [vmem:[#allocation11 + $0x2c0] sm:$0xff]
          %v1840 = vld [vmem:[#allocation11 + $0x2c8] sm:$0xff]
          %v1841 = vld [vmem:[#allocation11 + $0x2d0] sm:$0xff]
          %v1842 = vld [vmem:[#allocation11 + $0x2d8] sm:$0xff]
          %v1843 = vld [vmem:[#allocation11 + $0x2e0] sm:$0xff]
          %v1844 = vld [vmem:[#allocation11 + $0x2e8] sm:$0xff]
          %v1845 = vld [vmem:[#allocation11 + $0x2f0] sm:$0xff]
          %v1846 = vld [vmem:[#allocation11 + $0x2f8] sm:$0xff]
          %v1847 = vld [vmem:[#allocation11 + $0x300] sm:$0xff]
          %v1848 = vld [vmem:[#allocation11 + $0x308] sm:$0xff]
          %v1849 = vld [vmem:[#allocation11 + $0x310] sm:$0xff]
          %v1850 = vld [vmem:[#allocation11 + $0x318] sm:$0xff]
          %v1851 = vld [vmem:[#allocation11 + $0x320] sm:$0xff]
          %v1852 = vld [vmem:[#allocation11 + $0x328] sm:$0xff]
          %v1853 = vld [vmem:[#allocation11 + $0x330] sm:$0xff]
          %v1854 = vld [vmem:[#allocation11 + $0x338] sm:$0xff]
          %v1855 = vld [vmem:[#allocation11 + $0x340] sm:$0xff]
          %v1856 = vld [vmem:[#allocation11 + $0x348] sm:$0xff]
          %v1857 = vld [vmem:[#allocation11 + $0x350] sm:$0xff]
          %v1858 = vld [vmem:[#allocation11 + $0x358] sm:$0xff]
          %v1859 = vld [vmem:[#allocation11 + $0x360] sm:$0xff]
          %v1860 = vld [vmem:[#allocation11 + $0x368] sm:$0xff]
          %v1861 = vld [vmem:[#allocation11 + $0x370] sm:$0xff]
          %v1862 = vld [vmem:[#allocation11 + $0x378] sm:$0xff]
          %v1863 = vld [vmem:[#allocation11 + $0x380] sm:$0xff]
          %v1864 = vld [vmem:[#allocation11 + $0x388] sm:$0xff]
          %v1865 = vld [vmem:[#allocation11 + $0x390] sm:$0xff]
          %v1866 = vld [vmem:[#allocation11 + $0x398] sm:$0xff]
          %v1867 = vld [vmem:[#allocation11 + $0x3a0] sm:$0xff]
          %v1868 = vld [vmem:[#allocation11 + $0x3a8] sm:$0xff]
          %v1869 = vld [vmem:[#allocation11 + $0x3b0] sm:$0xff]
          %v1870 = vld [vmem:[#allocation11 + $0x3b8] sm:$0xff]
          %v1871 = vld [vmem:[#allocation11 + $0x3c0] sm:$0xff]
          %v1872 = vld [vmem:[#allocation11 + $0x3c8] sm:$0xff]
          %v1873 = vld [vmem:[#allocation11 + $0x3d0] sm:$0xff]
          %v1874 = vld [vmem:[#allocation11 + $0x3d8] sm:$0xff]
          %v1875 = vld [vmem:[#allocation11 + $0x3e0] sm:$0xff]
          %v1876 = vld [vmem:[#allocation11 + $0x3e8] sm:$0xff]
          %v1877 = vld [vmem:[#allocation11 + $0x3f0] sm:$0xff]
          %v1878 = vld [vmem:[#allocation11 + $0x3f8] sm:$0xff]
          %v1879 = vld [vmem:[#allocation11 + $0x400] sm:$0xff]
          %v1880 = vld [vmem:[#allocation11 + $0x408] sm:$0xff]
          %v1881 = vld [vmem:[#allocation11 + $0x410] sm:$0xff]
          %v1882 = vld [vmem:[#allocation11 + $0x418] sm:$0xff]
          %v1883 = vld [vmem:[#allocation11 + $0x420] sm:$0xff]
          %v1884 = vld [vmem:[#allocation11 + $0x428] sm:$0xff]
          %v1885 = vld [vmem:[#allocation11 + $0x430] sm:$0xff]
          %v1886 = vld [vmem:[#allocation11 + $0x438] sm:$0xff]
          %v1887 = vld [vmem:[#allocation11 + $0x440] sm:$0xff]
          %v1888 = vld [vmem:[#allocation11 + $0x448] sm:$0xff]
          %v1889 = vld [vmem:[#allocation11 + $0x450] sm:$0xff]
          %v1890 = vld [vmem:[#allocation11 + $0x458] sm:$0xff]
          %v1891 = vld [vmem:[#allocation11 + $0x460] sm:$0xff]
          %v1892 = vld [vmem:[#allocation11 + $0x468] sm:$0xff]
          %v1893 = vld [vmem:[#allocation11 + $0x470] sm:$0xff]
          %v1894 = vld [vmem:[#allocation11 + $0x478] sm:$0xff]
          %v1895 = vld [vmem:[#allocation11 + $0x480] sm:$0xff]
          %v1896 = vld [vmem:[#allocation11 + $0x488] sm:$0xff]
          %v1897 = vld [vmem:[#allocation11 + $0x490] sm:$0xff]
          %v1898 = vld [vmem:[#allocation11 + $0x498] sm:$0xff]
          %v1899 = vld [vmem:[#allocation11 + $0x4a0] sm:$0xff]
          %v1900 = vld [vmem:[#allocation11 + $0x4a8] sm:$0xff]
          %v1901 = vld [vmem:[#allocation11 + $0x4b0] sm:$0xff]
          %v1902 = vld [vmem:[#allocation11 + $0x4b8] sm:$0xff]
          %v1903 = vld [vmem:[#allocation11 + $0x4c0] sm:$0xff]
          %v1904 = vld [vmem:[#allocation11 + $0x4c8] sm:$0xff]
          %v1905 = vld [vmem:[#allocation11 + $0x4d0] sm:$0xff]
          %v1906 = vld [vmem:[#allocation11 + $0x4d8] sm:$0xff]
          %v1907 = vld [vmem:[#allocation11 + $0x4e0] sm:$0xff]
          %v1908 = vld [vmem:[#allocation11 + $0x4e8] sm:$0xff]
          %v1909 = vld [vmem:[#allocation11 + $0x4f0] sm:$0xff]
          %v1910 = vld [vmem:[#allocation11 + $0x4f8] sm:$0xff]
          %v1911 = vld [vmem:[#allocation11 + $0x500] sm:$0xff]
          %v1912 = vld [vmem:[#allocation11 + $0x508] sm:$0xff]
          %v1913 = vld [vmem:[#allocation11 + $0x510] sm:$0xff]
          %v1914 = vld [vmem:[#allocation11 + $0x518] sm:$0xff]
          %v1915 = vld [vmem:[#allocation11 + $0x520] sm:$0xff]
          %v1916 = vld [vmem:[#allocation11 + $0x528] sm:$0xff]
          %v1917 = vld [vmem:[#allocation11 + $0x530] sm:$0xff]
          %v1918 = vld [vmem:[#allocation11 + $0x538] sm:$0xff]
          %v1919 = vld [vmem:[#allocation11 + $0x540] sm:$0xff]
          %v1920 = vld [vmem:[#allocation11 + $0x548] sm:$0xff]
          %v1921 = vld [vmem:[#allocation11 + $0x550] sm:$0xff]
          %v1922 = vld [vmem:[#allocation11 + $0x558] sm:$0xff]
          %v1923 = vld [vmem:[#allocation11 + $0x560] sm:$0xff]
          %v1924 = vld [vmem:[#allocation11 + $0x568] sm:$0xff]
          %v1925 = vld [vmem:[#allocation11 + $0x570] sm:$0xff]
          %v1926 = vld [vmem:[#allocation11 + $0x578] sm:$0xff]
          %v1927 = vld [vmem:[#allocation11 + $0x580] sm:$0xff]
          %v1928 = vld [vmem:[#allocation11 + $0x588] sm:$0xff]
          %v1929 = vld [vmem:[#allocation11 + $0x590] sm:$0xff]
          %v1930 = vld [vmem:[#allocation11 + $0x598] sm:$0xff]
          %v1931 = vld [vmem:[#allocation11 + $0x5a0] sm:$0xff]
          %v1932 = vld [vmem:[#allocation11 + $0x5a8] sm:$0xff]
          %v1933 = vld [vmem:[#allocation11 + $0x5b0] sm:$0xff]
          %v1934 = vld [vmem:[#allocation11 + $0x5b8] sm:$0xff]
          %v1935 = vld [vmem:[#allocation11 + $0x5c0] sm:$0xff]
          %v1936 = vld [vmem:[#allocation11 + $0x5c8] sm:$0xff]
          %v1937 = vld [vmem:[#allocation11 + $0x5d0] sm:$0xff]
          %v1938 = vld [vmem:[#allocation11 + $0x5d8] sm:$0xff]
          %v1939 = vld [vmem:[#allocation11 + $0x5e0] sm:$0xff]
          %v1940 = vld [vmem:[#allocation11 + $0x5e8] sm:$0xff]
          %v1941 = vld [vmem:[#allocation11 + $0x5f0] sm:$0xff]
          %v1942 = vld [vmem:[#allocation11 + $0x5f8] sm:$0xff]
          %v1943 = vld [vmem:[#allocation11 + $0x600] sm:$0xff]
          %v1944 = vld [vmem:[#allocation11 + $0x608] sm:$0xff]
          %v1945 = vld [vmem:[#allocation11 + $0x610] sm:$0xff]
          %v1946 = vld [vmem:[#allocation11 + $0x618] sm:$0xff]
          %v1947 = vld [vmem:[#allocation11 + $0x620] sm:$0xff]
          %v1948 = vld [vmem:[#allocation11 + $0x628] sm:$0xff]
          %v1949 = vld [vmem:[#allocation11 + $0x630] sm:$0xff]
          %v1950 = vld [vmem:[#allocation11 + $0x638] sm:$0xff]
          %v1951 = vld [vmem:[#allocation11 + $0x640] sm:$0xff]
          %v1952 = vld [vmem:[#allocation11 + $0x648] sm:$0xff]
          %v1953 = vld [vmem:[#allocation11 + $0x650] sm:$0xff]
          %v1954 = vld [vmem:[#allocation11 + $0x658] sm:$0xff]
          %v1955 = vld [vmem:[#allocation11 + $0x660] sm:$0xff]
          %v1956 = vld [vmem:[#allocation11 + $0x668] sm:$0xff]
          %v1957 = vld [vmem:[#allocation11 + $0x670] sm:$0xff]
          %v1958 = vld [vmem:[#allocation11 + $0x678] sm:$0xff]
          %v1959 = vld [vmem:[#allocation11 + $0x680] sm:$0xff]
          %v1960 = vld [vmem:[#allocation11 + $0x688] sm:$0xff]
          %v1961 = vld [vmem:[#allocation11 + $0x690] sm:$0xff]
          %v1962 = vld [vmem:[#allocation11 + $0x698] sm:$0xff]
          %v1963 = vld [vmem:[#allocation11 + $0x6a0] sm:$0xff]
          %v1964 = vld [vmem:[#allocation11 + $0x6a8] sm:$0xff]
          %v1965 = vld [vmem:[#allocation11 + $0x6b0] sm:$0xff]
          %v1966 = vld [vmem:[#allocation11 + $0x6b8] sm:$0xff]
          %v1967 = vld [vmem:[#allocation11 + $0x6c0] sm:$0xff]
          %v1968 = vld [vmem:[#allocation11 + $0x6c8] sm:$0xff]
          %v1969 = vld [vmem:[#allocation11 + $0x6d0] sm:$0xff]
          %v1970 = vld [vmem:[#allocation11 + $0x6d8] sm:$0xff]
          %v1971 = vld [vmem:[#allocation11 + $0x6e0] sm:$0xff]
          %v1972 = vld [vmem:[#allocation11 + $0x6e8] sm:$0xff]
          %v1973 = vld [vmem:[#allocation11 + $0x6f0] sm:$0xff]
          %v1974 = vld [vmem:[#allocation11 + $0x6f8] sm:$0xff]
          %v1975 = vld [vmem:[#allocation11 + $0x700] sm:$0xff]
          %v1976 = vld [vmem:[#allocation11 + $0x708] sm:$0xff]
          %v1977 = vld [vmem:[#allocation11 + $0x710] sm:$0xff]
          %v1978 = vld [vmem:[#allocation11 + $0x718] sm:$0xff]
          %v1979 = vld [vmem:[#allocation11 + $0x720] sm:$0xff]
          %v1980 = vld [vmem:[#allocation11 + $0x728] sm:$0xff]
          %v1981 = vld [vmem:[#allocation11 + $0x730] sm:$0xff]
          %v1982 = vld [vmem:[#allocation11 + $0x738] sm:$0xff]
          %v1983 = vld [vmem:[#allocation11 + $0x740] sm:$0xff]
          %v1984 = vld [vmem:[#allocation11 + $0x748] sm:$0xff]
          %v1985 = vld [vmem:[#allocation11 + $0x750] sm:$0xff]
          %v1986 = vld [vmem:[#allocation11 + $0x758] sm:$0xff]
          %v1987 = vld [vmem:[#allocation11 + $0x760] sm:$0xff]
          %v1988 = vld [vmem:[#allocation11 + $0x768] sm:$0xff]
          %v1989 = vld [vmem:[#allocation11 + $0x770] sm:$0xff]
          %v1990 = vld [vmem:[#allocation11 + $0x778] sm:$0xff]
          %v1991 = vld [vmem:[#allocation11 + $0x780] sm:$0xff]
          %v1992 = vld [vmem:[#allocation11 + $0x788] sm:$0xff]
          %v1993 = vld [vmem:[#allocation11 + $0x790] sm:$0xff]
          %v1994 = vld [vmem:[#allocation11 + $0x798] sm:$0xff]
          %v1995 = vld [vmem:[#allocation11 + $0x7a0] sm:$0xff]
          %v1996 = vld [vmem:[#allocation11 + $0x7a8] sm:$0xff]
          %v1997 = vld [vmem:[#allocation11 + $0x7b0] sm:$0xff]
          %v1998 = vld [vmem:[#allocation11 + $0x7b8] sm:$0xff]
          %v1999 = vld [vmem:[#allocation11 + $0x7c0] sm:$0xff]
          %v2000 = vld [vmem:[#allocation11 + $0x7c8] sm:$0xff]
          %v2001 = vld [vmem:[#allocation11 + $0x7d0] sm:$0xff]
          %v2002 = vld [vmem:[#allocation11 + $0x7d8] sm:$0xff]
          %v2003 = vld [vmem:[#allocation11 + $0x7e0] sm:$0xff]
          %v2004 = vld [vmem:[#allocation11 + $0x7e8] sm:$0xff]
          %v2005 = vld [vmem:[#allocation11 + $0x7f0] sm:$0xff]
          %v2006 = vld [vmem:[#allocation11 + $0x7f8] sm:$0xff]
          %v2007 = vld [vmem:[#allocation11 + $0x800] sm:$0xff]
          %v2008 = vld [vmem:[#allocation11 + $0x808] sm:$0xff]
          %v2009 = vld [vmem:[#allocation11 + $0x810] sm:$0xff]
          %v2010 = vld [vmem:[#allocation11 + $0x818] sm:$0xff]
          %v2011 = vld [vmem:[#allocation11 + $0x820] sm:$0xff]
          %v2012 = vld [vmem:[#allocation11 + $0x828] sm:$0xff]
          %v2013 = vld [vmem:[#allocation11 + $0x830] sm:$0xff]
          %v2014 = vld [vmem:[#allocation11 + $0x838] sm:$0xff]
          %v2015 = vld [vmem:[#allocation11 + $0x840] sm:$0xff]
          %v2016 = vld [vmem:[#allocation11 + $0x848] sm:$0xff]
          %v2017 = vld [vmem:[#allocation11 + $0x850] sm:$0xff]
          %v2018 = vld [vmem:[#allocation11 + $0x858] sm:$0xff]
          %v2019 = vld [vmem:[#allocation11 + $0x860] sm:$0xff]
          %v2020 = vld [vmem:[#allocation11 + $0x868] sm:$0xff]
          %v2021 = vld [vmem:[#allocation11 + $0x870] sm:$0xff]
          %v2022 = vld [vmem:[#allocation11 + $0x878] sm:$0xff]
          %v2023 = vld [vmem:[#allocation11 + $0x880] sm:$0xff]
          %v2024 = vld [vmem:[#allocation11 + $0x888] sm:$0xff]
          %v2025 = vld [vmem:[#allocation11 + $0x890] sm:$0xff]
          %v2026 = vld [vmem:[#allocation11 + $0x898] sm:$0xff]
          %v2027 = vld [vmem:[#allocation11 + $0x8a0] sm:$0xff]
          %v2028 = vld [vmem:[#allocation11 + $0x8a8] sm:$0xff]
          %v2029 = vld [vmem:[#allocation11 + $0x8b0] sm:$0xff]
          %v2030 = vld [vmem:[#allocation11 + $0x8b8] sm:$0xff]
          %v2031 = vld [vmem:[#allocation11 + $0x8c0] sm:$0xff]
          %v2032 = vld [vmem:[#allocation11 + $0x8c8] sm:$0xff]
          %v2033 = vld [vmem:[#allocation11 + $0x8d0] sm:$0xff]
          %v2034 = vld [vmem:[#allocation11 + $0x8d8] sm:$0xff]
          %v2035 = vld [vmem:[#allocation11 + $0x8e0] sm:$0xff]
          %v2036 = vld [vmem:[#allocation11 + $0x8e8] sm:$0xff]
          %v2037 = vld [vmem:[#allocation11 + $0x8f0] sm:$0xff]
          %v2038 = vld [vmem:[#allocation11 + $0x8f8] sm:$0xff]
          %v2039 = vld [vmem:[#allocation11 + $0x900] sm:$0xff]
          %v2040 = vld [vmem:[#allocation11 + $0x908] sm:$0xff]
          %v2041 = vld [vmem:[#allocation11 + $0x910] sm:$0xff]
          %v2042 = vld [vmem:[#allocation11 + $0x918] sm:$0xff]
          %v2043 = vld [vmem:[#allocation11 + $0x920] sm:$0xff]
          %v2044 = vld [vmem:[#allocation11 + $0x928] sm:$0xff]
          %v2045 = vld [vmem:[#allocation11 + $0x930] sm:$0xff]
          %v2046 = vld [vmem:[#allocation11 + $0x938] sm:$0xff]
          %v2047 = vld [vmem:[#allocation11 + $0x940] sm:$0xff]
          %v2048 = vld [vmem:[#allocation11 + $0x948] sm:$0xff]
          %v2049 = vld [vmem:[#allocation11 + $0x950] sm:$0xff]
          %v2050 = vld [vmem:[#allocation11 + $0x958] sm:$0xff]
          %v2051 = vld [vmem:[#allocation11 + $0x960] sm:$0xff]
          %v2052 = vld [vmem:[#allocation11 + $0x968] sm:$0xff]
          %v2053 = vld [vmem:[#allocation11 + $0x970] sm:$0xff]
          %v2054 = vld [vmem:[#allocation11 + $0x978] sm:$0xff]
          %v2055 = vld [vmem:[#allocation11 + $0x980] sm:$0xff]
          %v2056 = vld [vmem:[#allocation11 + $0x988] sm:$0xff]
          %v2057 = vld [vmem:[#allocation11 + $0x990] sm:$0xff]
          %v2058 = vld [vmem:[#allocation11 + $0x998] sm:$0xff]
          %v2059 = vld [vmem:[#allocation11 + $0x9a0] sm:$0xff]
          %v2060 = vld [vmem:[#allocation11 + $0x9a8] sm:$0xff]
          %v2061 = vld [vmem:[#allocation11 + $0x9b0] sm:$0xff]
          %v2062 = vld [vmem:[#allocation11 + $0x9b8] sm:$0xff]
          %v2063 = vld [vmem:[#allocation11 + $0x9c0] sm:$0xff]
          %v2064 = vld [vmem:[#allocation11 + $0x9c8] sm:$0xff]
          %v2065 = vld [vmem:[#allocation11 + $0x9d0] sm:$0xff]
          %v2066 = vld [vmem:[#allocation11 + $0x9d8] sm:$0xff]
          %v2067 = vld [vmem:[#allocation11 + $0x9e0] sm:$0xff]
          %v2068 = vld [vmem:[#allocation11 + $0x9e8] sm:$0xff]
          %v2069 = vld [vmem:[#allocation11 + $0x9f0] sm:$0xff]
          %v2070 = vld [vmem:[#allocation11 + $0x9f8] sm:$0xff]
          %v2071 = vld [vmem:[#allocation11 + $0xa00] sm:$0xff]
          %v2072 = vld [vmem:[#allocation11 + $0xa08] sm:$0xff]
          %v2073 = vld [vmem:[#allocation11 + $0xa10] sm:$0xff]
          %v2074 = vld [vmem:[#allocation11 + $0xa18] sm:$0xff]
          %v2075 = vld [vmem:[#allocation11 + $0xa20] sm:$0xff]
          %v2076 = vld [vmem:[#allocation11 + $0xa28] sm:$0xff]
          %v2077 = vld [vmem:[#allocation11 + $0xa30] sm:$0xff]
          %v2078 = vld [vmem:[#allocation11 + $0xa38] sm:$0xff]
          %v2079 = vld [vmem:[#allocation11 + $0xa40] sm:$0xff]
          %v2080 = vld [vmem:[#allocation11 + $0xa48] sm:$0xff]
          %v2081 = vld [vmem:[#allocation11 + $0xa50] sm:$0xff]
          %v2082 = vld [vmem:[#allocation11 + $0xa58] sm:$0xff]
          %v2083 = vld [vmem:[#allocation11 + $0xa60] sm:$0xff]
          %v2084 = vld [vmem:[#allocation11 + $0xa68] sm:$0xff]
          %v2085 = vld [vmem:[#allocation11 + $0xa70] sm:$0xff]
          %v2086 = vld [vmem:[#allocation11 + $0xa78] sm:$0xff]
          %v2087 = vld [vmem:[#allocation11 + $0xa80] sm:$0xff]
          %v2088 = vld [vmem:[#allocation11 + $0xa88] sm:$0xff]
          %v2089 = vld [vmem:[#allocation11 + $0xa90] sm:$0xff]
          %v2090 = vld [vmem:[#allocation11 + $0xa98] sm:$0xff]
          %v2091 = vld [vmem:[#allocation11 + $0xaa0] sm:$0xff]
          %v2092 = vld [vmem:[#allocation11 + $0xaa8] sm:$0xff]
          %v2093 = vld [vmem:[#allocation11 + $0xab0] sm:$0xff]
          %v2094 = vld [vmem:[#allocation11 + $0xab8] sm:$0xff]
          %v2095 = vld [vmem:[#allocation11 + $0xac0] sm:$0xff]
          %v2096 = vld [vmem:[#allocation11 + $0xac8] sm:$0xff]
          %v2097 = vld [vmem:[#allocation11 + $0xad0] sm:$0xff]
          %v2098 = vld [vmem:[#allocation11 + $0xad8] sm:$0xff]
          %v2099 = vld [vmem:[#allocation11 + $0xae0] sm:$0xff]
          %v2100 = vld [vmem:[#allocation11 + $0xae8] sm:$0xff]
          %v2101 = vld [vmem:[#allocation11 + $0xaf0] sm:$0xff]
          %v2102 = vld [vmem:[#allocation11 + $0xaf8] sm:$0xff]
          %v2103 = vld [vmem:[#allocation11 + $0xb00] sm:$0xff]
          %v2104 = vld [vmem:[#allocation11 + $0xb08] sm:$0xff]
          %v2105 = vld [vmem:[#allocation11 + $0xb10] sm:$0xff]
          %v2106 = vld [vmem:[#allocation11 + $0xb18] sm:$0xff]
          %v2107 = vld [vmem:[#allocation11 + $0xb20] sm:$0xff]
          %v2108 = vld [vmem:[#allocation11 + $0xb28] sm:$0xff]
          %v2109 = vld [vmem:[#allocation11 + $0xb30] sm:$0xff]
          %v2110 = vld [vmem:[#allocation11 + $0xb38] sm:$0xff]
          %v2111 = vld [vmem:[#allocation11 + $0xb40] sm:$0xff]
          %v2112 = vld [vmem:[#allocation11 + $0xb48] sm:$0xff]
          %v2113 = vld [vmem:[#allocation11 + $0xb50] sm:$0xff]
          %v2114 = vld [vmem:[#allocation11 + $0xb58] sm:$0xff]
          %v2115 = vld [vmem:[#allocation11 + $0xb60] sm:$0xff]
          %v2116 = vld [vmem:[#allocation11 + $0xb68] sm:$0xff]
          %v2117 = vld [vmem:[#allocation11 + $0xb70] sm:$0xff]
          %v2118 = vld [vmem:[#allocation11 + $0xb78] sm:$0xff]
          %v2119 = vld [vmem:[#allocation11 + $0xb80] sm:$0xff]
          %v2120 = vld [vmem:[#allocation11 + $0xb88] sm:$0xff]
          %v2121 = vld [vmem:[#allocation11 + $0xb90] sm:$0xff]
          %v2122 = vld [vmem:[#allocation11 + $0xb98] sm:$0xff]
          %v2123 = vld [vmem:[#allocation11 + $0xba0] sm:$0xff]
          %v2124 = vld [vmem:[#allocation11 + $0xba8] sm:$0xff]
          %v2125 = vld [vmem:[#allocation11 + $0xbb0] sm:$0xff]
          %v2126 = vld [vmem:[#allocation11 + $0xbb8] sm:$0xff]
          %v2127 = vld [vmem:[#allocation11 + $0xbc0] sm:$0xff]
          %v2128 = vld [vmem:[#allocation11 + $0xbc8] sm:$0xff]
          %v2129 = vld [vmem:[#allocation11 + $0xbd0] sm:$0xff]
          %v2130 = vld [vmem:[#allocation11 + $0xbd8] sm:$0xff]
          %v2131 = vld [vmem:[#allocation11 + $0xbe0] sm:$0xff]
          %v2132 = vld [vmem:[#allocation11 + $0xbe8] sm:$0xff]
          %v2133 = vld [vmem:[#allocation11 + $0xbf0] sm:$0xff]
          %v2134 = vld [vmem:[#allocation11 + $0xbf8] sm:$0xff]
          %v2135 = vld [vmem:[#allocation11 + $0xc00] sm:$0xff]
          %v2136 = vld [vmem:[#allocation11 + $0xc08] sm:$0xff]
          %v2137 = vld [vmem:[#allocation11 + $0xc10] sm:$0xff]
          %v2138 = vld [vmem:[#allocation11 + $0xc18] sm:$0xff]
          %v2139 = vld [vmem:[#allocation11 + $0xc20] sm:$0xff]
          %v2140 = vld [vmem:[#allocation11 + $0xc28] sm:$0xff]
          %v2141 = vld [vmem:[#allocation11 + $0xc30] sm:$0xff]
          %v2142 = vld [vmem:[#allocation11 + $0xc38] sm:$0xff]
          %v2143 = vld [vmem:[#allocation11 + $0xc40] sm:$0xff]
          %v2144 = vld [vmem:[#allocation11 + $0xc48] sm:$0xff]
          %v2145 = vld [vmem:[#allocation11 + $0xc50] sm:$0xff]
          %v2146 = vld [vmem:[#allocation11 + $0xc58] sm:$0xff]
          %v2147 = vld [vmem:[#allocation11 + $0xc60] sm:$0xff]
          %v2148 = vld [vmem:[#allocation11 + $0xc68] sm:$0xff]
          %v2149 = vld [vmem:[#allocation11 + $0xc70] sm:$0xff]
          %v2150 = vld [vmem:[#allocation11 + $0xc78] sm:$0xff]
          %v2151 = vld [vmem:[#allocation11 + $0xc80] sm:$0xff]
          %v2152 = vld [vmem:[#allocation11 + $0xc88] sm:$0xff]
          %v2153 = vld [vmem:[#allocation11 + $0xc90] sm:$0xff]
          %v2154 = vld [vmem:[#allocation11 + $0xc98] sm:$0xff]
          %v2155 = vld [vmem:[#allocation11 + $0xca0] sm:$0xff]
          %v2156 = vld [vmem:[#allocation11 + $0xca8] sm:$0xff]
          %v2157 = vld [vmem:[#allocation11 + $0xcb0] sm:$0xff]
          %v2158 = vld [vmem:[#allocation11 + $0xcb8] sm:$0xff]
          %v2159 = vld [vmem:[#allocation11 + $0xcc0] sm:$0xff]
          %v2160 = vld [vmem:[#allocation11 + $0xcc8] sm:$0xff]
          %v2161 = vld [vmem:[#allocation11 + $0xcd0] sm:$0xff]
          %v2162 = vld [vmem:[#allocation11 + $0xcd8] sm:$0xff]
          %v2163 = vld [vmem:[#allocation11 + $0xce0] sm:$0xff]
          %v2164 = vld [vmem:[#allocation11 + $0xce8] sm:$0xff]
          %v2165 = vld [vmem:[#allocation11 + $0xcf0] sm:$0xff]
          %v2166 = vld [vmem:[#allocation11 + $0xcf8] sm:$0xff]
          %v2167 = vld [vmem:[#allocation11 + $0xd00] sm:$0xff]
          %v2168 = vld [vmem:[#allocation11 + $0xd08] sm:$0xff]
          %v2169 = vld [vmem:[#allocation11 + $0xd10] sm:$0xff]
          %v2170 = vld [vmem:[#allocation11 + $0xd18] sm:$0xff]
          %v2171 = vld [vmem:[#allocation11 + $0xd20] sm:$0xff]
          %v2172 = vld [vmem:[#allocation11 + $0xd28] sm:$0xff]
          %v2173 = vld [vmem:[#allocation11 + $0xd30] sm:$0xff]
          %v2174 = vld [vmem:[#allocation11 + $0xd38] sm:$0xff]
          %v2175 = vld [vmem:[#allocation11 + $0xd40] sm:$0xff]
          %v2176 = vld [vmem:[#allocation11 + $0xd48] sm:$0xff]
          %v2177 = vld [vmem:[#allocation11 + $0xd50] sm:$0xff]
          %v2178 = vld [vmem:[#allocation11 + $0xd58] sm:$0xff]
          %v2179 = vld [vmem:[#allocation11 + $0xd60] sm:$0xff]
          %v2180 = vld [vmem:[#allocation11 + $0xd68] sm:$0xff]
          %v2181 = vld [vmem:[#allocation11 + $0xd70] sm:$0xff]
          %v2182 = vld [vmem:[#allocation11 + $0xd78] sm:$0xff]
          %v2183 = vld [vmem:[#allocation11 + $0xd80] sm:$0xff]
          %v2184 = vld [vmem:[#allocation11 + $0xd88] sm:$0xff]
          %v2185 = vld [vmem:[#allocation11 + $0xd90] sm:$0xff]
          %v2186 = vld [vmem:[#allocation11 + $0xd98] sm:$0xff]
          %v2187 = vld [vmem:[#allocation11 + $0xda0] sm:$0xff]
          %v2188 = vld [vmem:[#allocation11 + $0xda8] sm:$0xff]
          %v2189 = vld [vmem:[#allocation11 + $0xdb0] sm:$0xff]
          %v2190 = vld [vmem:[#allocation11 + $0xdb8] sm:$0xff]
          %v2191 = vld [vmem:[#allocation11 + $0xdc0] sm:$0xff]
          %v2192 = vld [vmem:[#allocation11 + $0xdc8] sm:$0xff]
          %v2193 = vld [vmem:[#allocation11 + $0xdd0] sm:$0xff]
          %v2194 = vld [vmem:[#allocation11 + $0xdd8] sm:$0xff]
          %v2195 = vld [vmem:[#allocation11 + $0xde0] sm:$0xff]
          %v2196 = vld [vmem:[#allocation11 + $0xde8] sm:$0xff]
          %v2197 = vld [vmem:[#allocation11 + $0xdf0] sm:$0xff]
          %v2198 = vld [vmem:[#allocation11 + $0xdf8] sm:$0xff]
          %v2199 = vld [vmem:[#allocation11 + $0xe00] sm:$0xff]
          %v2200 = vld [vmem:[#allocation11 + $0xe08] sm:$0xff]
          %v2201 = vld [vmem:[#allocation11 + $0xe10] sm:$0xff]
          %v2202 = vld [vmem:[#allocation11 + $0xe18] sm:$0xff]
          %v2203 = vld [vmem:[#allocation11 + $0xe20] sm:$0xff]
          %v2204 = vld [vmem:[#allocation11 + $0xe28] sm:$0xff]
          %v2205 = vld [vmem:[#allocation11 + $0xe30] sm:$0xff]
          %v2206 = vld [vmem:[#allocation11 + $0xe38] sm:$0xff]
          %v2207 = vld [vmem:[#allocation11 + $0xe40] sm:$0xff]
          %v2208 = vld [vmem:[#allocation11 + $0xe48] sm:$0xff]
          %v2209 = vld [vmem:[#allocation11 + $0xe50] sm:$0xff]
          %v2210 = vld [vmem:[#allocation11 + $0xe58] sm:$0xff]
          %v2211 = vld [vmem:[#allocation11 + $0xe60] sm:$0xff]
          %v2212 = vld [vmem:[#allocation11 + $0xe68] sm:$0xff]
          %v2213 = vld [vmem:[#allocation11 + $0xe70] sm:$0xff]
          %v2214 = vld [vmem:[#allocation11 + $0xe78] sm:$0xff]
          %v2215 = vld [vmem:[#allocation11 + $0xe80] sm:$0xff]
          %v2216 = vld [vmem:[#allocation11 + $0xe88] sm:$0xff]
          %v2217 = vld [vmem:[#allocation11 + $0xe90] sm:$0xff]
          %v2218 = vld [vmem:[#allocation11 + $0xe98] sm:$0xff]
          %v2219 = vld [vmem:[#allocation11 + $0xea0] sm:$0xff]
          %v2220 = vld [vmem:[#allocation11 + $0xea8] sm:$0xff]
          %v2221 = vld [vmem:[#allocation11 + $0xeb0] sm:$0xff]
          %v2222 = vld [vmem:[#allocation11 + $0xeb8] sm:$0xff]
          %v2223 = vld [vmem:[#allocation11 + $0xec0] sm:$0xff]
          %v2224 = vld [vmem:[#allocation11 + $0xec8] sm:$0xff]
          %v2225 = vld [vmem:[#allocation11 + $0xed0] sm:$0xff]
          %v2226 = vld [vmem:[#allocation11 + $0xed8] sm:$0xff]
          %v2227 = vld [vmem:[#allocation11 + $0xee0] sm:$0xff]
          %v2228 = vld [vmem:[#allocation11 + $0xee8] sm:$0xff]
          %v2229 = vld [vmem:[#allocation11 + $0xef0] sm:$0xff]
          %v2230 = vld [vmem:[#allocation11 + $0xef8] sm:$0xff]
          %v2231 = vld [vmem:[#allocation11 + $0xf00] sm:$0xff]
          %v2232 = vld [vmem:[#allocation11 + $0xf08] sm:$0xff]
          %v2233 = vld [vmem:[#allocation11 + $0xf10] sm:$0xff]
          %v2234 = vld [vmem:[#allocation11 + $0xf18] sm:$0xff]
          %v2235 = vld [vmem:[#allocation11 + $0xf20] sm:$0xff]
          %v2236 = vld [vmem:[#allocation11 + $0xf28] sm:$0xff]
          %v2237 = vld [vmem:[#allocation11 + $0xf30] sm:$0xff]
          %v2238 = vld [vmem:[#allocation11 + $0xf38] sm:$0xff]
          %v2239 = vld [vmem:[#allocation11 + $0xf40] sm:$0xff]
          %v2240 = vld [vmem:[#allocation11 + $0xf48] sm:$0xff]
          %v2241 = vld [vmem:[#allocation11 + $0xf50] sm:$0xff]
          %v2242 = vld [vmem:[#allocation11 + $0xf58] sm:$0xff]
          %v2243 = vld [vmem:[#allocation11 + $0xf60] sm:$0xff]
          %v2244 = vld [vmem:[#allocation11 + $0xf68] sm:$0xff]
          %v2245 = vld [vmem:[#allocation11 + $0xf70] sm:$0xff]
          %v2246 = vld [vmem:[#allocation11 + $0xf78] sm:$0xff]
          %v2247 = vld [vmem:[#allocation11 + $0xf80] sm:$0xff]
          %v2248 = vld [vmem:[#allocation11 + $0xf88] sm:$0xff]
          %v2249 = vld [vmem:[#allocation11 + $0xf90] sm:$0xff]
          %v2250 = vld [vmem:[#allocation11 + $0xf98] sm:$0xff]
          %v2251 = vld [vmem:[#allocation11 + $0xfa0] sm:$0xff]
          %v2252 = vld [vmem:[#allocation11 + $0xfa8] sm:$0xff]
          %v2253 = vld [vmem:[#allocation11 + $0xfb0] sm:$0xff]
          %v2254 = vld [vmem:[#allocation11 + $0xfb8] sm:$0xff]
          %v2255 = vld [vmem:[#allocation11 + $0xfc0] sm:$0xff]
          %v2256 = vld [vmem:[#allocation11 + $0xfc8] sm:$0xff]
          %v2257 = vld [vmem:[#allocation11 + $0xfd0] sm:$0xff]
          %v2258 = vld [vmem:[#allocation11 + $0xfd8] sm:$0xff]
          %v2259 = vld [vmem:[#allocation11 + $0xfe0] sm:$0xff]
          %v2260 = vld [vmem:[#allocation11 + $0xfe8] sm:$0xff]
          %v2261 = vld [vmem:[#allocation11 + $0xff0] sm:$0xff]
          %v2262 = vld [vmem:[#allocation11 + $0xff8] sm:$0xff]
          %v2263 = vld [vmem:[#allocation11 + $0x1000] sm:$0xff]
          %v2264 = vld [vmem:[#allocation11 + $0x1008] sm:$0xff]
          %v2265 = vld [vmem:[#allocation11 + $0x1010] sm:$0xff]
          %v2266 = vld [vmem:[#allocation11 + $0x1018] sm:$0xff]
          %v2267 = vld [vmem:[#allocation11 + $0x1020] sm:$0xff]
          %v2268 = vld [vmem:[#allocation11 + $0x1028] sm:$0xff]
          %v2269 = vld [vmem:[#allocation11 + $0x1030] sm:$0xff]
          %v2270 = vld [vmem:[#allocation11 + $0x1038] sm:$0xff]
          %v2271 = vld [vmem:[#allocation11 + $0x1040] sm:$0xff]
          %v2272 = vld [vmem:[#allocation11 + $0x1048] sm:$0xff]
          %v2273 = vld [vmem:[#allocation11 + $0x1050] sm:$0xff]
          %v2274 = vld [vmem:[#allocation11 + $0x1058] sm:$0xff]
          %v2275 = vld [vmem:[#allocation11 + $0x1060] sm:$0xff]
          %v2276 = vld [vmem:[#allocation11 + $0x1068] sm:$0xff]
          %v2277 = vld [vmem:[#allocation11 + $0x1070] sm:$0xff]
          %v2278 = vld [vmem:[#allocation11 + $0x1078] sm:$0xff]
          %v2279 = vld [vmem:[#allocation11 + $0x1080] sm:$0xff]
          %v2280 = vld [vmem:[#allocation11 + $0x1088] sm:$0xff]
          %v2281 = vld [vmem:[#allocation11 + $0x1090] sm:$0xff]
          %v2282 = vld [vmem:[#allocation11 + $0x1098] sm:$0xff]
          %v2283 = vld [vmem:[#allocation11 + $0x10a0] sm:$0xff]
          %v2284 = vld [vmem:[#allocation11 + $0x10a8] sm:$0xff]
          %v2285 = vld [vmem:[#allocation11 + $0x10b0] sm:$0xff]
          %v2286 = vld [vmem:[#allocation11 + $0x10b8] sm:$0xff]
          %v2287 = vld [vmem:[#allocation11 + $0x10c0] sm:$0xff]
          %v2288 = vld [vmem:[#allocation11 + $0x10c8] sm:$0xff]
          %v2289 = vld [vmem:[#allocation11 + $0x10d0] sm:$0xff]
          %v2290 = vld [vmem:[#allocation11 + $0x10d8] sm:$0xff]
          %v2291 = vld [vmem:[#allocation11 + $0x10e0] sm:$0xff]
          %v2292 = vld [vmem:[#allocation11 + $0x10e8] sm:$0xff]
          %v2293 = vld [vmem:[#allocation11 + $0x10f0] sm:$0xff]
          %v2294 = vld [vmem:[#allocation11 + $0x10f8] sm:$0xff]
          %v2295 = vld [vmem:[#allocation11 + $0x1100] sm:$0xff]
          %v2296 = vld [vmem:[#allocation11 + $0x1108] sm:$0xff]
          %v2297 = vld [vmem:[#allocation11 + $0x1110] sm:$0xff]
          %v2298 = vld [vmem:[#allocation11 + $0x1118] sm:$0xff]
          %v2299 = vld [vmem:[#allocation11 + $0x1120] sm:$0xff]
          %v2300 = vld [vmem:[#allocation11 + $0x1128] sm:$0xff]
          %v2301 = vld [vmem:[#allocation11 + $0x1130] sm:$0xff]
          %v2302 = vld [vmem:[#allocation11 + $0x1138] sm:$0xff]
          %v2303 = vld [vmem:[#allocation11 + $0x1140] sm:$0xff]
          %v2304 = vld [vmem:[#allocation11 + $0x1148] sm:$0xff]
          %v2305 = vld [vmem:[#allocation11 + $0x1150] sm:$0xff]
          %v2306 = vld [vmem:[#allocation11 + $0x1158] sm:$0xff]
          %v2307 = vld [vmem:[#allocation11 + $0x1160] sm:$0xff]
          %v2308 = vld [vmem:[#allocation11 + $0x1168] sm:$0xff]
          %v2309 = vld [vmem:[#allocation11 + $0x1170] sm:$0xff]
          %v2310 = vld [vmem:[#allocation11 + $0x1178] sm:$0xff]
          %v2311 = vld [vmem:[#allocation11 + $0x1180] sm:$0xff]
          %v2312 = vld [vmem:[#allocation11 + $0x1188] sm:$0xff]
          %v2313 = vld [vmem:[#allocation11 + $0x1190] sm:$0xff]
          %v2314 = vld [vmem:[#allocation11 + $0x1198] sm:$0xff]
          %v2315 = vld [vmem:[#allocation11 + $0x11a0] sm:$0xff]
          %v2316 = vld [vmem:[#allocation11 + $0x11a8] sm:$0xff]
          %v2317 = vld [vmem:[#allocation11 + $0x11b0] sm:$0xff]
          %v2318 = vld [vmem:[#allocation11 + $0x11b8] sm:$0xff]
          %v2319 = vld [vmem:[#allocation11 + $0x11c0] sm:$0xff]
          %v2320 = vld [vmem:[#allocation11 + $0x11c8] sm:$0xff]
          %v2321 = vld [vmem:[#allocation11 + $0x11d0] sm:$0xff]
          %v2322 = vld [vmem:[#allocation11 + $0x11d8] sm:$0xff]
          %v2323 = vld [vmem:[#allocation11 + $0x11e0] sm:$0xff]
          %v2324 = vld [vmem:[#allocation11 + $0x11e8] sm:$0xff]
          %v2325 = vld [vmem:[#allocation11 + $0x11f0] sm:$0xff]
          %v2326 = vld [vmem:[#allocation11 + $0x11f8] sm:$0xff]
          %v2327 = vld [vmem:[#allocation11 + $0x1200] sm:$0xff]
          %v2328 = vld [vmem:[#allocation11 + $0x1208] sm:$0xff]
          %v2329 = vld [vmem:[#allocation11 + $0x1210] sm:$0xff]
          %v2330 = vld [vmem:[#allocation11 + $0x1218] sm:$0xff]
          %v2331 = vld [vmem:[#allocation11 + $0x1220] sm:$0xff]
          %v2332 = vld [vmem:[#allocation11 + $0x1228] sm:$0xff]
          %v2333 = vld [vmem:[#allocation11 + $0x1230] sm:$0xff]
          %v2334 = vld [vmem:[#allocation11 + $0x1238] sm:$0xff]
          %v2335 = vld [vmem:[#allocation11 + $0x1240] sm:$0xff]
          %v2336 = vld [vmem:[#allocation11 + $0x1248] sm:$0xff]
          %v2337 = vld [vmem:[#allocation11 + $0x1250] sm:$0xff]
          %v2338 = vld [vmem:[#allocation11 + $0x1258] sm:$0xff]
          %v2339 = vld [vmem:[#allocation11 + $0x1260] sm:$0xff]
          %v2340 = vld [vmem:[#allocation11 + $0x1268] sm:$0xff]
          %v2341 = vld [vmem:[#allocation11 + $0x1270] sm:$0xff]
          %v2342 = vld [vmem:[#allocation11 + $0x1278] sm:$0xff]
          %v2343 = vld [vmem:[#allocation11 + $0x1280] sm:$0xff]
          %v2344 = vld [vmem:[#allocation11 + $0x1288] sm:$0xff]
          %v2345 = vld [vmem:[#allocation11 + $0x1290] sm:$0xff]
          %v2346 = vld [vmem:[#allocation11 + $0x1298] sm:$0xff]
          %v2347 = vld [vmem:[#allocation11 + $0x12a0] sm:$0xff]
          %v2348 = vld [vmem:[#allocation11 + $0x12a8] sm:$0xff]
          %v2349 = vld [vmem:[#allocation11 + $0x12b0] sm:$0xff]
          %v2350 = vld [vmem:[#allocation11 + $0x12b8] sm:$0xff]
          %v2351 = vld [vmem:[#allocation11 + $0x12c0] sm:$0xff]
          %v2352 = vld [vmem:[#allocation11 + $0x12c8] sm:$0xff]
          %v2353 = vld [vmem:[#allocation11 + $0x12d0] sm:$0xff]
          %v2354 = vld [vmem:[#allocation11 + $0x12d8] sm:$0xff]
          %v2355 = vld [vmem:[#allocation11 + $0x12e0] sm:$0xff]
          %v2356 = vld [vmem:[#allocation11 + $0x12e8] sm:$0xff]
          %v2357 = vld [vmem:[#allocation11 + $0x12f0] sm:$0xff]
          %v2358 = vld [vmem:[#allocation11 + $0x12f8] sm:$0xff]
          %v2359 = vld [vmem:[#allocation11 + $0x1300] sm:$0xff]
          %v2360 = vld [vmem:[#allocation11 + $0x1308] sm:$0xff]
          %v2361 = vld [vmem:[#allocation11 + $0x1310] sm:$0xff]
          %v2362 = vld [vmem:[#allocation11 + $0x1318] sm:$0xff]
          %v2363 = vld [vmem:[#allocation11 + $0x1320] sm:$0xff]
          %v2364 = vld [vmem:[#allocation11 + $0x1328] sm:$0xff]
          %v2365 = vld [vmem:[#allocation11 + $0x1330] sm:$0xff]
          %v2366 = vld [vmem:[#allocation11 + $0x1338] sm:$0xff]
          %v2367 = vld [vmem:[#allocation11 + $0x1340] sm:$0xff]
          %v2368 = vld [vmem:[#allocation11 + $0x1348] sm:$0xff]
          %v2369 = vld [vmem:[#allocation11 + $0x1350] sm:$0xff]
          %v2370 = vld [vmem:[#allocation11 + $0x1358] sm:$0xff]
          %v2371 = vld [vmem:[#allocation11 + $0x1360] sm:$0xff]
          %v2372 = vld [vmem:[#allocation11 + $0x1368] sm:$0xff]
          %v2373 = vld [vmem:[#allocation11 + $0x1370] sm:$0xff]
          %v2374 = vld [vmem:[#allocation11 + $0x1378] sm:$0xff]
          %v2375 = vld [vmem:[#allocation11 + $0x1380] sm:$0xff]
          %v2376 = vld [vmem:[#allocation11 + $0x1388] sm:$0xff]
          %v2377 = vld [vmem:[#allocation11 + $0x1390] sm:$0xff]
          %v2378 = vld [vmem:[#allocation11 + $0x1398] sm:$0xff]
          %v2379 = vld [vmem:[#allocation11 + $0x13a0] sm:$0xff]
          %v2380 = vld [vmem:[#allocation11 + $0x13a8] sm:$0xff]
          %v2381 = vld [vmem:[#allocation11 + $0x13b0] sm:$0xff]
          %v2382 = vld [vmem:[#allocation11 + $0x13b8] sm:$0xff]
          %v2383 = vld [vmem:[#allocation11 + $0x13c0] sm:$0xff]
          %v2384 = vld [vmem:[#allocation11 + $0x13c8] sm:$0xff]
          %v2385 = vld [vmem:[#allocation11 + $0x13d0] sm:$0xff]
          %v2386 = vld [vmem:[#allocation11 + $0x13d8] sm:$0xff]
          %v2387 = vld [vmem:[#allocation11 + $0x13e0] sm:$0xff]
          %v2388 = vld [vmem:[#allocation11 + $0x13e8] sm:$0xff]
          %v2389 = vld [vmem:[#allocation11 + $0x13f0] sm:$0xff]
          %v2390 = vld [vmem:[#allocation11 + $0x13f8] sm:$0xff]
          %v2391 = vld [vmem:[#allocation12] sm:$0xf]
          %v2393 = vperm.slane %v2391, 0
          %v2394 = vperm.slane %v2391, 1
          %v2395 = vperm.slane %v2391, 2
          %v2396 = vperm.slane %v2391, 3
          %2401 = vmatpush.msra.mxu0 %v1811
          %2402 = vmatpush.msra.mxu0 %v1807
          %2403 = vmatpush.msra.mxu0 %v1803
          %2404 = vmatpush.msra.mxu0 %v1799
          %2405 = vmatpush.msra.mxu0 %v1795
          %2406 = vmatpush.msra.mxu0 %v1791
          %2407 = vmatpush.msra.mxu0 %v1787
          %2408 = vmatpush.msra.mxu0 %v1783
          %2409 = vmatpush.msra.mxu0 %v1779
          %2410 = vmatpush.msra.mxu0 %v1775
          %2411 = vmatpush.msra.mxu0 %v1771
          %2412 = vmatpush.msra.mxu0 %v1767
          %2413 = vmatpush.msra.mxu0 %v1763
          %2414 = vmatpush.msra.mxu0 %v1759
          %2415 = vmatpush.msra.mxu0 %v1755
          %2416 = vmatpush.msra.mxu0 %v1751
          %2417 = vmatmul.f32.gmra.mxu0 %v1741
          %v2418 = vpop.f32.mrf.mxu0
          %v2419 = vadd.f32 %v2393, %v2418
          %2420 = vdwg.mxu0
          %2421 = vmatpush.msra.mxu0 %v1875
          %2422 = vmatpush.msra.mxu0 %v1871
          %2423 = vmatpush.msra.mxu0 %v1867
          %2424 = vmatpush.msra.mxu0 %v1863
          %2425 = vmatpush.msra.mxu0 %v1859
          %2426 = vmatpush.msra.mxu0 %v1855
          %2427 = vmatpush.msra.mxu0 %v1851
          %2428 = vmatpush.msra.mxu0 %v1847
          %2429 = vmatpush.msra.mxu0 %v1843
          %2430 = vmatpush.msra.mxu0 %v1839
          %2431 = vmatpush.msra.mxu0 %v1835
          %2432 = vmatpush.msra.mxu0 %v1831
          %2433 = vmatpush.msra.mxu0 %v1827
          %2434 = vmatpush.msra.mxu0 %v1823
          %2435 = vmatpush.msra.mxu0 %v1819
          %2436 = vmatpush.msra.mxu0 %v1815
          %2437 = vmatmul.f32.gmra.mxu0 %v1742
          %v2438 = vpop.f32.mrf.mxu0
          %v2439 = vadd.f32 %v2419, %v2438
          %2440 = vdwg.mxu0
          %2441 = vmatpush.msra.mxu0 %v1939
          %2442 = vmatpush.msra.mxu0 %v1935
          %2443 = vmatpush.msra.mxu0 %v1931
          %2444 = vmatpush.msra.mxu0 %v1927
          %2445 = vmatpush.msra.mxu0 %v1923
          %2446 = vmatpush.msra.mxu0 %v1919
          %2447 = vmatpush.msra.mxu0 %v1915
          %2448 = vmatpush.msra.mxu0 %v1911
          %2449 = vmatpush.msra.mxu0 %v1907
          %2450 = vmatpush.msra.mxu0 %v1903
          %2451 = vmatpush.msra.mxu0 %v1899
          %2452 = vmatpush.msra.mxu0 %v1895
          %2453 = vmatpush.msra.mxu0 %v1891
          %2454 = vmatpush.msra.mxu0 %v1887
          %2455 = vmatpush.msra.mxu0 %v1883
          %2456 = vmatpush.msra.mxu0 %v1879
          %2457 = vmatmul.f32.gmra.mxu0 %v1743
          %v2458 = vpop.f32.mrf.mxu0
          %v2459 = vadd.f32 %v2439, %v2458
          %2460 = vdwg.mxu0
          %2461 = vmatpush.msra.mxu0 %v2003
          %2462 = vmatpush.msra.mxu0 %v1999
          %2463 = vmatpush.msra.mxu0 %v1995
          %2464 = vmatpush.msra.mxu0 %v1991
          %2465 = vmatpush.msra.mxu0 %v1987
          %2466 = vmatpush.msra.mxu0 %v1983
          %2467 = vmatpush.msra.mxu0 %v1979
          %2468 = vmatpush.msra.mxu0 %v1975
          %2469 = vmatpush.msra.mxu0 %v1971
          %2470 = vmatpush.msra.mxu0 %v1967
          %2471 = vmatpush.msra.mxu0 %v1963
          %2472 = vmatpush.msra.mxu0 %v1959
          %2473 = vmatpush.msra.mxu0 %v1955
          %2474 = vmatpush.msra.mxu0 %v1951
          %2475 = vmatpush.msra.mxu0 %v1947
          %2476 = vmatpush.msra.mxu0 %v1943
          %2477 = vmatmul.f32.gmra.mxu0 %v1744
          %v2478 = vpop.f32.mrf.mxu0
          %v2479 = vadd.f32 %v2459, %v2478
          %2480 = vdwg.mxu0
          %2481 = vmatpush.msra.mxu0 %v2067
          %2482 = vmatpush.msra.mxu0 %v2063
          %2483 = vmatpush.msra.mxu0 %v2059
          %2484 = vmatpush.msra.mxu0 %v2055
          %2485 = vmatpush.msra.mxu0 %v2051
          %2486 = vmatpush.msra.mxu0 %v2047
          %2487 = vmatpush.msra.mxu0 %v2043
          %2488 = vmatpush.msra.mxu0 %v2039
          %2489 = vmatpush.msra.mxu0 %v2035
          %2490 = vmatpush.msra.mxu0 %v2031
          %2491 = vmatpush.msra.mxu0 %v2027
          %2492 = vmatpush.msra.mxu0 %v2023
          %2493 = vmatpush.msra.mxu0 %v2019
          %2494 = vmatpush.msra.mxu0 %v2015
          %2495 = vmatpush.msra.mxu0 %v2011
          %2496 = vmatpush.msra.mxu0 %v2007
          %2497 = vmatmul.f32.gmra.mxu0 %v1745
          %v2498 = vpop.f32.mrf.mxu0
          %v2499 = vadd.f32 %v2479, %v2498
          %2500 = vdwg.mxu0
          %2501 = vmatpush.msra.mxu0 %v2131
          %2502 = vmatpush.msra.mxu0 %v2127
          %2503 = vmatpush.msra.mxu0 %v2123
          %2504 = vmatpush.msra.mxu0 %v2119
          %2505 = vmatpush.msra.mxu0 %v2115
          %2506 = vmatpush.msra.mxu0 %v2111
          %2507 = vmatpush.msra.mxu0 %v2107
          %2508 = vmatpush.msra.mxu0 %v2103
          %2509 = vmatpush.msra.mxu0 %v2099
          %2510 = vmatpush.msra.mxu0 %v2095
          %2511 = vmatpush.msra.mxu0 %v2091
          %2512 = vmatpush.msra.mxu0 %v2087
          %2513 = vmatpush.msra.mxu0 %v2083
          %2514 = vmatpush.msra.mxu0 %v2079
          %2515 = vmatpush.msra.mxu0 %v2075
          %2516 = vmatpush.msra.mxu0 %v2071
          %2517 = vmatmul.f32.gmra.mxu0 %v1746
          %v2518 = vpop.f32.mrf.mxu0
          %v2519 = vadd.f32 %v2499, %v2518
          %2520 = vdwg.mxu0
          %2521 = vmatpush.msra.mxu0 %v2195
          %2522 = vmatpush.msra.mxu0 %v2191
          %2523 = vmatpush.msra.mxu0 %v2187
          %2524 = vmatpush.msra.mxu0 %v2183
          %2525 = vmatpush.msra.mxu0 %v2179
          %2526 = vmatpush.msra.mxu0 %v2175
          %2527 = vmatpush.msra.mxu0 %v2171
          %2528 = vmatpush.msra.mxu0 %v2167
          %2529 = vmatpush.msra.mxu0 %v2163
          %2530 = vmatpush.msra.mxu0 %v2159
          %2531 = vmatpush.msra.mxu0 %v2155
          %2532 = vmatpush.msra.mxu0 %v2151
          %2533 = vmatpush.msra.mxu0 %v2147
          %2534 = vmatpush.msra.mxu0 %v2143
          %2535 = vmatpush.msra.mxu0 %v2139
          %2536 = vmatpush.msra.mxu0 %v2135
          %2537 = vmatmul.f32.gmra.mxu0 %v1747
          %v2538 = vpop.f32.mrf.mxu0
          %v2539 = vadd.f32 %v2519, %v2538
          %2540 = vdwg.mxu0
          %2541 = vmatpush.msra.mxu0 %v2259
          %2542 = vmatpush.msra.mxu0 %v2255
          %2543 = vmatpush.msra.mxu0 %v2251
          %2544 = vmatpush.msra.mxu0 %v2247
          %2545 = vmatpush.msra.mxu0 %v2243
          %2546 = vmatpush.msra.mxu0 %v2239
          %2547 = vmatpush.msra.mxu0 %v2235
          %2548 = vmatpush.msra.mxu0 %v2231
          %2549 = vmatpush.msra.mxu0 %v2227
          %2550 = vmatpush.msra.mxu0 %v2223
          %2551 = vmatpush.msra.mxu0 %v2219
          %2552 = vmatpush.msra.mxu0 %v2215
          %2553 = vmatpush.msra.mxu0 %v2211
          %2554 = vmatpush.msra.mxu0 %v2207
          %2555 = vmatpush.msra.mxu0 %v2203
          %2556 = vmatpush.msra.mxu0 %v2199
          %2557 = vmatmul.f32.gmra.mxu0 %v1748
          %v2558 = vpop.f32.mrf.mxu0
          %v2559 = vadd.f32 %v2539, %v2558
          %2560 = vdwg.mxu0
          %2561 = vmatpush.msra.mxu0 %v2323
          %2562 = vmatpush.msra.mxu0 %v2319
          %2563 = vmatpush.msra.mxu0 %v2315
          %2564 = vmatpush.msra.mxu0 %v2311
          %2565 = vmatpush.msra.mxu0 %v2307
          %2566 = vmatpush.msra.mxu0 %v2303
          %2567 = vmatpush.msra.mxu0 %v2299
          %2568 = vmatpush.msra.mxu0 %v2295
          %2569 = vmatpush.msra.mxu0 %v2291
          %2570 = vmatpush.msra.mxu0 %v2287
          %2571 = vmatpush.msra.mxu0 %v2283
          %2572 = vmatpush.msra.mxu0 %v2279
          %2573 = vmatpush.msra.mxu0 %v2275
          %2574 = vmatpush.msra.mxu0 %v2271
          %2575 = vmatpush.msra.mxu0 %v2267
          %2576 = vmatpush.msra.mxu0 %v2263
          %2577 = vmatmul.f32.gmra.mxu0 %v1749
          %v2578 = vpop.f32.mrf.mxu0
          %v2579 = vadd.f32 %v2559, %v2578
          %2580 = vdwg.mxu0
          %2581 = vmatpush.msra.mxu0 %v2387
          %2582 = vmatpush.msra.mxu0 %v2383
          %2583 = vmatpush.msra.mxu0 %v2379
          %2584 = vmatpush.msra.mxu0 %v2375
          %2585 = vmatpush.msra.mxu0 %v2371
          %2586 = vmatpush.msra.mxu0 %v2367
          %2587 = vmatpush.msra.mxu0 %v2363
          %2588 = vmatpush.msra.mxu0 %v2359
          %2589 = vmatpush.msra.mxu0 %v2355
          %2590 = vmatpush.msra.mxu0 %v2351
          %2591 = vmatpush.msra.mxu0 %v2347
          %2592 = vmatpush.msra.mxu0 %v2343
          %2593 = vmatpush.msra.mxu0 %v2339
          %2594 = vmatpush.msra.mxu0 %v2335
          %2595 = vmatpush.msra.mxu0 %v2331
          %2596 = vmatpush.msra.mxu0 %v2327
          %2597 = vmatmul.f32.gmra.mxu0 %v1750
          %v2598 = vpop.f32.mrf.mxu0
          %v2599 = vadd.f32 %v2579, %v2598
          %2600 = vdwg.mxu0
          %2601 = vmatpush.msra.mxu0 %v1812
          %2602 = vmatpush.msra.mxu0 %v1808
          %2603 = vmatpush.msra.mxu0 %v1804
          %2604 = vmatpush.msra.mxu0 %v1800
          %2605 = vmatpush.msra.mxu0 %v1796
          %2606 = vmatpush.msra.mxu0 %v1792
          %2607 = vmatpush.msra.mxu0 %v1788
          %2608 = vmatpush.msra.mxu0 %v1784
          %2609 = vmatpush.msra.mxu0 %v1780
          %2610 = vmatpush.msra.mxu0 %v1776
          %2611 = vmatpush.msra.mxu0 %v1772
          %2612 = vmatpush.msra.mxu0 %v1768
          %2613 = vmatpush.msra.mxu0 %v1764
          %2614 = vmatpush.msra.mxu0 %v1760
          %2615 = vmatpush.msra.mxu0 %v1756
          %2616 = vmatpush.msra.mxu0 %v1752
          %2617 = vmatmul.f32.gmra.mxu0 %v1741
          %v2618 = vpop.f32.mrf.mxu0
          %v2619 = vadd.f32 %v2394, %v2618
          %2620 = vdwg.mxu0
          %2621 = vmatpush.msra.mxu0 %v1876
          %2622 = vmatpush.msra.mxu0 %v1872
          %2623 = vmatpush.msra.mxu0 %v1868
          %2624 = vmatpush.msra.mxu0 %v1864
          %2625 = vmatpush.msra.mxu0 %v1860
          %2626 = vmatpush.msra.mxu0 %v1856
          %2627 = vmatpush.msra.mxu0 %v1852
          %2628 = vmatpush.msra.mxu0 %v1848
          %2629 = vmatpush.msra.mxu0 %v1844
          %2630 = vmatpush.msra.mxu0 %v1840
          %2631 = vmatpush.msra.mxu0 %v1836
          %2632 = vmatpush.msra.mxu0 %v1832
          %2633 = vmatpush.msra.mxu0 %v1828
          %2634 = vmatpush.msra.mxu0 %v1824
          %2635 = vmatpush.msra.mxu0 %v1820
          %2636 = vmatpush.msra.mxu0 %v1816
          %2637 = vmatmul.f32.gmra.mxu0 %v1742
          %v2638 = vpop.f32.mrf.mxu0
          %v2639 = vadd.f32 %v2619, %v2638
          %2640 = vdwg.mxu0
          %2641 = vmatpush.msra.mxu0 %v1940
          %2642 = vmatpush.msra.mxu0 %v1936
          %2643 = vmatpush.msra.mxu0 %v1932
          %2644 = vmatpush.msra.mxu0 %v1928
          %2645 = vmatpush.msra.mxu0 %v1924
          %2646 = vmatpush.msra.mxu0 %v1920
          %2647 = vmatpush.msra.mxu0 %v1916
          %2648 = vmatpush.msra.mxu0 %v1912
          %2649 = vmatpush.msra.mxu0 %v1908
          %2650 = vmatpush.msra.mxu0 %v1904
          %2651 = vmatpush.msra.mxu0 %v1900
          %2652 = vmatpush.msra.mxu0 %v1896
          %2653 = vmatpush.msra.mxu0 %v1892
          %2654 = vmatpush.msra.mxu0 %v1888
          %2655 = vmatpush.msra.mxu0 %v1884
          %2656 = vmatpush.msra.mxu0 %v1880
          %2657 = vmatmul.f32.gmra.mxu0 %v1743
          %v2658 = vpop.f32.mrf.mxu0
          %v2659 = vadd.f32 %v2639, %v2658
          %2660 = vdwg.mxu0
          %2661 = vmatpush.msra.mxu0 %v2004
          %2662 = vmatpush.msra.mxu0 %v2000
          %2663 = vmatpush.msra.mxu0 %v1996
          %2664 = vmatpush.msra.mxu0 %v1992
          %2665 = vmatpush.msra.mxu0 %v1988
          %2666 = vmatpush.msra.mxu0 %v1984
          %2667 = vmatpush.msra.mxu0 %v1980
          %2668 = vmatpush.msra.mxu0 %v1976
          %2669 = vmatpush.msra.mxu0 %v1972
          %2670 = vmatpush.msra.mxu0 %v1968
          %2671 = vmatpush.msra.mxu0 %v1964
          %2672 = vmatpush.msra.mxu0 %v1960
          %2673 = vmatpush.msra.mxu0 %v1956
          %2674 = vmatpush.msra.mxu0 %v1952
          %2675 = vmatpush.msra.mxu0 %v1948
          %2676 = vmatpush.msra.mxu0 %v1944
          %2677 = vmatmul.f32.gmra.mxu0 %v1744
          %v2678 = vpop.f32.mrf.mxu0
          %v2679 = vadd.f32 %v2659, %v2678
          %2680 = vdwg.mxu0
          %2681 = vmatpush.msra.mxu0 %v2068
          %2682 = vmatpush.msra.mxu0 %v2064
          %2683 = vmatpush.msra.mxu0 %v2060
          %2684 = vmatpush.msra.mxu0 %v2056
          %2685 = vmatpush.msra.mxu0 %v2052
          %2686 = vmatpush.msra.mxu0 %v2048
          %2687 = vmatpush.msra.mxu0 %v2044
          %2688 = vmatpush.msra.mxu0 %v2040
          %2689 = vmatpush.msra.mxu0 %v2036
          %2690 = vmatpush.msra.mxu0 %v2032
          %2691 = vmatpush.msra.mxu0 %v2028
          %2692 = vmatpush.msra.mxu0 %v2024
          %2693 = vmatpush.msra.mxu0 %v2020
          %2694 = vmatpush.msra.mxu0 %v2016
          %2695 = vmatpush.msra.mxu0 %v2012
          %2696 = vmatpush.msra.mxu0 %v2008
          %2697 = vmatmul.f32.gmra.mxu0 %v1745
          %v2698 = vpop.f32.mrf.mxu0
          %v2699 = vadd.f32 %v2679, %v2698
          %2700 = vdwg.mxu0
          %2701 = vmatpush.msra.mxu0 %v2132
          %2702 = vmatpush.msra.mxu0 %v2128
          %2703 = vmatpush.msra.mxu0 %v2124
          %2704 = vmatpush.msra.mxu0 %v2120
          %2705 = vmatpush.msra.mxu0 %v2116
          %2706 = vmatpush.msra.mxu0 %v2112
          %2707 = vmatpush.msra.mxu0 %v2108
          %2708 = vmatpush.msra.mxu0 %v2104
          %2709 = vmatpush.msra.mxu0 %v2100
          %2710 = vmatpush.msra.mxu0 %v2096
          %2711 = vmatpush.msra.mxu0 %v2092
          %2712 = vmatpush.msra.mxu0 %v2088
          %2713 = vmatpush.msra.mxu0 %v2084
          %2714 = vmatpush.msra.mxu0 %v2080
          %2715 = vmatpush.msra.mxu0 %v2076
          %2716 = vmatpush.msra.mxu0 %v2072
          %2717 = vmatmul.f32.gmra.mxu0 %v1746
          %v2718 = vpop.f32.mrf.mxu0
          %v2719 = vadd.f32 %v2699, %v2718
          %2720 = vdwg.mxu0
          %2721 = vmatpush.msra.mxu0 %v2196
          %2722 = vmatpush.msra.mxu0 %v2192
          %2723 = vmatpush.msra.mxu0 %v2188
          %2724 = vmatpush.msra.mxu0 %v2184
          %2725 = vmatpush.msra.mxu0 %v2180
          %2726 = vmatpush.msra.mxu0 %v2176
          %2727 = vmatpush.msra.mxu0 %v2172
          %2728 = vmatpush.msra.mxu0 %v2168
          %2729 = vmatpush.msra.mxu0 %v2164
          %2730 = vmatpush.msra.mxu0 %v2160
          %2731 = vmatpush.msra.mxu0 %v2156
          %2732 = vmatpush.msra.mxu0 %v2152
          %2733 = vmatpush.msra.mxu0 %v2148
          %2734 = vmatpush.msra.mxu0 %v2144
          %2735 = vmatpush.msra.mxu0 %v2140
          %2736 = vmatpush.msra.mxu0 %v2136
          %2737 = vmatmul.f32.gmra.mxu0 %v1747
          %v2738 = vpop.f32.mrf.mxu0
          %v2739 = vadd.f32 %v2719, %v2738
          %2740 = vdwg.mxu0
          %2741 = vmatpush.msra.mxu0 %v2260
          %2742 = vmatpush.msra.mxu0 %v2256
          %2743 = vmatpush.msra.mxu0 %v2252
          %2744 = vmatpush.msra.mxu0 %v2248
          %2745 = vmatpush.msra.mxu0 %v2244
          %2746 = vmatpush.msra.mxu0 %v2240
          %2747 = vmatpush.msra.mxu0 %v2236
          %2748 = vmatpush.msra.mxu0 %v2232
          %2749 = vmatpush.msra.mxu0 %v2228
          %2750 = vmatpush.msra.mxu0 %v2224
          %2751 = vmatpush.msra.mxu0 %v2220
          %2752 = vmatpush.msra.mxu0 %v2216
          %2753 = vmatpush.msra.mxu0 %v2212
          %2754 = vmatpush.msra.mxu0 %v2208
          %2755 = vmatpush.msra.mxu0 %v2204
          %2756 = vmatpush.msra.mxu0 %v2200
          %2757 = vmatmul.f32.gmra.mxu0 %v1748
          %v2758 = vpop.f32.mrf.mxu0
          %v2759 = vadd.f32 %v2739, %v2758
          %2760 = vdwg.mxu0
          %2761 = vmatpush.msra.mxu0 %v2324
          %2762 = vmatpush.msra.mxu0 %v2320
          %2763 = vmatpush.msra.mxu0 %v2316
          %2764 = vmatpush.msra.mxu0 %v2312
          %2765 = vmatpush.msra.mxu0 %v2308
          %2766 = vmatpush.msra.mxu0 %v2304
          %2767 = vmatpush.msra.mxu0 %v2300
          %2768 = vmatpush.msra.mxu0 %v2296
          %2769 = vmatpush.msra.mxu0 %v2292
          %2770 = vmatpush.msra.mxu0 %v2288
          %2771 = vmatpush.msra.mxu0 %v2284
          %2772 = vmatpush.msra.mxu0 %v2280
          %2773 = vmatpush.msra.mxu0 %v2276
          %2774 = vmatpush.msra.mxu0 %v2272
          %2775 = vmatpush.msra.mxu0 %v2268
          %2776 = vmatpush.msra.mxu0 %v2264
          %2777 = vmatmul.f32.gmra.mxu0 %v1749
          %v2778 = vpop.f32.mrf.mxu0
          %v2779 = vadd.f32 %v2759, %v2778
          %2780 = vdwg.mxu0
          %2781 = vmatpush.msra.mxu0 %v2388
          %2782 = vmatpush.msra.mxu0 %v2384
          %2783 = vmatpush.msra.mxu0 %v2380
          %2784 = vmatpush.msra.mxu0 %v2376
          %2785 = vmatpush.msra.mxu0 %v2372
          %2786 = vmatpush.msra.mxu0 %v2368
          %2787 = vmatpush.msra.mxu0 %v2364
          %2788 = vmatpush.msra.mxu0 %v2360
          %2789 = vmatpush.msra.mxu0 %v2356
          %2790 = vmatpush.msra.mxu0 %v2352
          %2791 = vmatpush.msra.mxu0 %v2348
          %2792 = vmatpush.msra.mxu0 %v2344
          %2793 = vmatpush.msra.mxu0 %v2340
          %2794 = vmatpush.msra.mxu0 %v2336
          %2795 = vmatpush.msra.mxu0 %v2332
          %2796 = vmatpush.msra.mxu0 %v2328
          %2797 = vmatmul.f32.gmra.mxu0 %v1750
          %v2798 = vpop.f32.mrf.mxu0
          %v2799 = vadd.f32 %v2779, %v2798
          %2800 = vdwg.mxu0
          %2801 = vmatpush.msra.mxu0 %v1813
          %2802 = vmatpush.msra.mxu0 %v1809
          %2803 = vmatpush.msra.mxu0 %v1805
          %2804 = vmatpush.msra.mxu0 %v1801
          %2805 = vmatpush.msra.mxu0 %v1797
          %2806 = vmatpush.msra.mxu0 %v1793
          %2807 = vmatpush.msra.mxu0 %v1789
          %2808 = vmatpush.msra.mxu0 %v1785
          %2809 = vmatpush.msra.mxu0 %v1781
          %2810 = vmatpush.msra.mxu0 %v1777
          %2811 = vmatpush.msra.mxu0 %v1773
          %2812 = vmatpush.msra.mxu0 %v1769
          %2813 = vmatpush.msra.mxu0 %v1765
          %2814 = vmatpush.msra.mxu0 %v1761
          %2815 = vmatpush.msra.mxu0 %v1757
          %2816 = vmatpush.msra.mxu0 %v1753
          %2817 = vmatmul.f32.gmra.mxu0 %v1741
          %v2818 = vpop.f32.mrf.mxu0
          %v2819 = vadd.f32 %v2395, %v2818
          %2820 = vdwg.mxu0
          %2821 = vmatpush.msra.mxu0 %v1877
          %2822 = vmatpush.msra.mxu0 %v1873
          %2823 = vmatpush.msra.mxu0 %v1869
          %2824 = vmatpush.msra.mxu0 %v1865
          %2825 = vmatpush.msra.mxu0 %v1861
          %2826 = vmatpush.msra.mxu0 %v1857
          %2827 = vmatpush.msra.mxu0 %v1853
          %2828 = vmatpush.msra.mxu0 %v1849
          %2829 = vmatpush.msra.mxu0 %v1845
          %2830 = vmatpush.msra.mxu0 %v1841
          %2831 = vmatpush.msra.mxu0 %v1837
          %2832 = vmatpush.msra.mxu0 %v1833
          %2833 = vmatpush.msra.mxu0 %v1829
          %2834 = vmatpush.msra.mxu0 %v1825
          %2835 = vmatpush.msra.mxu0 %v1821
          %2836 = vmatpush.msra.mxu0 %v1817
          %2837 = vmatmul.f32.gmra.mxu0 %v1742
          %v2838 = vpop.f32.mrf.mxu0
          %v2839 = vadd.f32 %v2819, %v2838
          %2840 = vdwg.mxu0
          %2841 = vmatpush.msra.mxu0 %v1941
          %2842 = vmatpush.msra.mxu0 %v1937
          %2843 = vmatpush.msra.mxu0 %v1933
          %2844 = vmatpush.msra.mxu0 %v1929
          %2845 = vmatpush.msra.mxu0 %v1925
          %2846 = vmatpush.msra.mxu0 %v1921
          %2847 = vmatpush.msra.mxu0 %v1917
          %2848 = vmatpush.msra.mxu0 %v1913
          %2849 = vmatpush.msra.mxu0 %v1909
          %2850 = vmatpush.msra.mxu0 %v1905
          %2851 = vmatpush.msra.mxu0 %v1901
          %2852 = vmatpush.msra.mxu0 %v1897
          %2853 = vmatpush.msra.mxu0 %v1893
          %2854 = vmatpush.msra.mxu0 %v1889
          %2855 = vmatpush.msra.mxu0 %v1885
          %2856 = vmatpush.msra.mxu0 %v1881
          %2857 = vmatmul.f32.gmra.mxu0 %v1743
          %v2858 = vpop.f32.mrf.mxu0
          %v2859 = vadd.f32 %v2839, %v2858
          %2860 = vdwg.mxu0
          %2861 = vmatpush.msra.mxu0 %v2005
          %2862 = vmatpush.msra.mxu0 %v2001
          %2863 = vmatpush.msra.mxu0 %v1997
          %2864 = vmatpush.msra.mxu0 %v1993
          %2865 = vmatpush.msra.mxu0 %v1989
          %2866 = vmatpush.msra.mxu0 %v1985
          %2867 = vmatpush.msra.mxu0 %v1981
          %2868 = vmatpush.msra.mxu0 %v1977
          %2869 = vmatpush.msra.mxu0 %v1973
          %2870 = vmatpush.msra.mxu0 %v1969
          %2871 = vmatpush.msra.mxu0 %v1965
          %2872 = vmatpush.msra.mxu0 %v1961
          %2873 = vmatpush.msra.mxu0 %v1957
          %2874 = vmatpush.msra.mxu0 %v1953
          %2875 = vmatpush.msra.mxu0 %v1949
          %2876 = vmatpush.msra.mxu0 %v1945
          %2877 = vmatmul.f32.gmra.mxu0 %v1744
          %v2878 = vpop.f32.mrf.mxu0
          %v2879 = vadd.f32 %v2859, %v2878
          %2880 = vdwg.mxu0
          %2881 = vmatpush.msra.mxu0 %v2069
          %2882 = vmatpush.msra.mxu0 %v2065
          %2883 = vmatpush.msra.mxu0 %v2061
          %2884 = vmatpush.msra.mxu0 %v2057
          %2885 = vmatpush.msra.mxu0 %v2053
          %2886 = vmatpush.msra.mxu0 %v2049
          %2887 = vmatpush.msra.mxu0 %v2045
          %2888 = vmatpush.msra.mxu0 %v2041
          %2889 = vmatpush.msra.mxu0 %v2037
          %2890 = vmatpush.msra.mxu0 %v2033
          %2891 = vmatpush.msra.mxu0 %v2029
          %2892 = vmatpush.msra.mxu0 %v2025
          %2893 = vmatpush.msra.mxu0 %v2021
          %2894 = vmatpush.msra.mxu0 %v2017
          %2895 = vmatpush.msra.mxu0 %v2013
          %2896 = vmatpush.msra.mxu0 %v2009
          %2897 = vmatmul.f32.gmra.mxu0 %v1745
          %v2898 = vpop.f32.mrf.mxu0
          %v2899 = vadd.f32 %v2879, %v2898
          %2900 = vdwg.mxu0
          %2901 = vmatpush.msra.mxu0 %v2133
          %2902 = vmatpush.msra.mxu0 %v2129
          %2903 = vmatpush.msra.mxu0 %v2125
          %2904 = vmatpush.msra.mxu0 %v2121
          %2905 = vmatpush.msra.mxu0 %v2117
          %2906 = vmatpush.msra.mxu0 %v2113
          %2907 = vmatpush.msra.mxu0 %v2109
          %2908 = vmatpush.msra.mxu0 %v2105
          %2909 = vmatpush.msra.mxu0 %v2101
          %2910 = vmatpush.msra.mxu0 %v2097
          %2911 = vmatpush.msra.mxu0 %v2093
          %2912 = vmatpush.msra.mxu0 %v2089
          %2913 = vmatpush.msra.mxu0 %v2085
          %2914 = vmatpush.msra.mxu0 %v2081
          %2915 = vmatpush.msra.mxu0 %v2077
          %2916 = vmatpush.msra.mxu0 %v2073
          %2917 = vmatmul.f32.gmra.mxu0 %v1746
          %v2918 = vpop.f32.mrf.mxu0
          %v2919 = vadd.f32 %v2899, %v2918
          %2920 = vdwg.mxu0
          %2921 = vmatpush.msra.mxu0 %v2197
          %2922 = vmatpush.msra.mxu0 %v2193
          %2923 = vmatpush.msra.mxu0 %v2189
          %2924 = vmatpush.msra.mxu0 %v2185
          %2925 = vmatpush.msra.mxu0 %v2181
          %2926 = vmatpush.msra.mxu0 %v2177
          %2927 = vmatpush.msra.mxu0 %v2173
          %2928 = vmatpush.msra.mxu0 %v2169
          %2929 = vmatpush.msra.mxu0 %v2165
          %2930 = vmatpush.msra.mxu0 %v2161
          %2931 = vmatpush.msra.mxu0 %v2157
          %2932 = vmatpush.msra.mxu0 %v2153
          %2933 = vmatpush.msra.mxu0 %v2149
          %2934 = vmatpush.msra.mxu0 %v2145
          %2935 = vmatpush.msra.mxu0 %v2141
          %2936 = vmatpush.msra.mxu0 %v2137
          %2937 = vmatmul.f32.gmra.mxu0 %v1747
          %v2938 = vpop.f32.mrf.mxu0
          %v2939 = vadd.f32 %v2919, %v2938
          %2940 = vdwg.mxu0
          %2941 = vmatpush.msra.mxu0 %v2261
          %2942 = vmatpush.msra.mxu0 %v2257
          %2943 = vmatpush.msra.mxu0 %v2253
          %2944 = vmatpush.msra.mxu0 %v2249
          %2945 = vmatpush.msra.mxu0 %v2245
          %2946 = vmatpush.msra.mxu0 %v2241
          %2947 = vmatpush.msra.mxu0 %v2237
          %2948 = vmatpush.msra.mxu0 %v2233
          %2949 = vmatpush.msra.mxu0 %v2229
          %2950 = vmatpush.msra.mxu0 %v2225
          %2951 = vmatpush.msra.mxu0 %v2221
          %2952 = vmatpush.msra.mxu0 %v2217
          %2953 = vmatpush.msra.mxu0 %v2213
          %2954 = vmatpush.msra.mxu0 %v2209
          %2955 = vmatpush.msra.mxu0 %v2205
          %2956 = vmatpush.msra.mxu0 %v2201
          %2957 = vmatmul.f32.gmra.mxu0 %v1748
          %v2958 = vpop.f32.mrf.mxu0
          %v2959 = vadd.f32 %v2939, %v2958
          %2960 = vdwg.mxu0
          %2961 = vmatpush.msra.mxu0 %v2325
          %2962 = vmatpush.msra.mxu0 %v2321
          %2963 = vmatpush.msra.mxu0 %v2317
          %2964 = vmatpush.msra.mxu0 %v2313
          %2965 = vmatpush.msra.mxu0 %v2309
          %2966 = vmatpush.msra.mxu0 %v2305
          %2967 = vmatpush.msra.mxu0 %v2301
          %2968 = vmatpush.msra.mxu0 %v2297
          %2969 = vmatpush.msra.mxu0 %v2293
          %2970 = vmatpush.msra.mxu0 %v2289
          %2971 = vmatpush.msra.mxu0 %v2285
          %2972 = vmatpush.msra.mxu0 %v2281
          %2973 = vmatpush.msra.mxu0 %v2277
          %2974 = vmatpush.msra.mxu0 %v2273
          %2975 = vmatpush.msra.mxu0 %v2269
          %2976 = vmatpush.msra.mxu0 %v2265
          %2977 = vmatmul.f32.gmra.mxu0 %v1749
          %v2978 = vpop.f32.mrf.mxu0
          %v2979 = vadd.f32 %v2959, %v2978
          %2980 = vdwg.mxu0
          %2981 = vmatpush.msra.mxu0 %v2389
          %2982 = vmatpush.msra.mxu0 %v2385
          %2983 = vmatpush.msra.mxu0 %v2381
          %2984 = vmatpush.msra.mxu0 %v2377
          %2985 = vmatpush.msra.mxu0 %v2373
          %2986 = vmatpush.msra.mxu0 %v2369
          %2987 = vmatpush.msra.mxu0 %v2365
          %2988 = vmatpush.msra.mxu0 %v2361
          %2989 = vmatpush.msra.mxu0 %v2357
          %2990 = vmatpush.msra.mxu0 %v2353
          %2991 = vmatpush.msra.mxu0 %v2349
          %2992 = vmatpush.msra.mxu0 %v2345
          %2993 = vmatpush.msra.mxu0 %v2341
          %2994 = vmatpush.msra.mxu0 %v2337
          %2995 = vmatpush.msra.mxu0 %v2333
          %2996 = vmatpush.msra.mxu0 %v2329
          %2997 = vmatmul.f32.gmra.mxu0 %v1750
          %v2998 = vpop.f32.mrf.mxu0
          %v2999 = vadd.f32 %v2979, %v2998
          %3000 = vdwg.mxu0
          %3001 = vmatpush.msra.mxu0 %v1814
          %3002 = vmatpush.msra.mxu0 %v1810
          %3003 = vmatpush.msra.mxu0 %v1806
          %3004 = vmatpush.msra.mxu0 %v1802
          %3005 = vmatpush.msra.mxu0 %v1798
          %3006 = vmatpush.msra.mxu0 %v1794
          %3007 = vmatpush.msra.mxu0 %v1790
          %3008 = vmatpush.msra.mxu0 %v1786
          %3009 = vmatpush.msra.mxu0 %v1782
          %3010 = vmatpush.msra.mxu0 %v1778
          %3011 = vmatpush.msra.mxu0 %v1774
          %3012 = vmatpush.msra.mxu0 %v1770
          %3013 = vmatpush.msra.mxu0 %v1766
          %3014 = vmatpush.msra.mxu0 %v1762
          %3015 = vmatpush.msra.mxu0 %v1758
          %3016 = vmatpush.msra.mxu0 %v1754
          %3017 = vmatmul.f32.gmra.mxu0 %v1741
          %v3018 = vpop.f32.mrf.mxu0
          %v3019 = vadd.f32 %v2396, %v3018
          %3020 = vdwg.mxu0
          %3021 = vmatpush.msra.mxu0 %v1878
          %3022 = vmatpush.msra.mxu0 %v1874
          %3023 = vmatpush.msra.mxu0 %v1870
          %3024 = vmatpush.msra.mxu0 %v1866
          %3025 = vmatpush.msra.mxu0 %v1862
          %3026 = vmatpush.msra.mxu0 %v1858
          %3027 = vmatpush.msra.mxu0 %v1854
          %3028 = vmatpush.msra.mxu0 %v1850
          %3029 = vmatpush.msra.mxu0 %v1846
          %3030 = vmatpush.msra.mxu0 %v1842
          %3031 = vmatpush.msra.mxu0 %v1838
          %3032 = vmatpush.msra.mxu0 %v1834
          %3033 = vmatpush.msra.mxu0 %v1830
          %3034 = vmatpush.msra.mxu0 %v1826
          %3035 = vmatpush.msra.mxu0 %v1822
          %3036 = vmatpush.msra.mxu0 %v1818
          %3037 = vmatmul.f32.gmra.mxu0 %v1742
          %v3038 = vpop.f32.mrf.mxu0
          %v3039 = vadd.f32 %v3019, %v3038
          %3040 = vdwg.mxu0
          %3041 = vmatpush.msra.mxu0 %v1942
          %3042 = vmatpush.msra.mxu0 %v1938
          %3043 = vmatpush.msra.mxu0 %v1934
          %3044 = vmatpush.msra.mxu0 %v1930
          %3045 = vmatpush.msra.mxu0 %v1926
          %3046 = vmatpush.msra.mxu0 %v1922
          %3047 = vmatpush.msra.mxu0 %v1918
          %3048 = vmatpush.msra.mxu0 %v1914
          %3049 = vmatpush.msra.mxu0 %v1910
          %3050 = vmatpush.msra.mxu0 %v1906
          %3051 = vmatpush.msra.mxu0 %v1902
          %3052 = vmatpush.msra.mxu0 %v1898
          %3053 = vmatpush.msra.mxu0 %v1894
          %3054 = vmatpush.msra.mxu0 %v1890
          %3055 = vmatpush.msra.mxu0 %v1886
          %3056 = vmatpush.msra.mxu0 %v1882
          %3057 = vmatmul.f32.gmra.mxu0 %v1743
          %v3058 = vpop.f32.mrf.mxu0
          %v3059 = vadd.f32 %v3039, %v3058
          %3060 = vdwg.mxu0
          %3061 = vmatpush.msra.mxu0 %v2006
          %3062 = vmatpush.msra.mxu0 %v2002
          %3063 = vmatpush.msra.mxu0 %v1998
          %3064 = vmatpush.msra.mxu0 %v1994
          %3065 = vmatpush.msra.mxu0 %v1990
          %3066 = vmatpush.msra.mxu0 %v1986
          %3067 = vmatpush.msra.mxu0 %v1982
          %3068 = vmatpush.msra.mxu0 %v1978
          %3069 = vmatpush.msra.mxu0 %v1974
          %3070 = vmatpush.msra.mxu0 %v1970
          %3071 = vmatpush.msra.mxu0 %v1966
          %3072 = vmatpush.msra.mxu0 %v1962
          %3073 = vmatpush.msra.mxu0 %v1958
          %3074 = vmatpush.msra.mxu0 %v1954
          %3075 = vmatpush.msra.mxu0 %v1950
          %3076 = vmatpush.msra.mxu0 %v1946
          %3077 = vmatmul.f32.gmra.mxu0 %v1744
          %v3078 = vpop.f32.mrf.mxu0
          %v3079 = vadd.f32 %v3059, %v3078
          %3080 = vdwg.mxu0
          %3081 = vmatpush.msra.mxu0 %v2070
          %3082 = vmatpush.msra.mxu0 %v2066
          %3083 = vmatpush.msra.mxu0 %v2062
          %3084 = vmatpush.msra.mxu0 %v2058
          %3085 = vmatpush.msra.mxu0 %v2054
          %3086 = vmatpush.msra.mxu0 %v2050
          %3087 = vmatpush.msra.mxu0 %v2046
          %3088 = vmatpush.msra.mxu0 %v2042
          %3089 = vmatpush.msra.mxu0 %v2038
          %3090 = vmatpush.msra.mxu0 %v2034
          %3091 = vmatpush.msra.mxu0 %v2030
          %3092 = vmatpush.msra.mxu0 %v2026
          %3093 = vmatpush.msra.mxu0 %v2022
          %3094 = vmatpush.msra.mxu0 %v2018
          %3095 = vmatpush.msra.mxu0 %v2014
          %3096 = vmatpush.msra.mxu0 %v2010
          %3097 = vmatmul.f32.gmra.mxu0 %v1745
          %v3098 = vpop.f32.mrf.mxu0
          %v3099 = vadd.f32 %v3079, %v3098
          %3100 = vdwg.mxu0
          %3101 = vmatpush.msra.mxu0 %v2134
          %3102 = vmatpush.msra.mxu0 %v2130
          %3103 = vmatpush.msra.mxu0 %v2126
          %3104 = vmatpush.msra.mxu0 %v2122
          %3105 = vmatpush.msra.mxu0 %v2118
          %3106 = vmatpush.msra.mxu0 %v2114
          %3107 = vmatpush.msra.mxu0 %v2110
          %3108 = vmatpush.msra.mxu0 %v2106
          %3109 = vmatpush.msra.mxu0 %v2102
          %3110 = vmatpush.msra.mxu0 %v2098
          %3111 = vmatpush.msra.mxu0 %v2094
          %3112 = vmatpush.msra.mxu0 %v2090
          %3113 = vmatpush.msra.mxu0 %v2086
          %3114 = vmatpush.msra.mxu0 %v2082
          %3115 = vmatpush.msra.mxu0 %v2078
          %3116 = vmatpush.msra.mxu0 %v2074
          %3117 = vmatmul.f32.gmra.mxu0 %v1746
          %v3118 = vpop.f32.mrf.mxu0
          %v3119 = vadd.f32 %v3099, %v3118
          %3120 = vdwg.mxu0
          %3121 = vmatpush.msra.mxu0 %v2198
          %3122 = vmatpush.msra.mxu0 %v2194
          %3123 = vmatpush.msra.mxu0 %v2190
          %3124 = vmatpush.msra.mxu0 %v2186
          %3125 = vmatpush.msra.mxu0 %v2182
          %3126 = vmatpush.msra.mxu0 %v2178
          %3127 = vmatpush.msra.mxu0 %v2174
          %3128 = vmatpush.msra.mxu0 %v2170
          %3129 = vmatpush.msra.mxu0 %v2166
          %3130 = vmatpush.msra.mxu0 %v2162
          %3131 = vmatpush.msra.mxu0 %v2158
          %3132 = vmatpush.msra.mxu0 %v2154
          %3133 = vmatpush.msra.mxu0 %v2150
          %3134 = vmatpush.msra.mxu0 %v2146
          %3135 = vmatpush.msra.mxu0 %v2142
          %3136 = vmatpush.msra.mxu0 %v2138
          %3137 = vmatmul.f32.gmra.mxu0 %v1747
          %v3138 = vpop.f32.mrf.mxu0
          %v3139 = vadd.f32 %v3119, %v3138
          %3140 = vdwg.mxu0
          %3141 = vmatpush.msra.mxu0 %v2262
          %3142 = vmatpush.msra.mxu0 %v2258
          %3143 = vmatpush.msra.mxu0 %v2254
          %3144 = vmatpush.msra.mxu0 %v2250
          %3145 = vmatpush.msra.mxu0 %v2246
          %3146 = vmatpush.msra.mxu0 %v2242
          %3147 = vmatpush.msra.mxu0 %v2238
          %3148 = vmatpush.msra.mxu0 %v2234
          %3149 = vmatpush.msra.mxu0 %v2230
          %3150 = vmatpush.msra.mxu0 %v2226
          %3151 = vmatpush.msra.mxu0 %v2222
          %3152 = vmatpush.msra.mxu0 %v2218
          %3153 = vmatpush.msra.mxu0 %v2214
          %3154 = vmatpush.msra.mxu0 %v2210
          %3155 = vmatpush.msra.mxu0 %v2206
          %3156 = vmatpush.msra.mxu0 %v2202
          %3157 = vmatmul.f32.gmra.mxu0 %v1748
          %v3158 = vpop.f32.mrf.mxu0
          %v3159 = vadd.f32 %v3139, %v3158
          %3160 = vdwg.mxu0
          %3161 = vmatpush.msra.mxu0 %v2326
          %3162 = vmatpush.msra.mxu0 %v2322
          %3163 = vmatpush.msra.mxu0 %v2318
          %3164 = vmatpush.msra.mxu0 %v2314
          %3165 = vmatpush.msra.mxu0 %v2310
          %3166 = vmatpush.msra.mxu0 %v2306
          %3167 = vmatpush.msra.mxu0 %v2302
          %3168 = vmatpush.msra.mxu0 %v2298
          %3169 = vmatpush.msra.mxu0 %v2294
          %3170 = vmatpush.msra.mxu0 %v2290
          %3171 = vmatpush.msra.mxu0 %v2286
          %3172 = vmatpush.msra.mxu0 %v2282
          %3173 = vmatpush.msra.mxu0 %v2278
          %3174 = vmatpush.msra.mxu0 %v2274
          %3175 = vmatpush.msra.mxu0 %v2270
          %3176 = vmatpush.msra.mxu0 %v2266
          %3177 = vmatmul.f32.gmra.mxu0 %v1749
          %v3178 = vpop.f32.mrf.mxu0
          %v3179 = vadd.f32 %v3159, %v3178
          %3180 = vdwg.mxu0
          %3181 = vmatpush.msra.mxu0 %v2390
          %3182 = vmatpush.msra.mxu0 %v2386
          %3183 = vmatpush.msra.mxu0 %v2382
          %3184 = vmatpush.msra.mxu0 %v2378
          %3185 = vmatpush.msra.mxu0 %v2374
          %3186 = vmatpush.msra.mxu0 %v2370
          %3187 = vmatpush.msra.mxu0 %v2366
          %3188 = vmatpush.msra.mxu0 %v2362
          %3189 = vmatpush.msra.mxu0 %v2358
          %3190 = vmatpush.msra.mxu0 %v2354
          %3191 = vmatpush.msra.mxu0 %v2350
          %3192 = vmatpush.msra.mxu0 %v2346
          %3193 = vmatpush.msra.mxu0 %v2342
          %3194 = vmatpush.msra.mxu0 %v2338
          %3195 = vmatpush.msra.mxu0 %v2334
          %3196 = vmatpush.msra.mxu0 %v2330
          %3197 = vmatmul.f32.gmra.mxu0 %v1750
          %v3198 = vpop.f32.mrf.mxu0
          %v3199 = vadd.f32 %v3179, %v3198
          %3200 = vdwg.mxu0
          %v3201 = vmax.f32 %v2599, 0.0
          %v3202 = vmax.f32 %v2799, 0.0
          %v3203 = vmax.f32 %v2999, 0.0
          %v3204 = vmax.f32 %v3199, 0.0
          %v3205 = vld [vmem:[#allocation14] sm:$0xff]
          %v3206 = vld [vmem:[#allocation14 + $0x8] sm:$0xff]
          %v3207 = vld [vmem:[#allocation14 + $0x10] sm:$0xff]
          %v3208 = vld [vmem:[#allocation14 + $0x18] sm:$0xff]
          %v3209 = vld [vmem:[#allocation14 + $0x20] sm:$0xff]
          %v3210 = vld [vmem:[#allocation14 + $0x28] sm:$0xff]
          %v3211 = vld [vmem:[#allocation14 + $0x30] sm:$0xff]
          %v3212 = vld [vmem:[#allocation14 + $0x38] sm:$0xff]
          %v3213 = vld [vmem:[#allocation14 + $0x40] sm:$0xff]
          %v3214 = vld [vmem:[#allocation14 + $0x48] sm:$0xff]
          %v3215 = vld [vmem:[#allocation14 + $0x50] sm:$0xff]
          %v3216 = vld [vmem:[#allocation14 + $0x58] sm:$0xff]
          %v3217 = vld [vmem:[#allocation14 + $0x60] sm:$0xff]
          %v3218 = vld [vmem:[#allocation14 + $0x68] sm:$0xff]
          %v3219 = vld [vmem:[#allocation14 + $0x70] sm:$0xff]
          %v3220 = vld [vmem:[#allocation14 + $0x78] sm:$0xff]
          %v3221 = vld [vmem:[#allocation14 + $0x80] sm:$0xff]
          %v3222 = vld [vmem:[#allocation14 + $0x88] sm:$0xff]
          %v3223 = vld [vmem:[#allocation14 + $0x90] sm:$0xff]
          %v3224 = vld [vmem:[#allocation14 + $0x98] sm:$0xff]
          %v3225 = vld [vmem:[#allocation14 + $0xa0] sm:$0xff]
          %v3226 = vld [vmem:[#allocation14 + $0xa8] sm:$0xff]
          %v3227 = vld [vmem:[#allocation14 + $0xb0] sm:$0xff]
          %v3228 = vld [vmem:[#allocation14 + $0xb8] sm:$0xff]
          %v3229 = vld [vmem:[#allocation14 + $0xc0] sm:$0xff]
          %v3230 = vld [vmem:[#allocation14 + $0xc8] sm:$0xff]
          %v3231 = vld [vmem:[#allocation14 + $0xd0] sm:$0xff]
          %v3232 = vld [vmem:[#allocation14 + $0xd8] sm:$0xff]
          %v3233 = vld [vmem:[#allocation14 + $0xe0] sm:$0xff]
          %v3234 = vld [vmem:[#allocation14 + $0xe8] sm:$0xff]
          %v3235 = vld [vmem:[#allocation14 + $0xf0] sm:$0xff]
          %v3236 = vld [vmem:[#allocation14 + $0xf8] sm:$0xff]
          %v3237 = vld [vmem:[#allocation14 + $0x100] sm:$0xff]
          %v3238 = vld [vmem:[#allocation14 + $0x108] sm:$0xff]
          %v3239 = vld [vmem:[#allocation14 + $0x110] sm:$0xff]
          %v3240 = vld [vmem:[#allocation14 + $0x118] sm:$0xff]
          %v3241 = vld [vmem:[#allocation14 + $0x120] sm:$0xff]
          %v3242 = vld [vmem:[#allocation14 + $0x128] sm:$0xff]
          %v3243 = vld [vmem:[#allocation14 + $0x130] sm:$0xff]
          %v3244 = vld [vmem:[#allocation14 + $0x138] sm:$0xff]
          %v3245 = vld [vmem:[#allocation14 + $0x140] sm:$0xff]
          %v3246 = vld [vmem:[#allocation14 + $0x148] sm:$0xff]
          %v3247 = vld [vmem:[#allocation14 + $0x150] sm:$0xff]
          %v3248 = vld [vmem:[#allocation14 + $0x158] sm:$0xff]
          %v3249 = vld [vmem:[#allocation14 + $0x160] sm:$0xff]
          %v3250 = vld [vmem:[#allocation14 + $0x168] sm:$0xff]
          %v3251 = vld [vmem:[#allocation14 + $0x170] sm:$0xff]
          %v3252 = vld [vmem:[#allocation14 + $0x178] sm:$0xff]
          %v3253 = vld [vmem:[#allocation14 + $0x180] sm:$0xff]
          %v3254 = vld [vmem:[#allocation14 + $0x188] sm:$0xff]
          %v3255 = vld [vmem:[#allocation14 + $0x190] sm:$0xff]
          %v3256 = vld [vmem:[#allocation14 + $0x198] sm:$0xff]
          %v3257 = vld [vmem:[#allocation14 + $0x1a0] sm:$0xff]
          %v3258 = vld [vmem:[#allocation14 + $0x1a8] sm:$0xff]
          %v3259 = vld [vmem:[#allocation14 + $0x1b0] sm:$0xff]
          %v3260 = vld [vmem:[#allocation14 + $0x1b8] sm:$0xff]
          %v3261 = vld [vmem:[#allocation14 + $0x1c0] sm:$0xff]
          %v3262 = vld [vmem:[#allocation14 + $0x1c8] sm:$0xff]
          %v3263 = vld [vmem:[#allocation14 + $0x1d0] sm:$0xff]
          %v3264 = vld [vmem:[#allocation14 + $0x1d8] sm:$0xff]
          %v3265 = vld [vmem:[#allocation14 + $0x1e0] sm:$0xff]
          %v3266 = vld [vmem:[#allocation14 + $0x1e8] sm:$0xff]
          %v3267 = vld [vmem:[#allocation14 + $0x1f0] sm:$0xff]
          %v3268 = vld [vmem:[#allocation14 + $0x1f8] sm:$0xff]
          %v3269 = vld [vmem:[#allocation14 + $0x200] sm:$0xff]
          %v3270 = vld [vmem:[#allocation14 + $0x208] sm:$0xff]
          %v3271 = vld [vmem:[#allocation14 + $0x210] sm:$0xff]
          %v3272 = vld [vmem:[#allocation14 + $0x218] sm:$0xff]
          %v3273 = vld [vmem:[#allocation14 + $0x220] sm:$0xff]
          %v3274 = vld [vmem:[#allocation14 + $0x228] sm:$0xff]
          %v3275 = vld [vmem:[#allocation14 + $0x230] sm:$0xff]
          %v3276 = vld [vmem:[#allocation14 + $0x238] sm:$0xff]
          %v3277 = vld [vmem:[#allocation14 + $0x240] sm:$0xff]
          %v3278 = vld [vmem:[#allocation14 + $0x248] sm:$0xff]
          %v3279 = vld [vmem:[#allocation14 + $0x250] sm:$0xff]
          %v3280 = vld [vmem:[#allocation14 + $0x258] sm:$0xff]
          %v3281 = vld [vmem:[#allocation14 + $0x260] sm:$0xff]
          %v3282 = vld [vmem:[#allocation14 + $0x268] sm:$0xff]
          %v3283 = vld [vmem:[#allocation14 + $0x270] sm:$0xff]
          %v3284 = vld [vmem:[#allocation14 + $0x278] sm:$0xff]
          %v3285 = vld [vmem:[#allocation14 + $0x280] sm:$0xff]
          %v3286 = vld [vmem:[#allocation14 + $0x288] sm:$0xff]
          %v3287 = vld [vmem:[#allocation14 + $0x290] sm:$0xff]
          %v3288 = vld [vmem:[#allocation14 + $0x298] sm:$0xff]
          %v3289 = vld [vmem:[#allocation14 + $0x2a0] sm:$0xff]
          %v3290 = vld [vmem:[#allocation14 + $0x2a8] sm:$0xff]
          %v3291 = vld [vmem:[#allocation14 + $0x2b0] sm:$0xff]
          %v3292 = vld [vmem:[#allocation14 + $0x2b8] sm:$0xff]
          %v3293 = vld [vmem:[#allocation14 + $0x2c0] sm:$0xff]
          %v3294 = vld [vmem:[#allocation14 + $0x2c8] sm:$0xff]
          %v3295 = vld [vmem:[#allocation14 + $0x2d0] sm:$0xff]
          %v3296 = vld [vmem:[#allocation14 + $0x2d8] sm:$0xff]
          %v3297 = vld [vmem:[#allocation14 + $0x2e0] sm:$0xff]
          %v3298 = vld [vmem:[#allocation14 + $0x2e8] sm:$0xff]
          %v3299 = vld [vmem:[#allocation14 + $0x2f0] sm:$0xff]
          %v3300 = vld [vmem:[#allocation14 + $0x2f8] sm:$0xff]
          %v3301 = vld [vmem:[#allocation14 + $0x300] sm:$0xff]
          %v3302 = vld [vmem:[#allocation14 + $0x308] sm:$0xff]
          %v3303 = vld [vmem:[#allocation14 + $0x310] sm:$0xff]
          %v3304 = vld [vmem:[#allocation14 + $0x318] sm:$0xff]
          %v3305 = vld [vmem:[#allocation14 + $0x320] sm:$0xff]
          %v3306 = vld [vmem:[#allocation14 + $0x328] sm:$0xff]
          %v3307 = vld [vmem:[#allocation14 + $0x330] sm:$0xff]
          %v3308 = vld [vmem:[#allocation14 + $0x338] sm:$0xff]
          %v3309 = vld [vmem:[#allocation14 + $0x340] sm:$0xff]
          %v3310 = vld [vmem:[#allocation14 + $0x348] sm:$0xff]
          %v3311 = vld [vmem:[#allocation14 + $0x350] sm:$0xff]
          %v3312 = vld [vmem:[#allocation14 + $0x358] sm:$0xff]
          %v3313 = vld [vmem:[#allocation14 + $0x360] sm:$0xff]
          %v3314 = vld [vmem:[#allocation14 + $0x368] sm:$0xff]
          %v3315 = vld [vmem:[#allocation14 + $0x370] sm:$0xff]
          %v3316 = vld [vmem:[#allocation14 + $0x378] sm:$0xff]
          %v3317 = vld [vmem:[#allocation14 + $0x380] sm:$0xff]
          %v3318 = vld [vmem:[#allocation14 + $0x388] sm:$0xff]
          %v3319 = vld [vmem:[#allocation14 + $0x390] sm:$0xff]
          %v3320 = vld [vmem:[#allocation14 + $0x398] sm:$0xff]
          %v3321 = vld [vmem:[#allocation14 + $0x3a0] sm:$0xff]
          %v3322 = vld [vmem:[#allocation14 + $0x3a8] sm:$0xff]
          %v3323 = vld [vmem:[#allocation14 + $0x3b0] sm:$0xff]
          %v3324 = vld [vmem:[#allocation14 + $0x3b8] sm:$0xff]
          %v3325 = vld [vmem:[#allocation14 + $0x3c0] sm:$0xff]
          %v3326 = vld [vmem:[#allocation14 + $0x3c8] sm:$0xff]
          %v3327 = vld [vmem:[#allocation14 + $0x3d0] sm:$0xff]
          %v3328 = vld [vmem:[#allocation14 + $0x3d8] sm:$0xff]
          %v3329 = vld [vmem:[#allocation14 + $0x3e0] sm:$0xff]
          %v3330 = vld [vmem:[#allocation14 + $0x3e8] sm:$0xff]
          %v3331 = vld [vmem:[#allocation14 + $0x3f0] sm:$0xff]
          %v3332 = vld [vmem:[#allocation14 + $0x3f8] sm:$0xff]
          %v3333 = vld [vmem:[#allocation15] sm:$0x3]
          %v3335 = vperm.slane %v3333, 0
          %v3336 = vperm.slane %v3333, 1
          %3339 = vmatpush.msra.mxu0 %v3235
          %3340 = vmatpush.msra.mxu0 %v3233
          %3341 = vmatpush.msra.mxu0 %v3231
          %3342 = vmatpush.msra.mxu0 %v3229
          %3343 = vmatpush.msra.mxu0 %v3227
          %3344 = vmatpush.msra.mxu0 %v3225
          %3345 = vmatpush.msra.mxu0 %v3223
          %3346 = vmatpush.msra.mxu0 %v3221
          %3347 = vmatpush.msra.mxu0 %v3219
          %3348 = vmatpush.msra.mxu0 %v3217
          %3349 = vmatpush.msra.mxu0 %v3215
          %3350 = vmatpush.msra.mxu0 %v3213
          %3351 = vmatpush.msra.mxu0 %v3211
          %3352 = vmatpush.msra.mxu0 %v3209
          %3353 = vmatpush.msra.mxu0 %v3207
          %3354 = vmatpush.msra.mxu0 %v3205
          %3355 = vmatmul.f32.gmra.mxu0 %v3201
          %v3356 = vpop.f32.mrf.mxu0
          %v3357 = vadd.f32 %v3335, %v3356
          %3358 = vdwg.mxu0
          %3359 = vmatpush.msra.mxu0 %v3267
          %3360 = vmatpush.msra.mxu0 %v3265
          %3361 = vmatpush.msra.mxu0 %v3263
          %3362 = vmatpush.msra.mxu0 %v3261
          %3363 = vmatpush.msra.mxu0 %v3259
          %3364 = vmatpush.msra.mxu0 %v3257
          %3365 = vmatpush.msra.mxu0 %v3255
          %3366 = vmatpush.msra.mxu0 %v3253
          %3367 = vmatpush.msra.mxu0 %v3251
          %3368 = vmatpush.msra.mxu0 %v3249
          %3369 = vmatpush.msra.mxu0 %v3247
          %3370 = vmatpush.msra.mxu0 %v3245
          %3371 = vmatpush.msra.mxu0 %v3243
          %3372 = vmatpush.msra.mxu0 %v3241
          %3373 = vmatpush.msra.mxu0 %v3239
          %3374 = vmatpush.msra.mxu0 %v3237
          %3375 = vmatmul.f32.gmra.mxu0 %v3202
          %v3376 = vpop.f32.mrf.mxu0
          %v3377 = vadd.f32 %v3357, %v3376
          %3378 = vdwg.mxu0
          %3379 = vmatpush.msra.mxu0 %v3299
          %3380 = vmatpush.msra.mxu0 %v3297
          %3381 = vmatpush.msra.mxu0 %v3295
          %3382 = vmatpush.msra.mxu0 %v3293
          %3383 = vmatpush.msra.mxu0 %v3291
          %3384 = vmatpush.msra.mxu0 %v3289
          %3385 = vmatpush.msra.mxu0 %v3287
          %3386 = vmatpush.msra.mxu0 %v3285
          %3387 = vmatpush.msra.mxu0 %v3283
          %3388 = vmatpush.msra.mxu0 %v3281
          %3389 = vmatpush.msra.mxu0 %v3279
          %3390 = vmatpush.msra.mxu0 %v3277
          %3391 = vmatpush.msra.mxu0 %v3275
          %3392 = vmatpush.msra.mxu0 %v3273
          %3393 = vmatpush.msra.mxu0 %v3271
          %3394 = vmatpush.msra.mxu0 %v3269
          %3395 = vmatmul.f32.gmra.mxu0 %v3203
          %v3396 = vpop.f32.mrf.mxu0
          %v3397 = vadd.f32 %v3377, %v3396
          %3398 = vdwg.mxu0
          %3399 = vmatpush.msra.mxu0 %v3331
          %3400 = vmatpush.msra.mxu0 %v3329
          %3401 = vmatpush.msra.mxu0 %v3327
          %3402 = vmatpush.msra.mxu0 %v3325
          %3403 = vmatpush.msra.mxu0 %v3323
          %3404 = vmatpush.msra.mxu0 %v3321
          %3405 = vmatpush.msra.mxu0 %v3319
          %3406 = vmatpush.msra.mxu0 %v3317
          %3407 = vmatpush.msra.mxu0 %v3315
          %3408 = vmatpush.msra.mxu0 %v3313
          %3409 = vmatpush.msra.mxu0 %v3311
          %3410 = vmatpush.msra.mxu0 %v3309
          %3411 = vmatpush.msra.mxu0 %v3307
          %3412 = vmatpush.msra.mxu0 %v3305
          %3413 = vmatpush.msra.mxu0 %v3303
          %3414 = vmatpush.msra.mxu0 %v3301
          %3415 = vmatmul.f32.gmra.mxu0 %v3204
          %v3416 = vpop.f32.mrf.mxu0
          %v3417 = vadd.f32 %v3397, %v3416
          %3418 = vdwg.mxu0
          %3419 = vmatpush.msra.mxu0 %v3236
          %3420 = vmatpush.msra.mxu0 %v3234
          %3421 = vmatpush.msra.mxu0 %v3232
          %3422 = vmatpush.msra.mxu0 %v3230
          %3423 = vmatpush.msra.mxu0 %v3228
          %3424 = vmatpush.msra.mxu0 %v3226
          %3425 = vmatpush.msra.mxu0 %v3224
          %3426 = vmatpush.msra.mxu0 %v3222
          %3427 = vmatpush.msra.mxu0 %v3220
          %3428 = vmatpush.msra.mxu0 %v3218
          %3429 = vmatpush.msra.mxu0 %v3216
          %3430 = vmatpush.msra.mxu0 %v3214
          %3431 = vmatpush.msra.mxu0 %v3212
          %3432 = vmatpush.msra.mxu0 %v3210
          %3433 = vmatpush.msra.mxu0 %v3208
          %3434 = vmatpush.msra.mxu0 %v3206
          %3435 = vmatmul.f32.gmra.mxu0 %v3201
          %v3436 = vpop.f32.mrf.mxu0
          %v3437 = vadd.f32 %v3336, %v3436
          %3438 = vdwg.mxu0
          %3439 = vmatpush.msra.mxu0 %v3268
          %3440 = vmatpush.msra.mxu0 %v3266
          %3441 = vmatpush.msra.mxu0 %v3264
          %3442 = vmatpush.msra.mxu0 %v3262
          %3443 = vmatpush.msra.mxu0 %v3260
          %3444 = vmatpush.msra.mxu0 %v3258
          %3445 = vmatpush.msra.mxu0 %v3256
          %3446 = vmatpush.msra.mxu0 %v3254
          %3447 = vmatpush.msra.mxu0 %v3252
          %3448 = vmatpush.msra.mxu0 %v3250
          %3449 = vmatpush.msra.mxu0 %v3248
          %3450 = vmatpush.msra.mxu0 %v3246
          %3451 = vmatpush.msra.mxu0 %v3244
          %3452 = vmatpush.msra.mxu0 %v3242
          %3453 = vmatpush.msra.mxu0 %v3240
          %3454 = vmatpush.msra.mxu0 %v3238
          %3455 = vmatmul.f32.gmra.mxu0 %v3202
          %v3456 = vpop.f32.mrf.mxu0
          %v3457 = vadd.f32 %v3437, %v3456
          %3458 = vdwg.mxu0
          %3459 = vmatpush.msra.mxu0 %v3300
          %3460 = vmatpush.msra.mxu0 %v3298
          %3461 = vmatpush.msra.mxu0 %v3296
          %3462 = vmatpush.msra.mxu0 %v3294
          %3463 = vmatpush.msra.mxu0 %v3292
          %3464 = vmatpush.msra.mxu0 %v3290
          %3465 = vmatpush.msra.mxu0 %v3288
          %3466 = vmatpush.msra.mxu0 %v3286
          %3467 = vmatpush.msra.mxu0 %v3284
          %3468 = vmatpush.msra.mxu0 %v3282
          %3469 = vmatpush.msra.mxu0 %v3280
          %3470 = vmatpush.msra.mxu0 %v3278
          %3471 = vmatpush.msra.mxu0 %v3276
          %3472 = vmatpush.msra.mxu0 %v3274
          %3473 = vmatpush.msra.mxu0 %v3272
          %3474 = vmatpush.msra.mxu0 %v3270
          %3475 = vmatmul.f32.gmra.mxu0 %v3203
          %v3476 = vpop.f32.mrf.mxu0
          %v3477 = vadd.f32 %v3457, %v3476
          %3478 = vdwg.mxu0
          %3479 = vmatpush.msra.mxu0 %v3332
          %3480 = vmatpush.msra.mxu0 %v3330
          %3481 = vmatpush.msra.mxu0 %v3328
          %3482 = vmatpush.msra.mxu0 %v3326
          %3483 = vmatpush.msra.mxu0 %v3324
          %3484 = vmatpush.msra.mxu0 %v3322
          %3485 = vmatpush.msra.mxu0 %v3320
          %3486 = vmatpush.msra.mxu0 %v3318
          %3487 = vmatpush.msra.mxu0 %v3316
          %3488 = vmatpush.msra.mxu0 %v3314
          %3489 = vmatpush.msra.mxu0 %v3312
          %3490 = vmatpush.msra.mxu0 %v3310
          %3491 = vmatpush.msra.mxu0 %v3308
          %3492 = vmatpush.msra.mxu0 %v3306
          %3493 = vmatpush.msra.mxu0 %v3304
          %3494 = vmatpush.msra.mxu0 %v3302
          %3495 = vmatmul.f32.gmra.mxu0 %v3204
          %v3496 = vpop.f32.mrf.mxu0
          %v3497 = vadd.f32 %v3477, %v3496
          %3498 = vdwg.mxu0
          %v3499 = vmax.f32 %v3417, 0.0
          %v3500 = vmax.f32 %v3497, 0.0
          %v3501 = vld [vmem:[#allocation17] sm:$0xff]
          %v3502 = vld [vmem:[#allocation17 + $0x8] sm:$0xff]
          %v3503 = vld [vmem:[#allocation17 + $0x10] sm:$0xff]
          %v3504 = vld [vmem:[#allocation17 + $0x18] sm:$0xff]
          %v3505 = vld [vmem:[#allocation17 + $0x20] sm:$0xff]
          %v3506 = vld [vmem:[#allocation17 + $0x28] sm:$0xff]
          %v3507 = vld [vmem:[#allocation17 + $0x30] sm:$0xff]
          %v3508 = vld [vmem:[#allocation17 + $0x38] sm:$0xff]
          %v3509 = vld [vmem:[#allocation17 + $0x40] sm:$0xff]
          %v3510 = vld [vmem:[#allocation17 + $0x48] sm:$0xff]
          %v3511 = vld [vmem:[#allocation17 + $0x50] sm:$0xff]
          %v3512 = vld [vmem:[#allocation17 + $0x58] sm:$0xff]
          %v3513 = vld [vmem:[#allocation17 + $0x60] sm:$0xff]
          %v3514 = vld [vmem:[#allocation17 + $0x68] sm:$0xff]
          %v3515 = vld [vmem:[#allocation17 + $0x70] sm:$0xff]
          %v3516 = vld [vmem:[#allocation17 + $0x78] sm:$0xff]
          %v3517 = vld [vmem:[#allocation17 + $0x80] sm:$0xff]
          %v3518 = vld [vmem:[#allocation17 + $0x88] sm:$0xff]
          %v3519 = vld [vmem:[#allocation17 + $0x90] sm:$0xff]
          %v3520 = vld [vmem:[#allocation17 + $0x98] sm:$0xff]
          %v3521 = vld [vmem:[#allocation17 + $0xa0] sm:$0xff]
          %v3522 = vld [vmem:[#allocation17 + $0xa8] sm:$0xff]
          %v3523 = vld [vmem:[#allocation17 + $0xb0] sm:$0xff]
          %v3524 = vld [vmem:[#allocation17 + $0xb8] sm:$0xff]
          %v3525 = vld [vmem:[#allocation17 + $0xc0] sm:$0xff]
          %v3526 = vld [vmem:[#allocation17 + $0xc8] sm:$0xff]
          %v3527 = vld [vmem:[#allocation17 + $0xd0] sm:$0xff]
          %v3528 = vld [vmem:[#allocation17 + $0xd8] sm:$0xff]
          %v3529 = vld [vmem:[#allocation17 + $0xe0] sm:$0xff]
          %v3530 = vld [vmem:[#allocation17 + $0xe8] sm:$0xff]
          %v3531 = vld [vmem:[#allocation17 + $0xf0] sm:$0xff]
          %v3532 = vld [vmem:[#allocation17 + $0xf8] sm:$0xff]
          %v3533 = vld [vmem:[#allocation18] sm:$0x1]
          %v3535 = vperm.slane %v3533, 0
          %3537 = vmatpush.msra.mxu0 %v3516
          %3538 = vmatpush.msra.mxu0 %v3515
          %3539 = vmatpush.msra.mxu0 %v3514
          %3540 = vmatpush.msra.mxu0 %v3513
          %3541 = vmatpush.msra.mxu0 %v3512
          %3542 = vmatpush.msra.mxu0 %v3511
          %3543 = vmatpush.msra.mxu0 %v3510
          %3544 = vmatpush.msra.mxu0 %v3509
          %3545 = vmatpush.msra.mxu0 %v3508
          %3546 = vmatpush.msra.mxu0 %v3507
          %3547 = vmatpush.msra.mxu0 %v3506
          %3548 = vmatpush.msra.mxu0 %v3505
          %3549 = vmatpush.msra.mxu0 %v3504
          %3550 = vmatpush.msra.mxu0 %v3503
          %3551 = vmatpush.msra.mxu0 %v3502
          %3552 = vmatpush.msra.mxu0 %v3501
          %3553 = vmatmul.f32.gmra.mxu0 %v3499
          %v3554 = vpop.f32.mrf.mxu0
          %v3555 = vadd.f32 %v3535, %v3554
          %3556 = vdwg.mxu0
          %3557 = vmatpush.msra.mxu0 %v3532
          %3558 = vmatpush.msra.mxu0 %v3531
          %3559 = vmatpush.msra.mxu0 %v3530
          %3560 = vmatpush.msra.mxu0 %v3529
          %3561 = vmatpush.msra.mxu0 %v3528
          %3562 = vmatpush.msra.mxu0 %v3527
          %3563 = vmatpush.msra.mxu0 %v3526
          %3564 = vmatpush.msra.mxu0 %v3525
          %3565 = vmatpush.msra.mxu0 %v3524
          %3566 = vmatpush.msra.mxu0 %v3523
          %3567 = vmatpush.msra.mxu0 %v3522
          %3568 = vmatpush.msra.mxu0 %v3521
          %3569 = vmatpush.msra.mxu0 %v3520
          %3570 = vmatpush.msra.mxu0 %v3519
          %3571 = vmatpush.msra.mxu0 %v3518
          %3572 = vmatpush.msra.mxu0 %v3517
          %3573 = vmatmul.f32.gmra.mxu0 %v3500
          %v3574 = vpop.f32.mrf.mxu0
          %v3575 = vadd.f32 %v3555, %v3574
          %3576 = vdwg.mxu0
          %v3577 = vtanh.pop %v3575
          %v3578 = vld [vmem:[#allocation20] sm:$0xff]
          %v3579 = vld [vmem:[#allocation20 + $0x8] sm:$0xff]
          %v3580 = vld [vmem:[#allocation20 + $0x10] sm:$0xff]
          %v3581 = vld [vmem:[#allocation20 + $0x18] sm:$0xff]
          %v3582 = vld [vmem:[#allocation20 + $0x20] sm:$0xff]
          %v3583 = vld [vmem:[#allocation20 + $0x28] sm:$0xff]
          %v3584 = vld [vmem:[#allocation20 + $0x30] sm:$0xff]
          %v3585 = vld [vmem:[#allocation20 + $0x38] sm:$0xff]
          %v3586 = vld [vmem:[#allocation20 + $0x40] sm:$0xff]
          %v3587 = vld [vmem:[#allocation20 + $0x48] sm:$0xff]
          %v3588 = vld [vmem:[#allocation20 + $0x50] sm:$0xff]
          %v3589 = vld [vmem:[#allocation20 + $0x58] sm:$0xff]
          %v3590 = vld [vmem:[#allocation20 + $0x60] sm:$0xff]
          %v3591 = vld [vmem:[#allocation20 + $0x68] sm:$0xff]
          %v3592 = vld [vmem:[#allocation20 + $0x70] sm:$0xff]
          %v3593 = vld [vmem:[#allocation20 + $0x78] sm:$0xff]
          %v3594 = vld [vmem:[#allocation20 + $0x80] sm:$0xff]
          %v3595 = vld [vmem:[#allocation20 + $0x88] sm:$0xff]
          %v3596 = vld [vmem:[#allocation20 + $0x90] sm:$0xff]
          %v3597 = vld [vmem:[#allocation20 + $0x98] sm:$0xff]
          %v3598 = vld [vmem:[#allocation20 + $0xa0] sm:$0xff]
          %v3599 = vld [vmem:[#allocation20 + $0xa8] sm:$0xff]
          %v3600 = vld [vmem:[#allocation20 + $0xb0] sm:$0xff]
          %v3601 = vld [vmem:[#allocation20 + $0xb8] sm:$0xff]
          %v3602 = vld [vmem:[#allocation20 + $0xc0] sm:$0xff]
          %v3603 = vld [vmem:[#allocation20 + $0xc8] sm:$0xff]
          %v3604 = vld [vmem:[#allocation20 + $0xd0] sm:$0xff]
          %v3605 = vld [vmem:[#allocation20 + $0xd8] sm:$0xff]
          %v3606 = vld [vmem:[#allocation20 + $0xe0] sm:$0xff]
          %v3607 = vld [vmem:[#allocation20 + $0xe8] sm:$0xff]
          %v3608 = vld [vmem:[#allocation20 + $0xf0] sm:$0xff]
          %v3609 = vld [vmem:[#allocation20 + $0xf8] sm:$0xff]
          %v3610 = vld [vmem:[#allocation21] sm:$0x3]
          %v3612 = vperm.slane %v3610, 0
          %v3613 = vperm.slane %v3610, 1
          %3616 = vmatpush.msra.mxu0 %v3608
          %3617 = vmatpush.msra.mxu0 %v3606
          %3618 = vmatpush.msra.mxu0 %v3604
          %3619 = vmatpush.msra.mxu0 %v3602
          %3620 = vmatpush.msra.mxu0 %v3600
          %3621 = vmatpush.msra.mxu0 %v3598
          %3622 = vmatpush.msra.mxu0 %v3596
          %3623 = vmatpush.msra.mxu0 %v3594
          %3624 = vmatpush.msra.mxu0 %v3592
          %3625 = vmatpush.msra.mxu0 %v3590
          %3626 = vmatpush.msra.mxu0 %v3588
          %3627 = vmatpush.msra.mxu0 %v3586
          %3628 = vmatpush.msra.mxu0 %v3584
          %3629 = vmatpush.msra.mxu0 %v3582
          %3630 = vmatpush.msra.mxu0 %v3580
          %3631 = vmatpush.msra.mxu0 %v3578
          %3632 = vmatmul.f32.gmra.mxu0 %v3577
          %v3633 = vpop.f32.mrf.mxu0
          %v3634 = vadd.f32 %v3612, %v3633
          %3635 = vdwg.mxu0
          %3636 = vmatpush.msra.mxu0 %v3609
          %3637 = vmatpush.msra.mxu0 %v3607
          %3638 = vmatpush.msra.mxu0 %v3605
          %3639 = vmatpush.msra.mxu0 %v3603
          %3640 = vmatpush.msra.mxu0 %v3601
          %3641 = vmatpush.msra.mxu0 %v3599
          %3642 = vmatpush.msra.mxu0 %v3597
          %3643 = vmatpush.msra.mxu0 %v3595
          %3644 = vmatpush.msra.mxu0 %v3593
          %3645 = vmatpush.msra.mxu0 %v3591
          %3646 = vmatpush.msra.mxu0 %v3589
          %3647 = vmatpush.msra.mxu0 %v3587
          %3648 = vmatpush.msra.mxu0 %v3585
          %3649 = vmatpush.msra.mxu0 %v3583
          %3650 = vmatpush.msra.mxu0 %v3581
          %3651 = vmatpush.msra.mxu0 %v3579
          %3652 = vmatmul.f32.gmra.mxu0 %v3577
          %v3653 = vpop.f32.mrf.mxu0
          %v3654 = vadd.f32 %v3613, %v3653
          %3655 = vdwg.mxu0
          %v3656 = vxor.u32 %v3634, 2147483648
          %v3657 = vxor.u32 %v3654, 2147483648
          %v3658 = vmul.f32 %v3656, 1.442695
          %v3659 = vpow.pop %v3658
          %v3660 = vmul.f32 %v3657, 1.442695
          %v3661 = vpow.pop %v3660
          %v3662 = vadd.f32 %v3659, 1.0
          %v3663 = vadd.f32 %v3661, 1.0
          %v3664 = vrcp.pop %v3662
          %v3665 = vmul.f32 %v3662, %v3664
          %v3666 = vsub.f32 1.0, %v3665
          %v3667 = vmul.f32 %v3664, %v3666
          %v3668 = vadd.f32 %v3664, %v3667
          %vm3669 = vweird.f32 %v3662
          %vm3670 = vweird.f32 %v3664
          %vm3671 = vmor %vm3669, %vm3670
          %v3672 = vsel %vm3671, %v3664, %v3668
          %v3673 = vand.u32 2147483647, %v3662
          %vm3674 = vcmp.eq.f32.partialorder %v3673, 8.507059e+37
          %v3675 = vand.u32 %v3662, 2147483648
          %v3676 = vor.u32 1.1754944e-38, %v3675
          %v3677 = vsel %vm3674, %v3676, %v3672
          %v3678 = vmul.f32 1.0, %v3677
          %v3679 = vrcp.pop %v3663
          %v3680 = vmul.f32 %v3663, %v3679
          %v3681 = vsub.f32 1.0, %v3680
          %v3682 = vmul.f32 %v3679, %v3681
          %v3683 = vadd.f32 %v3679, %v3682
          %vm3684 = vweird.f32 %v3663
          %vm3685 = vweird.f32 %v3679
          %vm3686 = vmor %vm3684, %vm3685
          %v3687 = vsel %vm3686, %v3679, %v3683
          %v3688 = vand.u32 2147483647, %v3663
          %vm3689 = vcmp.eq.f32.partialorder %v3688, 8.507059e+37
          %v3690 = vand.u32 %v3663, 2147483648
          %v3691 = vor.u32 1.1754944e-38, %v3690
          %v3692 = vsel %vm3689, %v3691, %v3687
          %v3693 = vmul.f32 1.0, %v3692
          %v3694 = vmul.f32 %v3499, %v3678
          %v3695 = vmul.f32 %v3500, %v3693
          %3696 = vst [vmem:[%s17] sm:$0xff] %v3694
          %3697 = vst [vmem:[%s17 + $0x8] sm:$0xff] %v3695
          %v3698 = vld [vmem:[#allocation23] sm:$0xff]
          %v3699 = vld [vmem:[#allocation23 + $0x8] sm:$0xff]
          %v3700 = vld [vmem:[#allocation23 + $0x10] sm:$0xff]
          %v3701 = vld [vmem:[#allocation23 + $0x18] sm:$0xff]
          %v3702 = vld [vmem:[#allocation23 + $0x20] sm:$0xff]
          %v3703 = vld [vmem:[#allocation23 + $0x28] sm:$0xff]
          %v3704 = vld [vmem:[#allocation23 + $0x30] sm:$0xff]
          %v3705 = vld [vmem:[#allocation23 + $0x38] sm:$0xff]
          %v3706 = vld [vmem:[#allocation23 + $0x40] sm:$0xff]
          %v3707 = vld [vmem:[#allocation23 + $0x48] sm:$0xff]
          %v3708 = vld [vmem:[#allocation23 + $0x50] sm:$0xff]
          %v3709 = vld [vmem:[#allocation23 + $0x58] sm:$0xff]
          %v3710 = vld [vmem:[#allocation23 + $0x60] sm:$0xff]
          %v3711 = vld [vmem:[#allocation23 + $0x68] sm:$0xff]
          %v3712 = vld [vmem:[#allocation23 + $0x70] sm:$0xff]
          %v3713 = vld [vmem:[#allocation23 + $0x78] sm:$0xff]
          %v3714 = vld [vmem:[#allocation23 + $0x80] sm:$0xff]
          %v3715 = vld [vmem:[#allocation23 + $0x88] sm:$0xff]
          %v3716 = vld [vmem:[#allocation23 + $0x90] sm:$0xff]
          %v3717 = vld [vmem:[#allocation23 + $0x98] sm:$0xff]
          %v3718 = vld [vmem:[#allocation23 + $0xa0] sm:$0xff]
          %v3719 = vld [vmem:[#allocation23 + $0xa8] sm:$0xff]
          %v3720 = vld [vmem:[#allocation23 + $0xb0] sm:$0xff]
          %v3721 = vld [vmem:[#allocation23 + $0xb8] sm:$0xff]
          %v3722 = vld [vmem:[#allocation23 + $0xc0] sm:$0xff]
          %v3723 = vld [vmem:[#allocation23 + $0xc8] sm:$0xff]
          %v3724 = vld [vmem:[#allocation23 + $0xd0] sm:$0xff]
          %v3725 = vld [vmem:[#allocation23 + $0xd8] sm:$0xff]
          %v3726 = vld [vmem:[#allocation23 + $0xe0] sm:$0xff]
          %v3727 = vld [vmem:[#allocation23 + $0xe8] sm:$0xff]
          %v3728 = vld [vmem:[#allocation23 + $0xf0] sm:$0xff]
          %v3729 = vld [vmem:[#allocation23 + $0xf8] sm:$0xff]
          %v3730 = vld [vmem:[#allocation23 + $0x100] sm:$0xff]
          %v3731 = vld [vmem:[#allocation23 + $0x108] sm:$0xff]
          %v3732 = vld [vmem:[#allocation23 + $0x110] sm:$0xff]
          %v3733 = vld [vmem:[#allocation23 + $0x118] sm:$0xff]
          %v3734 = vld [vmem:[#allocation23 + $0x120] sm:$0xff]
          %v3735 = vld [vmem:[#allocation23 + $0x128] sm:$0xff]
          %v3736 = vld [vmem:[#allocation23 + $0x130] sm:$0xff]
          %v3737 = vld [vmem:[#allocation23 + $0x138] sm:$0xff]
          %v3738 = vld [vmem:[#allocation23 + $0x140] sm:$0xff]
          %v3739 = vld [vmem:[#allocation23 + $0x148] sm:$0xff]
          %v3740 = vld [vmem:[#allocation23 + $0x150] sm:$0xff]
          %v3741 = vld [vmem:[#allocation23 + $0x158] sm:$0xff]
          %v3742 = vld [vmem:[#allocation23 + $0x160] sm:$0xff]
          %v3743 = vld [vmem:[#allocation23 + $0x168] sm:$0xff]
          %v3744 = vld [vmem:[#allocation23 + $0x170] sm:$0xff]
          %v3745 = vld [vmem:[#allocation23 + $0x178] sm:$0xff]
          %v3746 = vld [vmem:[#allocation23 + $0x180] sm:$0xff]
          %v3747 = vld [vmem:[#allocation23 + $0x188] sm:$0xff]
          %v3748 = vld [vmem:[#allocation23 + $0x190] sm:$0xff]
          %v3749 = vld [vmem:[#allocation23 + $0x198] sm:$0xff]
          %v3750 = vld [vmem:[#allocation23 + $0x1a0] sm:$0xff]
          %v3751 = vld [vmem:[#allocation23 + $0x1a8] sm:$0xff]
          %v3752 = vld [vmem:[#allocation23 + $0x1b0] sm:$0xff]
          %v3753 = vld [vmem:[#allocation23 + $0x1b8] sm:$0xff]
          %v3754 = vld [vmem:[#allocation23 + $0x1c0] sm:$0xff]
          %v3755 = vld [vmem:[#allocation23 + $0x1c8] sm:$0xff]
          %v3756 = vld [vmem:[#allocation23 + $0x1d0] sm:$0xff]
          %v3757 = vld [vmem:[#allocation23 + $0x1d8] sm:$0xff]
          %v3758 = vld [vmem:[#allocation23 + $0x1e0] sm:$0xff]
          %v3759 = vld [vmem:[#allocation23 + $0x1e8] sm:$0xff]
          %v3760 = vld [vmem:[#allocation23 + $0x1f0] sm:$0xff]
          %v3761 = vld [vmem:[#allocation23 + $0x1f8] sm:$0xff]
          %v3762 = vld [vmem:[#allocation24] sm:$0x3]
          %v3764 = vperm.slane %v3762, 0
          %v3765 = vperm.slane %v3762, 1
          %3768 = vmatpush.msra.mxu0 %v3728
          %3769 = vmatpush.msra.mxu0 %v3726
          %3770 = vmatpush.msra.mxu0 %v3724
          %3771 = vmatpush.msra.mxu0 %v3722
          %3772 = vmatpush.msra.mxu0 %v3720
          %3773 = vmatpush.msra.mxu0 %v3718
          %3774 = vmatpush.msra.mxu0 %v3716
          %3775 = vmatpush.msra.mxu0 %v3714
          %3776 = vmatpush.msra.mxu0 %v3712
          %3777 = vmatpush.msra.mxu0 %v3710
          %3778 = vmatpush.msra.mxu0 %v3708
          %3779 = vmatpush.msra.mxu0 %v3706
          %3780 = vmatpush.msra.mxu0 %v3704
          %3781 = vmatpush.msra.mxu0 %v3702
          %3782 = vmatpush.msra.mxu0 %v3700
          %3783 = vmatpush.msra.mxu0 %v3698
          %3784 = vmatmul.f32.gmra.mxu0 %v3694
          %v3785 = vpop.f32.mrf.mxu0
          %v3786 = vadd.f32 %v3764, %v3785
          %3787 = vdwg.mxu0
          %3788 = vmatpush.msra.mxu0 %v3760
          %3789 = vmatpush.msra.mxu0 %v3758
          %3790 = vmatpush.msra.mxu0 %v3756
          %3791 = vmatpush.msra.mxu0 %v3754
          %3792 = vmatpush.msra.mxu0 %v3752
          %3793 = vmatpush.msra.mxu0 %v3750
          %3794 = vmatpush.msra.mxu0 %v3748
          %3795 = vmatpush.msra.mxu0 %v3746
          %3796 = vmatpush.msra.mxu0 %v3744
          %3797 = vmatpush.msra.mxu0 %v3742
          %3798 = vmatpush.msra.mxu0 %v3740
          %3799 = vmatpush.msra.mxu0 %v3738
          %3800 = vmatpush.msra.mxu0 %v3736
          %3801 = vmatpush.msra.mxu0 %v3734
          %3802 = vmatpush.msra.mxu0 %v3732
          %3803 = vmatpush.msra.mxu0 %v3730
          %3804 = vmatmul.f32.gmra.mxu0 %v3695
          %v3805 = vpop.f32.mrf.mxu0
          %v3806 = vadd.f32 %v3786, %v3805
          %3807 = vdwg.mxu0
          %3808 = vmatpush.msra.mxu0 %v3729
          %3809 = vmatpush.msra.mxu0 %v3727
          %3810 = vmatpush.msra.mxu0 %v3725
          %3811 = vmatpush.msra.mxu0 %v3723
          %3812 = vmatpush.msra.mxu0 %v3721
          %3813 = vmatpush.msra.mxu0 %v3719
          %3814 = vmatpush.msra.mxu0 %v3717
          %3815 = vmatpush.msra.mxu0 %v3715
          %3816 = vmatpush.msra.mxu0 %v3713
          %3817 = vmatpush.msra.mxu0 %v3711
          %3818 = vmatpush.msra.mxu0 %v3709
          %3819 = vmatpush.msra.mxu0 %v3707
          %3820 = vmatpush.msra.mxu0 %v3705
          %3821 = vmatpush.msra.mxu0 %v3703
          %3822 = vmatpush.msra.mxu0 %v3701
          %3823 = vmatpush.msra.mxu0 %v3699
          %3824 = vmatmul.f32.gmra.mxu0 %v3694
          %v3825 = vpop.f32.mrf.mxu0
          %v3826 = vadd.f32 %v3765, %v3825
          %3827 = vdwg.mxu0
          %3828 = vmatpush.msra.mxu0 %v3761
          %3829 = vmatpush.msra.mxu0 %v3759
          %3830 = vmatpush.msra.mxu0 %v3757
          %3831 = vmatpush.msra.mxu0 %v3755
          %3832 = vmatpush.msra.mxu0 %v3753
          %3833 = vmatpush.msra.mxu0 %v3751
          %3834 = vmatpush.msra.mxu0 %v3749
          %3835 = vmatpush.msra.mxu0 %v3747
          %3836 = vmatpush.msra.mxu0 %v3745
          %3837 = vmatpush.msra.mxu0 %v3743
          %3838 = vmatpush.msra.mxu0 %v3741
          %3839 = vmatpush.msra.mxu0 %v3739
          %3840 = vmatpush.msra.mxu0 %v3737
          %3841 = vmatpush.msra.mxu0 %v3735
          %3842 = vmatpush.msra.mxu0 %v3733
          %3843 = vmatpush.msra.mxu0 %v3731
          %3844 = vmatmul.f32.gmra.mxu0 %v3695
          %v3845 = vpop.f32.mrf.mxu0
          %v3846 = vadd.f32 %v3826, %v3845
          %3847 = vdwg.mxu0
          %v3848 = vmax.f32 %v3806, 0.0
          %v3849 = vmax.f32 %v3846, 0.0
          %v3850 = vld [vmem:[#allocation26] sm:$0xff]
          %v3851 = vld [vmem:[#allocation26 + $0x8] sm:$0xff]
          %v3852 = vld [vmem:[#allocation26 + $0x10] sm:$0xff]
          %v3853 = vld [vmem:[#allocation26 + $0x18] sm:$0xff]
          %v3854 = vld [vmem:[#allocation26 + $0x20] sm:$0xff]
          %v3855 = vld [vmem:[#allocation26 + $0x28] sm:$0xff]
          %v3856 = vld [vmem:[#allocation26 + $0x30] sm:$0xff]
          %v3857 = vld [vmem:[#allocation26 + $0x38] sm:$0xff]
          %v3858 = vld [vmem:[#allocation26 + $0x40] sm:$0xff]
          %v3859 = vld [vmem:[#allocation26 + $0x48] sm:$0xff]
          %v3860 = vld [vmem:[#allocation26 + $0x50] sm:$0xff]
          %v3861 = vld [vmem:[#allocation26 + $0x58] sm:$0xff]
          %v3862 = vld [vmem:[#allocation26 + $0x60] sm:$0xff]
          %v3863 = vld [vmem:[#allocation26 + $0x68] sm:$0xff]
          %v3864 = vld [vmem:[#allocation26 + $0x70] sm:$0xff]
          %v3865 = vld [vmem:[#allocation26 + $0x78] sm:$0xff]
          %v3866 = vld [vmem:[#allocation26 + $0x80] sm:$0xff]
          %v3867 = vld [vmem:[#allocation26 + $0x88] sm:$0xff]
          %v3868 = vld [vmem:[#allocation26 + $0x90] sm:$0xff]
          %v3869 = vld [vmem:[#allocation26 + $0x98] sm:$0xff]
          %v3870 = vld [vmem:[#allocation26 + $0xa0] sm:$0xff]
          %v3871 = vld [vmem:[#allocation26 + $0xa8] sm:$0xff]
          %v3872 = vld [vmem:[#allocation26 + $0xb0] sm:$0xff]
          %v3873 = vld [vmem:[#allocation26 + $0xb8] sm:$0xff]
          %v3874 = vld [vmem:[#allocation26 + $0xc0] sm:$0xff]
          %v3875 = vld [vmem:[#allocation26 + $0xc8] sm:$0xff]
          %v3876 = vld [vmem:[#allocation26 + $0xd0] sm:$0xff]
          %v3877 = vld [vmem:[#allocation26 + $0xd8] sm:$0xff]
          %v3878 = vld [vmem:[#allocation26 + $0xe0] sm:$0xff]
          %v3879 = vld [vmem:[#allocation26 + $0xe8] sm:$0xff]
          %v3880 = vld [vmem:[#allocation26 + $0xf0] sm:$0xff]
          %v3881 = vld [vmem:[#allocation26 + $0xf8] sm:$0xff]
          %v3882 = vld [vmem:[#allocation27] sm:$0x1]
          %v3884 = vperm.slane %v3882, 0
          %3886 = vmatpush.msra.mxu0 %v3865
          %3887 = vmatpush.msra.mxu0 %v3864
          %3888 = vmatpush.msra.mxu0 %v3863
          %3889 = vmatpush.msra.mxu0 %v3862
          %3890 = vmatpush.msra.mxu0 %v3861
          %3891 = vmatpush.msra.mxu0 %v3860
          %3892 = vmatpush.msra.mxu0 %v3859
          %3893 = vmatpush.msra.mxu0 %v3858
          %3894 = vmatpush.msra.mxu0 %v3857
          %3895 = vmatpush.msra.mxu0 %v3856
          %3896 = vmatpush.msra.mxu0 %v3855
          %3897 = vmatpush.msra.mxu0 %v3854
          %3898 = vmatpush.msra.mxu0 %v3853
          %3899 = vmatpush.msra.mxu0 %v3852
          %3900 = vmatpush.msra.mxu0 %v3851
          %3901 = vmatpush.msra.mxu0 %v3850
          %3902 = vmatmul.f32.gmra.mxu0 %v3848
          %v3903 = vpop.f32.mrf.mxu0
          %v3904 = vadd.f32 %v3884, %v3903
          %3905 = vdwg.mxu0
          %3906 = vmatpush.msra.mxu0 %v3881
          %3907 = vmatpush.msra.mxu0 %v3880
          %3908 = vmatpush.msra.mxu0 %v3879
          %3909 = vmatpush.msra.mxu0 %v3878
          %3910 = vmatpush.msra.mxu0 %v3877
          %3911 = vmatpush.msra.mxu0 %v3876
          %3912 = vmatpush.msra.mxu0 %v3875
          %3913 = vmatpush.msra.mxu0 %v3874
          %3914 = vmatpush.msra.mxu0 %v3873
          %3915 = vmatpush.msra.mxu0 %v3872
          %3916 = vmatpush.msra.mxu0 %v3871
          %3917 = vmatpush.msra.mxu0 %v3870
          %3918 = vmatpush.msra.mxu0 %v3869
          %3919 = vmatpush.msra.mxu0 %v3868
          %3920 = vmatpush.msra.mxu0 %v3867
          %3921 = vmatpush.msra.mxu0 %v3866
          %3922 = vmatmul.f32.gmra.mxu0 %v3849
          %v3923 = vpop.f32.mrf.mxu0
          %v3924 = vadd.f32 %v3904, %v3923
          %3925 = vdwg.mxu0
          %v3926 = vlaneseq
          %v3927 = vand.u32 %v3926, 127
          %vm3928 = vcmp.eq.s32.totalorder %v3927, 4
          %v3929 = vxor.u32 %v3924, 2147483648
          %v3930 = vmul.f32 %v3929, 1.442695
          %v3931 = vpow.pop %v3930
          %v3932 = vadd.f32 %v3931, 1.0
          %v3933 = vrcp.pop %v3932
          %v3934 = vmul.f32 %v3932, %v3933
          %v3935 = vsub.f32 1.0, %v3934
          %v3936 = vmul.f32 %v3933, %v3935
          %v3937 = vadd.f32 %v3933, %v3936
          %vm3938 = vweird.f32 %v3932
          %vm3939 = vweird.f32 %v3933
          %vm3940 = vmor %vm3938, %vm3939
          %v3941 = vsel %vm3940, %v3933, %v3937
          %v3942 = vand.u32 2147483647, %v3932
          %vm3943 = vcmp.eq.f32.partialorder %v3942, 8.507059e+37
          %v3944 = vand.u32 %v3932, 2147483648
          %v3945 = vor.u32 1.1754944e-38, %v3944
          %v3946 = vsel %vm3943, %v3945, %v3941
          %v3947 = vmul.f32 1.0, %v3946
          %v3948 = vsel %vm3928, %v3947, %v3924
          %3949 = vst [vmem:[%s18] sm:$0xff] %v3948
        $region168: #{epoc_forward.1} parent=87 // pred_fallthru
          _
        // Predicated region
        $region169: #{epoc_forward.1} parent=87 // pred_check
          %p3950 = pneg %p428
        $region170: #{epoc_forward.1} parent=87 // pred_check_branch
          %3952 = sbr.rel (%p3950) target = $region172
        $region171: #{epoc_forward.1} parent=87 // pred_region
          _
        $region172: #{epoc_forward.1} parent=87 // pred_fallthru
          _
        // Predicated region
        $region173: #{epoc_forward.1} parent=87 // pred_check
          %p3953 = pneg %p449
        $region174: #{epoc_forward.1} parent=87 // pred_check_branch
          %3955 = sbr.rel (%p3953) target = $region176
        $region175: #{epoc_forward.1} parent=87 // pred_region
          _
        $region176: #{epoc_forward.1} parent=87 // pred_fallthru
          _
        // Predicated region
        $region177: #{epoc_forward.1} parent=87 // pred_check
          %p3956 = pneg %p428
        $region178: #{epoc_forward.1} parent=87 // pred_check_branch
          %3958 = sbr.rel (%p3956) target = $region180
        $region179: #{epoc_forward.1} parent=87 // pred_region
          _
        $region180: #{epoc_forward.1} parent=87 // pred_fallthru
          _
        // Predicated region
        $region181: #{epoc_forward.1} parent=87 // pred_check
          %p3959 = pneg %p449
        $region182: #{epoc_forward.1} parent=87 // pred_check_branch
          %3961 = sbr.rel (%p3959) target = $region184
        $region183: #{epoc_forward.1} parent=87 // pred_region
          _
        $region184: #{epoc_forward.1} parent=87 // pred_fallthru
          _
      $region88: #{epoc_forward.1} parent=5 // pred_fallthru
        _
      %p3962 = scmp.le.s32.totalorder 2, %s34
      // Predicated region
      $region185: #{epoc_forward.1} parent=5 // pred_check
        %p3963 = pneg %p3962
      $region186: #{epoc_forward.1} parent=5 // pred_check_branch
        %3965 = sbr.rel (%p3963) target = $region188
      $region187: #{epoc_forward.1} parent=5 // pred_region
        %s3966 = ssub.s32 %s34, 2
      $region188: #{epoc_forward.1} parent=5 // pred_fallthru
        _
    $region6: #{epoc_forward.1} parent=1 // loop_footer
      %s38 = sadd.s32 1, %s34
    $region7: #{epoc_forward.1} parent=1 // loop_footer_branch
      %33 = sbr.rel target = $region3
    $region8: #{epoc_forward.1} parent=1 // loop_exit
      _
    %3967 = vsyncpa [#allocation5], 1
    %s3968 = scalar_lea.sflag [#allocation5], 1
    %3969 = vsyncpa %s3968, 1
    %3970 = vsyncpa [#allocation7], 1
    %3971 = vsyncpa [#allocation10], 1
    %3972 = vsyncpa [#allocation13], 1
    %3973 = vsyncpa [#allocation16], 1
    %3974 = vsyncpa [#allocation19], 1
    %3975 = vsyncpa [#allocation22], 1
    %3976 = vsyncpa [#allocation25], 1
    %3977 = vsyncpa [#allocation28], 1

</llo_original>
